<compile_context>
chip_gen: v5e
topology: v5e:2x2
jax: 0.10.0
libtpu: 0.0.40
codegen_flags: <defaults>
</compile_context>

<pallas_src>
import jax
import jax.numpy as jnp
from jax import lax
from jax.experimental import pallas as pl
from jax.experimental.pallas import tpu as pltpu


def _lstm_single_kernel(tok_ref, len_ref, emb_ref, wih_ref, whh_ref, bg_ref,
                        wfc_ref, bfc_ref, out_ref):
    """Fused embedding gather + LSTM recurrence + final Linear (feature-major).

    tok_ref : (T, 1, BT) int32   location ids, time-major
    len_ref : (1, BT)    int32   true sequence lengths
    emb_ref : (H, L)             embedding table, transposed
    wih_ref : (4H, H)            W_ih (PyTorch layout)
    whh_ref : (4H, H)            W_hh
    bg_ref  : (4H, 1)    f32     b_ih + b_hh
    wfc_ref : (L, H)             W_fc
    bfc_ref : (L, 1)     f32     b_fc
    out_ref : (L, BT)    f32     logits, feature-major (transposed outside)
    """
    T = tok_ref.shape[0]
    H, L = emb_ref.shape
    BT = out_ref.shape[1]

    # Loop-invariant loads, hoisted once and reused every recurrence step.
    emb = emb_ref[...]
    wih = wih_ref[...]
    whh = whh_ref[...]
    bg = bg_ref[...]
    lens = len_ref[...]
    row_ids = lax.broadcasted_iota(jnp.int32, (L, BT), 0)

    def step(t, carry):
        h, c = carry                                            # (H, BT) f32
        # ---- fused embedding gather: one-hot(token) matmul against emb^T ----
        tok_t = tok_ref[t]                                      # (1, BT) int32
        onehot = (row_ids == tok_t).astype(emb.dtype)           # (L, BT)
        x_t = jnp.dot(emb, onehot,
                      preferred_element_type=jnp.float32)       # (H, BT)
        # ---- gates: input + recurrent projection, f32 accumulate ----
        gates = (jnp.dot(wih, x_t.astype(wih.dtype),
                         preferred_element_type=jnp.float32)
                 + jnp.dot(whh, h.astype(whh.dtype),
                           preferred_element_type=jnp.float32)
                 + bg)                                          # (4H, BT)
        # PyTorch LSTM gate order: i, f, g, o — sublane-aligned full-lane slices.
        i = jax.nn.sigmoid(gates[0 * H:1 * H, :])
        f = jax.nn.sigmoid(gates[1 * H:2 * H, :])
        g = jnp.tanh(gates[2 * H:3 * H, :])
        o = jax.nn.sigmoid(gates[3 * H:4 * H, :])
        c_new = f * c + i * g
        h_new = o * jnp.tanh(c_new)
        # pack_sequence semantics: freeze (h, c) once t >= length(b).
        m = t < lens                                            # (1, BT) bool
        h = jnp.where(m, h_new, h)
        c = jnp.where(m, c_new, c)
        return h, c

    h0 = jnp.zeros((H, BT), jnp.float32)
    c0 = jnp.zeros((H, BT), jnp.float32)
    unroll = T if T <= 16 else 8        # full unroll only for short sequences
    h, _ = lax.fori_loop(0, T, step, (h0, c0), unroll=unroll)

    # Final Linear on the last-valid hidden state; lane-dense (L, BT) store.
    out_ref[...] = (jnp.dot(wfc_ref[...], h.astype(wfc_ref.dtype),
                            preferred_element_type=jnp.float32)
                    + bfc_ref[...]).astype(out_ref.dtype)


def lstm_single_forward(tokens, lengths, emb_table, w_ih, w_hh, b_ih, b_hh,
                        w_fc, b_fc, *, batch_tile=128,
                        matmul_dtype=jnp.float32):
    """Forward pass of LSTMSingle on pre-packed token sequences.

    tokens: (B, T) int32 location ids (padded).  lengths: (B,) int32.
    emb_table: (location_size, H).  w_ih/w_hh: (4H, H).  b_ih/b_hh: (4H,).
    w_fc: (location_size, H).  b_fc: (location_size,).
    Returns logits (B, location_size) == self.fc(h_s).squeeze(0).
    `matmul_dtype=jnp.bfloat16` is recommended on v6e/v7x at scale (state and
    accumulation stay f32 either way).
    """
    B, T = tokens.shape
    Lsz, H = emb_table.shape
    G = 4 * H

    BT = batch_tile
    n_tiles = pl.cdiv(B, BT)
    Bp = n_tiles * BT

    tok = jnp.asarray(tokens, jnp.int32)
    lens = jnp.asarray(lengths, jnp.int32)
    if Bp != B:
        # Padded rows get length 0: their hidden stays 0; sliced off at the end.
        tok = jnp.pad(tok, ((0, Bp - B), (0, 0)))
        lens = jnp.pad(lens, (0, Bp - B))

    tok_tm = tok.T.reshape(T, 1, Bp)                      # time-major ids
    lens2d = lens.reshape(1, Bp)

    # Feature-major weights (PyTorch computes y = x @ W.T + b).
    emb_fm = jnp.asarray(emb_table, matmul_dtype).T       # (H, L)
    wih = jnp.asarray(w_ih, matmul_dtype)                 # (4H, H)
    whh = jnp.asarray(w_hh, matmul_dtype)                 # (4H, H)
    bg = (jnp.asarray(b_ih, jnp.float32)
          + jnp.asarray(b_hh, jnp.float32)).reshape(G, 1)  # (4H, 1)
    wfc = jnp.asarray(w_fc, matmul_dtype)                 # (L, H)
    bfc = jnp.asarray(b_fc, jnp.float32).reshape(Lsz, 1)  # (L, 1)

    grid_spec = pltpu.PrefetchScalarGridSpec(
        num_scalar_prefetch=0,
        grid=(n_tiles,),
        in_specs=[
            pl.BlockSpec((T, 1, BT), lambda b: (0, 0, b)),   # token ids
            pl.BlockSpec((1, BT), lambda b: (0, b)),         # lengths
            pl.BlockSpec((H, Lsz), lambda b: (0, 0)),        # emb^T   (const)
            pl.BlockSpec((G, H), lambda b: (0, 0)),          # W_ih    (const)
            pl.BlockSpec((G, H), lambda b: (0, 0)),          # W_hh    (const)
            pl.BlockSpec((G, 1), lambda b: (0, 0)),          # b_ih + b_hh
            pl.BlockSpec((Lsz, H), lambda b: (0, 0)),        # W_fc    (const)
            pl.BlockSpec((Lsz, 1), lambda b: (0, 0)),        # b_fc
        ],
        out_specs=pl.BlockSpec((Lsz, BT), lambda b: (0, b)), # lane-dense logits^T
    )

    flops = n_tiles * (T * (2 * H * Lsz * BT + 4 * G * H * BT)
                       + 2 * Lsz * H * BT)
    transcendentals = n_tiles * T * 5 * H * BT
    bytes_accessed = (4 * (T * Bp + Bp)                       # ids + lengths
                      + 4 * n_tiles * (H * Lsz + 2 * G * H + G + Lsz * H + Lsz)
                      + 4 * Bp * Lsz)                         # logits out

    out_fm = pl.pallas_call(
        _lstm_single_kernel,
        out_shape=jax.ShapeDtypeStruct((Lsz, Bp), jnp.float32),
        grid_spec=grid_spec,
        compiler_params=pltpu.CompilerParams(
            dimension_semantics=("parallel",)),
        cost_estimate=pl.CostEstimate(
            flops=flops,
            transcendentals=transcendentals,
            bytes_accessed=bytes_accessed),
    )(tok_tm, lens2d, emb_fm, wih, whh, bg, wfc, bfc)

    return out_fm[:, :B].T                                    # (B, location_size)


def _reference(tokens, lengths, emb_table, w_ih, w_hh, b_ih, b_hh, w_fc, b_fc):
    """Pure-JAX reference mirroring Embedding -> packed LSTM -> fc(h_n)."""
    B, T = tokens.shape
    H = emb_table.shape[1]
    x = emb_table[tokens].astype(jnp.float32)                 # (B, T, H)
    h = jnp.zeros((B, H), jnp.float32)
    c = jnp.zeros((B, H), jnp.float32)
    for t in range(T):
        gates = x[:, t] @ w_ih.T + b_ih + h @ w_hh.T + b_hh   # (B, 4H)
        i, f, g, o = jnp.split(gates, 4, axis=-1)
        i = jax.nn.sigmoid(i); f = jax.nn.sigmoid(f)
        g = jnp.tanh(g);       o = jax.nn.sigmoid(o)
        c_new = f * c + i * g
        h_new = o * jnp.tanh(c_new)
        m = (t < lengths)[:, None]
        h = jnp.where(m, h_new, h)
        c = jnp.where(m, c_new, c)
    return h @ w_fc.T + b_fc                                   # (B, location_size)


if __name__ == "__main__":
    LOCATION_SIZE = 128   # location vocabulary (lane-dense: multiple of 128)
    HIDDEN = 32           # hidden_size == embedding dim fed to the LSTM
    T = 8                 # max packed-trajectory length
    B = 8                 # number of trajectory groups (len(ValidTrjs))

    key = jax.random.PRNGKey(0)
    kt, kl, ke, k1, k2, k3, k4, k5, k6 = jax.random.split(key, 9)

    # Pre-packed location-id sequences + true lengths (what pack_sequence sees).
    tokens = jax.random.randint(kt, (B, T), 0, LOCATION_SIZE, dtype=jnp.int32)
    lengths = jax.random.randint(kl, (B,), 1, T + 1, dtype=jnp.int32)

    scale = 0.1
    emb = jax.random.normal(ke, (LOCATION_SIZE, HIDDEN), jnp.float32) * scale
    w_ih = jax.random.normal(k1, (4 * HIDDEN, HIDDEN), jnp.float32) * scale
    w_hh = jax.random.normal(k2, (4 * HIDDEN, HIDDEN), jnp.float32) * scale
    b_ih = jax.random.normal(k3, (4 * HIDDEN,), jnp.float32) * scale
    b_hh = jax.random.normal(k4, (4 * HIDDEN,), jnp.float32) * scale
    w_fc = jax.random.normal(k5, (LOCATION_SIZE, HIDDEN), jnp.float32) * scale
    b_fc = jax.random.normal(k6, (LOCATION_SIZE,), jnp.float32) * scale

    out = lstm_single_forward(tokens, lengths, emb, w_ih, w_hh, b_ih, b_hh,
                              w_fc, b_fc)
    jax.block_until_ready(out)

    ref = _reference(tokens, lengths, emb, w_ih, w_hh, b_ih, b_hh, w_fc, b_fc)
    assert out.shape == (B, LOCATION_SIZE)
    err = float(jnp.max(jnp.abs(out - ref)))
    assert jnp.allclose(out, ref, atol=1e-4, rtol=1e-4), err

    print("KERNEL_OK")
</pallas_src>

<mosaic_0001>
module attributes {stable_mosaic.version = 11 : i64} {
  func.func @_lstm_single_kernel(%arg0: i32, %arg1: memref<8x1x128xi32, #tpu.memory_space<vmem>>, %arg2: memref<1x128xi32, #tpu.memory_space<vmem>>, %arg3: memref<32x128xf32, #tpu.memory_space<vmem>>, %arg4: memref<128x32xf32, #tpu.memory_space<vmem>>, %arg5: memref<128x32xf32, #tpu.memory_space<vmem>>, %arg6: memref<128x1xf32, #tpu.memory_space<vmem>>, %arg7: memref<128x32xf32, #tpu.memory_space<vmem>>, %arg8: memref<128x1xf32, #tpu.memory_space<vmem>>, %arg9: memref<128x128xf32, #tpu.memory_space<vmem>>) attributes {dimension_semantics = [#tpu.dimension_semantics<parallel>], iteration_bounds = array<i64: 1>, scalar_prefetch = 0 : i64, scratch_operands = 0 : i64, tpu.core_type = #tpu.core_type<tc>, window_params = [{transform_indices = @transform_0, window_bounds = array<i64: 8, 1, 128>}, {transform_indices = @transform_1, window_bounds = array<i64: 1, 128>}, {pipeline_mode = #tpu.pipeline_mode<synchronous>, transform_indices = @transform_2, window_bounds = array<i64: 32, 128>}, {pipeline_mode = #tpu.pipeline_mode<synchronous>, transform_indices = @transform_3, window_bounds = array<i64: 128, 32>}, {pipeline_mode = #tpu.pipeline_mode<synchronous>, transform_indices = @transform_4, window_bounds = array<i64: 128, 32>}, {pipeline_mode = #tpu.pipeline_mode<synchronous>, transform_indices = @transform_5, window_bounds = array<i64: 128, 1>}, {pipeline_mode = #tpu.pipeline_mode<synchronous>, transform_indices = @transform_6, window_bounds = array<i64: 128, 32>}, {pipeline_mode = #tpu.pipeline_mode<synchronous>, transform_indices = @transform_7, window_bounds = array<i64: 128, 1>}, {transform_indices = @transform_8, window_bounds = array<i64: 128, 128>}]} {
    %c0 = arith.constant 0 : index
    %c0_0 = arith.constant 0 : index
    %0 = vector.load %arg3[%c0, %c0_0] : memref<32x128xf32, #tpu.memory_space<vmem>>, vector<32x128xf32>
    %c0_1 = arith.constant 0 : index
    %c0_2 = arith.constant 0 : index
    %1 = vector.load %arg4[%c0_1, %c0_2] : memref<128x32xf32, #tpu.memory_space<vmem>>, vector<128x32xf32>
    %c0_3 = arith.constant 0 : index
    %c0_4 = arith.constant 0 : index
    %2 = vector.load %arg5[%c0_3, %c0_4] : memref<128x32xf32, #tpu.memory_space<vmem>>, vector<128x32xf32>
    %c0_5 = arith.constant 0 : index
    %c0_6 = arith.constant 0 : index
    %3 = vector.load %arg6[%c0_5, %c0_6] : memref<128x1xf32, #tpu.memory_space<vmem>>, vector<128x1xf32>
    %c0_7 = arith.constant 0 : index
    %c0_8 = arith.constant 0 : index
    %4 = vector.load %arg2[%c0_7, %c0_8] : memref<1x128xi32, #tpu.memory_space<vmem>>, vector<1x128xi32>
    %5 = tpu.iota {dimensions = array<i32: 0>} : vector<128x128xi32>
    %cst = arith.constant 0.000000e+00 : f32
    %6 = vector.broadcast %cst : f32 to vector<32x128xf32>
    %cst_9 = arith.constant 0.000000e+00 : f32
    %7 = vector.broadcast %cst_9 : f32 to vector<32x128xf32>
    %c0_i32 = arith.constant 0 : i32
    %8 = arith.index_cast %c0_i32 : i32 to index
    %c0_10 = arith.constant 0 : index
    %c0_11 = arith.constant 0 : index
    %9 = vector.load %arg1[%8, %c0_10, %c0_11] : memref<8x1x128xi32, #tpu.memory_space<vmem>>, vector<1x1x128xi32>
    %10 = vector.shape_cast %9 : vector<1x1x128xi32> to vector<1x128xi32>
    %11 = vector.broadcast %10 : vector<1x128xi32> to vector<128x128xi32>
    %12 = arith.cmpi eq, %5, %11 : vector<128x128xi32>
    %13 = arith.extui %12 : vector<128x128xi1> to vector<128x128xi32>
    %14 = arith.sitofp %13 : vector<128x128xi32> to vector<128x128xf32>
    %cst_12 = arith.constant dense<0.000000e+00> : vector<32x128xf32>
    %15 = tpu.matmul %0, %14, %cst_12 {dimension_numbers = #tpu.dot_dimension_numbers<[1], [0], [0], [1], [0, 0, 1, 1], [], []>} : vector<32x128xf32>, vector<128x128xf32>, vector<32x128xf32> -> vector<32x128xf32>
    %cst_13 = arith.constant dense<0.000000e+00> : vector<128x128xf32>
    %16 = tpu.matmul %1, %15, %cst_13 {dimension_numbers = #tpu.dot_dimension_numbers<[1], [0], [0], [1], [0, 0, 1, 1], [], []>} : vector<128x32xf32>, vector<32x128xf32>, vector<128x128xf32> -> vector<128x128xf32>
    %cst_14 = arith.constant dense<0.000000e+00> : vector<128x128xf32>
    %17 = tpu.matmul %2, %6, %cst_14 {dimension_numbers = #tpu.dot_dimension_numbers<[1], [0], [0], [1], [0, 0, 1, 1], [], []>} : vector<128x32xf32>, vector<32x128xf32>, vector<128x128xf32> -> vector<128x128xf32>
    %18 = arith.addf %16, %17 : vector<128x128xf32>
    %19 = vector.broadcast %3 : vector<128x1xf32> to vector<128x128xf32>
    %20 = arith.addf %18, %19 : vector<128x128xf32>
    %21 = vector.extract_strided_slice %20 {offsets = [0, 0], sizes = [32, 128], strides = [1, 1]} : vector<128x128xf32> to vector<32x128xf32>
    %22 = arith.negf %21 : vector<32x128xf32>
    %23 = math.exp %22 : vector<32x128xf32>
    %cst_15 = arith.constant 1.000000e+00 : f32
    %24 = vector.broadcast %cst_15 : f32 to vector<32x128xf32>
    %25 = arith.addf %24, %23 : vector<32x128xf32>
    %26 = arith.divf %24, %25 : vector<32x128xf32>
    %27 = vector.extract_strided_slice %20 {offsets = [32, 0], sizes = [32, 128], strides = [1, 1]} : vector<128x128xf32> to vector<32x128xf32>
    %28 = arith.negf %27 : vector<32x128xf32>
    %29 = math.exp %28 : vector<32x128xf32>
    %cst_16 = arith.constant 1.000000e+00 : f32
    %30 = vector.broadcast %cst_16 : f32 to vector<32x128xf32>
    %31 = arith.addf %30, %29 : vector<32x128xf32>
    %32 = arith.divf %30, %31 : vector<32x128xf32>
    %33 = vector.extract_strided_slice %20 {offsets = [64, 0], sizes = [32, 128], strides = [1, 1]} : vector<128x128xf32> to vector<32x128xf32>
    %34 = math.tanh %33 : vector<32x128xf32>
    %35 = vector.extract_strided_slice %20 {offsets = [96, 0], sizes = [32, 128], strides = [1, 1]} : vector<128x128xf32> to vector<32x128xf32>
    %36 = arith.negf %35 : vector<32x128xf32>
    %37 = math.exp %36 : vector<32x128xf32>
    %cst_17 = arith.constant 1.000000e+00 : f32
    %38 = vector.broadcast %cst_17 : f32 to vector<32x128xf32>
    %39 = arith.addf %38, %37 : vector<32x128xf32>
    %40 = arith.divf %38, %39 : vector<32x128xf32>
    %41 = arith.mulf %32, %7 : vector<32x128xf32>
    %42 = arith.mulf %26, %34 : vector<32x128xf32>
    %43 = arith.addf %41, %42 : vector<32x128xf32>
    %44 = math.tanh %43 : vector<32x128xf32>
    %45 = arith.mulf %40, %44 : vector<32x128xf32>
    %46 = vector.broadcast %c0_i32 : i32 to vector<1x128xi32>
    %47 = arith.cmpi slt, %46, %4 : vector<1x128xi32>
    %48 = vector.shape_cast %47 : vector<1x128xi1> to vector<1x128xi1>
    %49 = vector.broadcast %48 : vector<1x128xi1> to vector<32x128xi1>
    %50 = arith.select %49, %45, %6 : vector<32x128xi1>, vector<32x128xf32>
    %51 = vector.shape_cast %47 : vector<1x128xi1> to vector<1x128xi1>
    %52 = vector.broadcast %51 : vector<1x128xi1> to vector<32x128xi1>
    %53 = arith.select %52, %43, %7 : vector<32x128xi1>, vector<32x128xf32>
    %c1_i32 = arith.constant 1 : i32
    %54 = arith.index_cast %c1_i32 : i32 to index
    %c0_18 = arith.constant 0 : index
    %c0_19 = arith.constant 0 : index
    %55 = vector.load %arg1[%54, %c0_18, %c0_19] : memref<8x1x128xi32, #tpu.memory_space<vmem>>, vector<1x1x128xi32>
    %56 = vector.shape_cast %55 : vector<1x1x128xi32> to vector<1x128xi32>
    %57 = vector.broadcast %56 : vector<1x128xi32> to vector<128x128xi32>
    %58 = arith.cmpi eq, %5, %57 : vector<128x128xi32>
    %59 = arith.extui %58 : vector<128x128xi1> to vector<128x128xi32>
    %60 = arith.sitofp %59 : vector<128x128xi32> to vector<128x128xf32>
    %cst_20 = arith.constant dense<0.000000e+00> : vector<32x128xf32>
    %61 = tpu.matmul %0, %60, %cst_20 {dimension_numbers = #tpu.dot_dimension_numbers<[1], [0], [0], [1], [0, 0, 1, 1], [], []>} : vector<32x128xf32>, vector<128x128xf32>, vector<32x128xf32> -> vector<32x128xf32>
    %cst_21 = arith.constant dense<0.000000e+00> : vector<128x128xf32>
    %62 = tpu.matmul %1, %61, %cst_21 {dimension_numbers = #tpu.dot_dimension_numbers<[1], [0], [0], [1], [0, 0, 1, 1], [], []>} : vector<128x32xf32>, vector<32x128xf32>, vector<128x128xf32> -> vector<128x128xf32>
    %cst_22 = arith.constant dense<0.000000e+00> : vector<128x128xf32>
    %63 = tpu.matmul %2, %50, %cst_22 {dimension_numbers = #tpu.dot_dimension_numbers<[1], [0], [0], [1], [0, 0, 1, 1], [], []>} : vector<128x32xf32>, vector<32x128xf32>, vector<128x128xf32> -> vector<128x128xf32>
    %64 = arith.addf %62, %63 : vector<128x128xf32>
    %65 = vector.broadcast %3 : vector<128x1xf32> to vector<128x128xf32>
    %66 = arith.addf %64, %65 : vector<128x128xf32>
    %67 = vector.extract_strided_slice %66 {offsets = [0, 0], sizes = [32, 128], strides = [1, 1]} : vector<128x128xf32> to vector<32x128xf32>
    %68 = arith.negf %67 : vector<32x128xf32>
    %69 = math.exp %68 : vector<32x128xf32>
    %cst_23 = arith.constant 1.000000e+00 : f32
    %70 = vector.broadcast %cst_23 : f32 to vector<32x128xf32>
    %71 = arith.addf %70, %69 : vector<32x128xf32>
    %72 = arith.divf %70, %71 : vector<32x128xf32>
    %73 = vector.extract_strided_slice %66 {offsets = [32, 0], sizes = [32, 128], strides = [1, 1]} : vector<128x128xf32> to vector<32x128xf32>
    %74 = arith.negf %73 : vector<32x128xf32>
    %75 = math.exp %74 : vector<32x128xf32>
    %cst_24 = arith.constant 1.000000e+00 : f32
    %76 = vector.broadcast %cst_24 : f32 to vector<32x128xf32>
    %77 = arith.addf %76, %75 : vector<32x128xf32>
    %78 = arith.divf %76, %77 : vector<32x128xf32>
    %79 = vector.extract_strided_slice %66 {offsets = [64, 0], sizes = [32, 128], strides = [1, 1]} : vector<128x128xf32> to vector<32x128xf32>
    %80 = math.tanh %79 : vector<32x128xf32>
    %81 = vector.extract_strided_slice %66 {offsets = [96, 0], sizes = [32, 128], strides = [1, 1]} : vector<128x128xf32> to vector<32x128xf32>
    %82 = arith.negf %81 : vector<32x128xf32>
    %83 = math.exp %82 : vector<32x128xf32>
    %cst_25 = arith.constant 1.000000e+00 : f32
    %84 = vector.broadcast %cst_25 : f32 to vector<32x128xf32>
    %85 = arith.addf %84, %83 : vector<32x128xf32>
    %86 = arith.divf %84, %85 : vector<32x128xf32>
    %87 = arith.mulf %78, %53 : vector<32x128xf32>
    %88 = arith.mulf %72, %80 : vector<32x128xf32>
    %89 = arith.addf %87, %88 : vector<32x128xf32>
    %90 = math.tanh %89 : vector<32x128xf32>
    %91 = arith.mulf %86, %90 : vector<32x128xf32>
    %92 = vector.broadcast %c1_i32 : i32 to vector<1x128xi32>
    %93 = arith.cmpi slt, %92, %4 : vector<1x128xi32>
    %94 = vector.shape_cast %93 : vector<1x128xi1> to vector<1x128xi1>
    %95 = vector.broadcast %94 : vector<1x128xi1> to vector<32x128xi1>
    %96 = arith.select %95, %91, %50 : vector<32x128xi1>, vector<32x128xf32>
    %97 = vector.shape_cast %93 : vector<1x128xi1> to vector<1x128xi1>
    %98 = vector.broadcast %97 : vector<1x128xi1> to vector<32x128xi1>
    %99 = arith.select %98, %89, %53 : vector<32x128xi1>, vector<32x128xf32>
    %c2_i32 = arith.constant 2 : i32
    %100 = arith.index_cast %c2_i32 : i32 to index
    %c0_26 = arith.constant 0 : index
    %c0_27 = arith.constant 0 : index
    %101 = vector.load %arg1[%100, %c0_26, %c0_27] : memref<8x1x128xi32, #tpu.memory_space<vmem>>, vector<1x1x128xi32>
    %102 = vector.shape_cast %101 : vector<1x1x128xi32> to vector<1x128xi32>
    %103 = vector.broadcast %102 : vector<1x128xi32> to vector<128x128xi32>
    %104 = arith.cmpi eq, %5, %103 : vector<128x128xi32>
    %105 = arith.extui %104 : vector<128x128xi1> to vector<128x128xi32>
    %106 = arith.sitofp %105 : vector<128x128xi32> to vector<128x128xf32>
    %cst_28 = arith.constant dense<0.000000e+00> : vector<32x128xf32>
    %107 = tpu.matmul %0, %106, %cst_28 {dimension_numbers = #tpu.dot_dimension_numbers<[1], [0], [0], [1], [0, 0, 1, 1], [], []>} : vector<32x128xf32>, vector<128x128xf32>, vector<32x128xf32> -> vector<32x128xf32>
    %cst_29 = arith.constant dense<0.000000e+00> : vector<128x128xf32>
    %108 = tpu.matmul %1, %107, %cst_29 {dimension_numbers = #tpu.dot_dimension_numbers<[1], [0], [0], [1], [0, 0, 1, 1], [], []>} : vector<128x32xf32>, vector<32x128xf32>, vector<128x128xf32> -> vector<128x128xf32>
    %cst_30 = arith.constant dense<0.000000e+00> : vector<128x128xf32>
    %109 = tpu.matmul %2, %96, %cst_30 {dimension_numbers = #tpu.dot_dimension_numbers<[1], [0], [0], [1], [0, 0, 1, 1], [], []>} : vector<128x32xf32>, vector<32x128xf32>, vector<128x128xf32> -> vector<128x128xf32>
    %110 = arith.addf %108, %109 : vector<128x128xf32>
    %111 = vector.broadcast %3 : vector<128x1xf32> to vector<128x128xf32>
    %112 = arith.addf %110, %111 : vector<128x128xf32>
    %113 = vector.extract_strided_slice %112 {offsets = [0, 0], sizes = [32, 128], strides = [1, 1]} : vector<128x128xf32> to vector<32x128xf32>
    %114 = arith.negf %113 : vector<32x128xf32>
    %115 = math.exp %114 : vector<32x128xf32>
    %cst_31 = arith.constant 1.000000e+00 : f32
    %116 = vector.broadcast %cst_31 : f32 to vector<32x128xf32>
    %117 = arith.addf %116, %115 : vector<32x128xf32>
    %118 = arith.divf %116, %117 : vector<32x128xf32>
    %119 = vector.extract_strided_slice %112 {offsets = [32, 0], sizes = [32, 128], strides = [1, 1]} : vector<128x128xf32> to vector<32x128xf32>
    %120 = arith.negf %119 : vector<32x128xf32>
    %121 = math.exp %120 : vector<32x128xf32>
    %cst_32 = arith.constant 1.000000e+00 : f32
    %122 = vector.broadcast %cst_32 : f32 to vector<32x128xf32>
    %123 = arith.addf %122, %121 : vector<32x128xf32>
    %124 = arith.divf %122, %123 : vector<32x128xf32>
    %125 = vector.extract_strided_slice %112 {offsets = [64, 0], sizes = [32, 128], strides = [1, 1]} : vector<128x128xf32> to vector<32x128xf32>
    %126 = math.tanh %125 : vector<32x128xf32>
    %127 = vector.extract_strided_slice %112 {offsets = [96, 0], sizes = [32, 128], strides = [1, 1]} : vector<128x128xf32> to vector<32x128xf32>
    %128 = arith.negf %127 : vector<32x128xf32>
    %129 = math.exp %128 : vector<32x128xf32>
    %cst_33 = arith.constant 1.000000e+00 : f32
    %130 = vector.broadcast %cst_33 : f32 to vector<32x128xf32>
    %131 = arith.addf %130, %129 : vector<32x128xf32>
    %132 = arith.divf %130, %131 : vector<32x128xf32>
    %133 = arith.mulf %124, %99 : vector<32x128xf32>
    %134 = arith.mulf %118, %126 : vector<32x128xf32>
    %135 = arith.addf %133, %134 : vector<32x128xf32>
    %136 = math.tanh %135 : vector<32x128xf32>
    %137 = arith.mulf %132, %136 : vector<32x128xf32>
    %138 = vector.broadcast %c2_i32 : i32 to vector<1x128xi32>
    %139 = arith.cmpi slt, %138, %4 : vector<1x128xi32>
    %140 = vector.shape_cast %139 : vector<1x128xi1> to vector<1x128xi1>
    %141 = vector.broadcast %140 : vector<1x128xi1> to vector<32x128xi1>
    %142 = arith.select %141, %137, %96 : vector<32x128xi1>, vector<32x128xf32>
    %143 = vector.shape_cast %139 : vector<1x128xi1> to vector<1x128xi1>
    %144 = vector.broadcast %143 : vector<1x128xi1> to vector<32x128xi1>
    %145 = arith.select %144, %135, %99 : vector<32x128xi1>, vector<32x128xf32>
    %c3_i32 = arith.constant 3 : i32
    %146 = arith.index_cast %c3_i32 : i32 to index
    %c0_34 = arith.constant 0 : index
    %c0_35 = arith.constant 0 : index
    %147 = vector.load %arg1[%146, %c0_34, %c0_35] : memref<8x1x128xi32, #tpu.memory_space<vmem>>, vector<1x1x128xi32>
    %148 = vector.shape_cast %147 : vector<1x1x128xi32> to vector<1x128xi32>
    %149 = vector.broadcast %148 : vector<1x128xi32> to vector<128x128xi32>
    %150 = arith.cmpi eq, %5, %149 : vector<128x128xi32>
    %151 = arith.extui %150 : vector<128x128xi1> to vector<128x128xi32>
    %152 = arith.sitofp %151 : vector<128x128xi32> to vector<128x128xf32>
    %cst_36 = arith.constant dense<0.000000e+00> : vector<32x128xf32>
    %153 = tpu.matmul %0, %152, %cst_36 {dimension_numbers = #tpu.dot_dimension_numbers<[1], [0], [0], [1], [0, 0, 1, 1], [], []>} : vector<32x128xf32>, vector<128x128xf32>, vector<32x128xf32> -> vector<32x128xf32>
    %cst_37 = arith.constant dense<0.000000e+00> : vector<128x128xf32>
    %154 = tpu.matmul %1, %153, %cst_37 {dimension_numbers = #tpu.dot_dimension_numbers<[1], [0], [0], [1], [0, 0, 1, 1], [], []>} : vector<128x32xf32>, vector<32x128xf32>, vector<128x128xf32> -> vector<128x128xf32>
    %cst_38 = arith.constant dense<0.000000e+00> : vector<128x128xf32>
    %155 = tpu.matmul %2, %142, %cst_38 {dimension_numbers = #tpu.dot_dimension_numbers<[1], [0], [0], [1], [0, 0, 1, 1], [], []>} : vector<128x32xf32>, vector<32x128xf32>, vector<128x128xf32> -> vector<128x128xf32>
    %156 = arith.addf %154, %155 : vector<128x128xf32>
    %157 = vector.broadcast %3 : vector<128x1xf32> to vector<128x128xf32>
    %158 = arith.addf %156, %157 : vector<128x128xf32>
    %159 = vector.extract_strided_slice %158 {offsets = [0, 0], sizes = [32, 128], strides = [1, 1]} : vector<128x128xf32> to vector<32x128xf32>
    %160 = arith.negf %159 : vector<32x128xf32>
    %161 = math.exp %160 : vector<32x128xf32>
    %cst_39 = arith.constant 1.000000e+00 : f32
    %162 = vector.broadcast %cst_39 : f32 to vector<32x128xf32>
    %163 = arith.addf %162, %161 : vector<32x128xf32>
    %164 = arith.divf %162, %163 : vector<32x128xf32>
    %165 = vector.extract_strided_slice %158 {offsets = [32, 0], sizes = [32, 128], strides = [1, 1]} : vector<128x128xf32> to vector<32x128xf32>
    %166 = arith.negf %165 : vector<32x128xf32>
    %167 = math.exp %166 : vector<32x128xf32>
    %cst_40 = arith.constant 1.000000e+00 : f32
    %168 = vector.broadcast %cst_40 : f32 to vector<32x128xf32>
    %169 = arith.addf %168, %167 : vector<32x128xf32>
    %170 = arith.divf %168, %169 : vector<32x128xf32>
    %171 = vector.extract_strided_slice %158 {offsets = [64, 0], sizes = [32, 128], strides = [1, 1]} : vector<128x128xf32> to vector<32x128xf32>
    %172 = math.tanh %171 : vector<32x128xf32>
    %173 = vector.extract_strided_slice %158 {offsets = [96, 0], sizes = [32, 128], strides = [1, 1]} : vector<128x128xf32> to vector<32x128xf32>
    %174 = arith.negf %173 : vector<32x128xf32>
    %175 = math.exp %174 : vector<32x128xf32>
    %cst_41 = arith.constant 1.000000e+00 : f32
    %176 = vector.broadcast %cst_41 : f32 to vector<32x128xf32>
    %177 = arith.addf %176, %175 : vector<32x128xf32>
    %178 = arith.divf %176, %177 : vector<32x128xf32>
    %179 = arith.mulf %170, %145 : vector<32x128xf32>
    %180 = arith.mulf %164, %172 : vector<32x128xf32>
    %181 = arith.addf %179, %180 : vector<32x128xf32>
    %182 = math.tanh %181 : vector<32x128xf32>
    %183 = arith.mulf %178, %182 : vector<32x128xf32>
    %184 = vector.broadcast %c3_i32 : i32 to vector<1x128xi32>
    %185 = arith.cmpi slt, %184, %4 : vector<1x128xi32>
    %186 = vector.shape_cast %185 : vector<1x128xi1> to vector<1x128xi1>
    %187 = vector.broadcast %186 : vector<1x128xi1> to vector<32x128xi1>
    %188 = arith.select %187, %183, %142 : vector<32x128xi1>, vector<32x128xf32>
    %189 = vector.shape_cast %185 : vector<1x128xi1> to vector<1x128xi1>
    %190 = vector.broadcast %189 : vector<1x128xi1> to vector<32x128xi1>
    %191 = arith.select %190, %181, %145 : vector<32x128xi1>, vector<32x128xf32>
    %c4_i32 = arith.constant 4 : i32
    %192 = arith.index_cast %c4_i32 : i32 to index
    %c0_42 = arith.constant 0 : index
    %c0_43 = arith.constant 0 : index
    %193 = vector.load %arg1[%192, %c0_42, %c0_43] : memref<8x1x128xi32, #tpu.memory_space<vmem>>, vector<1x1x128xi32>
    %194 = vector.shape_cast %193 : vector<1x1x128xi32> to vector<1x128xi32>
    %195 = vector.broadcast %194 : vector<1x128xi32> to vector<128x128xi32>
    %196 = arith.cmpi eq, %5, %195 : vector<128x128xi32>
    %197 = arith.extui %196 : vector<128x128xi1> to vector<128x128xi32>
    %198 = arith.sitofp %197 : vector<128x128xi32> to vector<128x128xf32>
    %cst_44 = arith.constant dense<0.000000e+00> : vector<32x128xf32>
    %199 = tpu.matmul %0, %198, %cst_44 {dimension_numbers = #tpu.dot_dimension_numbers<[1], [0], [0], [1], [0, 0, 1, 1], [], []>} : vector<32x128xf32>, vector<128x128xf32>, vector<32x128xf32> -> vector<32x128xf32>
    %cst_45 = arith.constant dense<0.000000e+00> : vector<128x128xf32>
    %200 = tpu.matmul %1, %199, %cst_45 {dimension_numbers = #tpu.dot_dimension_numbers<[1], [0], [0], [1], [0, 0, 1, 1], [], []>} : vector<128x32xf32>, vector<32x128xf32>, vector<128x128xf32> -> vector<128x128xf32>
    %cst_46 = arith.constant dense<0.000000e+00> : vector<128x128xf32>
    %201 = tpu.matmul %2, %188, %cst_46 {dimension_numbers = #tpu.dot_dimension_numbers<[1], [0], [0], [1], [0, 0, 1, 1], [], []>} : vector<128x32xf32>, vector<32x128xf32>, vector<128x128xf32> -> vector<128x128xf32>
    %202 = arith.addf %200, %201 : vector<128x128xf32>
    %203 = vector.broadcast %3 : vector<128x1xf32> to vector<128x128xf32>
    %204 = arith.addf %202, %203 : vector<128x128xf32>
    %205 = vector.extract_strided_slice %204 {offsets = [0, 0], sizes = [32, 128], strides = [1, 1]} : vector<128x128xf32> to vector<32x128xf32>
    %206 = arith.negf %205 : vector<32x128xf32>
    %207 = math.exp %206 : vector<32x128xf32>
    %cst_47 = arith.constant 1.000000e+00 : f32
    %208 = vector.broadcast %cst_47 : f32 to vector<32x128xf32>
    %209 = arith.addf %208, %207 : vector<32x128xf32>
    %210 = arith.divf %208, %209 : vector<32x128xf32>
    %211 = vector.extract_strided_slice %204 {offsets = [32, 0], sizes = [32, 128], strides = [1, 1]} : vector<128x128xf32> to vector<32x128xf32>
    %212 = arith.negf %211 : vector<32x128xf32>
    %213 = math.exp %212 : vector<32x128xf32>
    %cst_48 = arith.constant 1.000000e+00 : f32
    %214 = vector.broadcast %cst_48 : f32 to vector<32x128xf32>
    %215 = arith.addf %214, %213 : vector<32x128xf32>
    %216 = arith.divf %214, %215 : vector<32x128xf32>
    %217 = vector.extract_strided_slice %204 {offsets = [64, 0], sizes = [32, 128], strides = [1, 1]} : vector<128x128xf32> to vector<32x128xf32>
    %218 = math.tanh %217 : vector<32x128xf32>
    %219 = vector.extract_strided_slice %204 {offsets = [96, 0], sizes = [32, 128], strides = [1, 1]} : vector<128x128xf32> to vector<32x128xf32>
    %220 = arith.negf %219 : vector<32x128xf32>
    %221 = math.exp %220 : vector<32x128xf32>
    %cst_49 = arith.constant 1.000000e+00 : f32
    %222 = vector.broadcast %cst_49 : f32 to vector<32x128xf32>
    %223 = arith.addf %222, %221 : vector<32x128xf32>
    %224 = arith.divf %222, %223 : vector<32x128xf32>
    %225 = arith.mulf %216, %191 : vector<32x128xf32>
    %226 = arith.mulf %210, %218 : vector<32x128xf32>
    %227 = arith.addf %225, %226 : vector<32x128xf32>
    %228 = math.tanh %227 : vector<32x128xf32>
    %229 = arith.mulf %224, %228 : vector<32x128xf32>
    %230 = vector.broadcast %c4_i32 : i32 to vector<1x128xi32>
    %231 = arith.cmpi slt, %230, %4 : vector<1x128xi32>
    %232 = vector.shape_cast %231 : vector<1x128xi1> to vector<1x128xi1>
    %233 = vector.broadcast %232 : vector<1x128xi1> to vector<32x128xi1>
    %234 = arith.select %233, %229, %188 : vector<32x128xi1>, vector<32x128xf32>
    %235 = vector.shape_cast %231 : vector<1x128xi1> to vector<1x128xi1>
    %236 = vector.broadcast %235 : vector<1x128xi1> to vector<32x128xi1>
    %237 = arith.select %236, %227, %191 : vector<32x128xi1>, vector<32x128xf32>
    %c5_i32 = arith.constant 5 : i32
    %238 = arith.index_cast %c5_i32 : i32 to index
    %c0_50 = arith.constant 0 : index
    %c0_51 = arith.constant 0 : index
    %239 = vector.load %arg1[%238, %c0_50, %c0_51] : memref<8x1x128xi32, #tpu.memory_space<vmem>>, vector<1x1x128xi32>
    %240 = vector.shape_cast %239 : vector<1x1x128xi32> to vector<1x128xi32>
    %241 = vector.broadcast %240 : vector<1x128xi32> to vector<128x128xi32>
    %242 = arith.cmpi eq, %5, %241 : vector<128x128xi32>
    %243 = arith.extui %242 : vector<128x128xi1> to vector<128x128xi32>
    %244 = arith.sitofp %243 : vector<128x128xi32> to vector<128x128xf32>
    %cst_52 = arith.constant dense<0.000000e+00> : vector<32x128xf32>
    %245 = tpu.matmul %0, %244, %cst_52 {dimension_numbers = #tpu.dot_dimension_numbers<[1], [0], [0], [1], [0, 0, 1, 1], [], []>} : vector<32x128xf32>, vector<128x128xf32>, vector<32x128xf32> -> vector<32x128xf32>
    %cst_53 = arith.constant dense<0.000000e+00> : vector<128x128xf32>
    %246 = tpu.matmul %1, %245, %cst_53 {dimension_numbers = #tpu.dot_dimension_numbers<[1], [0], [0], [1], [0, 0, 1, 1], [], []>} : vector<128x32xf32>, vector<32x128xf32>, vector<128x128xf32> -> vector<128x128xf32>
    %cst_54 = arith.constant dense<0.000000e+00> : vector<128x128xf32>
    %247 = tpu.matmul %2, %234, %cst_54 {dimension_numbers = #tpu.dot_dimension_numbers<[1], [0], [0], [1], [0, 0, 1, 1], [], []>} : vector<128x32xf32>, vector<32x128xf32>, vector<128x128xf32> -> vector<128x128xf32>
    %248 = arith.addf %246, %247 : vector<128x128xf32>
    %249 = vector.broadcast %3 : vector<128x1xf32> to vector<128x128xf32>
    %250 = arith.addf %248, %249 : vector<128x128xf32>
    %251 = vector.extract_strided_slice %250 {offsets = [0, 0], sizes = [32, 128], strides = [1, 1]} : vector<128x128xf32> to vector<32x128xf32>
    %252 = arith.negf %251 : vector<32x128xf32>
    %253 = math.exp %252 : vector<32x128xf32>
    %cst_55 = arith.constant 1.000000e+00 : f32
    %254 = vector.broadcast %cst_55 : f32 to vector<32x128xf32>
    %255 = arith.addf %254, %253 : vector<32x128xf32>
    %256 = arith.divf %254, %255 : vector<32x128xf32>
    %257 = vector.extract_strided_slice %250 {offsets = [32, 0], sizes = [32, 128], strides = [1, 1]} : vector<128x128xf32> to vector<32x128xf32>
    %258 = arith.negf %257 : vector<32x128xf32>
    %259 = math.exp %258 : vector<32x128xf32>
    %cst_56 = arith.constant 1.000000e+00 : f32
    %260 = vector.broadcast %cst_56 : f32 to vector<32x128xf32>
    %261 = arith.addf %260, %259 : vector<32x128xf32>
    %262 = arith.divf %260, %261 : vector<32x128xf32>
    %263 = vector.extract_strided_slice %250 {offsets = [64, 0], sizes = [32, 128], strides = [1, 1]} : vector<128x128xf32> to vector<32x128xf32>
    %264 = math.tanh %263 : vector<32x128xf32>
    %265 = vector.extract_strided_slice %250 {offsets = [96, 0], sizes = [32, 128], strides = [1, 1]} : vector<128x128xf32> to vector<32x128xf32>
    %266 = arith.negf %265 : vector<32x128xf32>
    %267 = math.exp %266 : vector<32x128xf32>
    %cst_57 = arith.constant 1.000000e+00 : f32
    %268 = vector.broadcast %cst_57 : f32 to vector<32x128xf32>
    %269 = arith.addf %268, %267 : vector<32x128xf32>
    %270 = arith.divf %268, %269 : vector<32x128xf32>
    %271 = arith.mulf %262, %237 : vector<32x128xf32>
    %272 = arith.mulf %256, %264 : vector<32x128xf32>
    %273 = arith.addf %271, %272 : vector<32x128xf32>
    %274 = math.tanh %273 : vector<32x128xf32>
    %275 = arith.mulf %270, %274 : vector<32x128xf32>
    %276 = vector.broadcast %c5_i32 : i32 to vector<1x128xi32>
    %277 = arith.cmpi slt, %276, %4 : vector<1x128xi32>
    %278 = vector.shape_cast %277 : vector<1x128xi1> to vector<1x128xi1>
    %279 = vector.broadcast %278 : vector<1x128xi1> to vector<32x128xi1>
    %280 = arith.select %279, %275, %234 : vector<32x128xi1>, vector<32x128xf32>
    %281 = vector.shape_cast %277 : vector<1x128xi1> to vector<1x128xi1>
    %282 = vector.broadcast %281 : vector<1x128xi1> to vector<32x128xi1>
    %283 = arith.select %282, %273, %237 : vector<32x128xi1>, vector<32x128xf32>
    %c6_i32 = arith.constant 6 : i32
    %284 = arith.index_cast %c6_i32 : i32 to index
    %c0_58 = arith.constant 0 : index
    %c0_59 = arith.constant 0 : index
    %285 = vector.load %arg1[%284, %c0_58, %c0_59] : memref<8x1x128xi32, #tpu.memory_space<vmem>>, vector<1x1x128xi32>
    %286 = vector.shape_cast %285 : vector<1x1x128xi32> to vector<1x128xi32>
    %287 = vector.broadcast %286 : vector<1x128xi32> to vector<128x128xi32>
    %288 = arith.cmpi eq, %5, %287 : vector<128x128xi32>
    %289 = arith.extui %288 : vector<128x128xi1> to vector<128x128xi32>
    %290 = arith.sitofp %289 : vector<128x128xi32> to vector<128x128xf32>
    %cst_60 = arith.constant dense<0.000000e+00> : vector<32x128xf32>
    %291 = tpu.matmul %0, %290, %cst_60 {dimension_numbers = #tpu.dot_dimension_numbers<[1], [0], [0], [1], [0, 0, 1, 1], [], []>} : vector<32x128xf32>, vector<128x128xf32>, vector<32x128xf32> -> vector<32x128xf32>
    %cst_61 = arith.constant dense<0.000000e+00> : vector<128x128xf32>
    %292 = tpu.matmul %1, %291, %cst_61 {dimension_numbers = #tpu.dot_dimension_numbers<[1], [0], [0], [1], [0, 0, 1, 1], [], []>} : vector<128x32xf32>, vector<32x128xf32>, vector<128x128xf32> -> vector<128x128xf32>
    %cst_62 = arith.constant dense<0.000000e+00> : vector<128x128xf32>
    %293 = tpu.matmul %2, %280, %cst_62 {dimension_numbers = #tpu.dot_dimension_numbers<[1], [0], [0], [1], [0, 0, 1, 1], [], []>} : vector<128x32xf32>, vector<32x128xf32>, vector<128x128xf32> -> vector<128x128xf32>
    %294 = arith.addf %292, %293 : vector<128x128xf32>
    %295 = vector.broadcast %3 : vector<128x1xf32> to vector<128x128xf32>
    %296 = arith.addf %294, %295 : vector<128x128xf32>
    %297 = vector.extract_strided_slice %296 {offsets = [0, 0], sizes = [32, 128], strides = [1, 1]} : vector<128x128xf32> to vector<32x128xf32>
    %298 = arith.negf %297 : vector<32x128xf32>
    %299 = math.exp %298 : vector<32x128xf32>
    %cst_63 = arith.constant 1.000000e+00 : f32
    %300 = vector.broadcast %cst_63 : f32 to vector<32x128xf32>
    %301 = arith.addf %300, %299 : vector<32x128xf32>
    %302 = arith.divf %300, %301 : vector<32x128xf32>
    %303 = vector.extract_strided_slice %296 {offsets = [32, 0], sizes = [32, 128], strides = [1, 1]} : vector<128x128xf32> to vector<32x128xf32>
    %304 = arith.negf %303 : vector<32x128xf32>
    %305 = math.exp %304 : vector<32x128xf32>
    %cst_64 = arith.constant 1.000000e+00 : f32
    %306 = vector.broadcast %cst_64 : f32 to vector<32x128xf32>
    %307 = arith.addf %306, %305 : vector<32x128xf32>
    %308 = arith.divf %306, %307 : vector<32x128xf32>
    %309 = vector.extract_strided_slice %296 {offsets = [64, 0], sizes = [32, 128], strides = [1, 1]} : vector<128x128xf32> to vector<32x128xf32>
    %310 = math.tanh %309 : vector<32x128xf32>
    %311 = vector.extract_strided_slice %296 {offsets = [96, 0], sizes = [32, 128], strides = [1, 1]} : vector<128x128xf32> to vector<32x128xf32>
    %312 = arith.negf %311 : vector<32x128xf32>
    %313 = math.exp %312 : vector<32x128xf32>
    %cst_65 = arith.constant 1.000000e+00 : f32
    %314 = vector.broadcast %cst_65 : f32 to vector<32x128xf32>
    %315 = arith.addf %314, %313 : vector<32x128xf32>
    %316 = arith.divf %314, %315 : vector<32x128xf32>
    %317 = arith.mulf %308, %283 : vector<32x128xf32>
    %318 = arith.mulf %302, %310 : vector<32x128xf32>
    %319 = arith.addf %317, %318 : vector<32x128xf32>
    %320 = math.tanh %319 : vector<32x128xf32>
    %321 = arith.mulf %316, %320 : vector<32x128xf32>
    %322 = vector.broadcast %c6_i32 : i32 to vector<1x128xi32>
    %323 = arith.cmpi slt, %322, %4 : vector<1x128xi32>
    %324 = vector.shape_cast %323 : vector<1x128xi1> to vector<1x128xi1>
    %325 = vector.broadcast %324 : vector<1x128xi1> to vector<32x128xi1>
    %326 = arith.select %325, %321, %280 : vector<32x128xi1>, vector<32x128xf32>
    %327 = vector.shape_cast %323 : vector<1x128xi1> to vector<1x128xi1>
    %328 = vector.broadcast %327 : vector<1x128xi1> to vector<32x128xi1>
    %329 = arith.select %328, %319, %283 : vector<32x128xi1>, vector<32x128xf32>
    %c7_i32 = arith.constant 7 : i32
    %330 = arith.index_cast %c7_i32 : i32 to index
    %c0_66 = arith.constant 0 : index
    %c0_67 = arith.constant 0 : index
    %331 = vector.load %arg1[%330, %c0_66, %c0_67] : memref<8x1x128xi32, #tpu.memory_space<vmem>>, vector<1x1x128xi32>
    %332 = vector.shape_cast %331 : vector<1x1x128xi32> to vector<1x128xi32>
    %333 = vector.broadcast %332 : vector<1x128xi32> to vector<128x128xi32>
    %334 = arith.cmpi eq, %5, %333 : vector<128x128xi32>
    %335 = arith.extui %334 : vector<128x128xi1> to vector<128x128xi32>
    %336 = arith.sitofp %335 : vector<128x128xi32> to vector<128x128xf32>
    %cst_68 = arith.constant dense<0.000000e+00> : vector<32x128xf32>
    %337 = tpu.matmul %0, %336, %cst_68 {dimension_numbers = #tpu.dot_dimension_numbers<[1], [0], [0], [1], [0, 0, 1, 1], [], []>} : vector<32x128xf32>, vector<128x128xf32>, vector<32x128xf32> -> vector<32x128xf32>
    %cst_69 = arith.constant dense<0.000000e+00> : vector<128x128xf32>
    %338 = tpu.matmul %1, %337, %cst_69 {dimension_numbers = #tpu.dot_dimension_numbers<[1], [0], [0], [1], [0, 0, 1, 1], [], []>} : vector<128x32xf32>, vector<32x128xf32>, vector<128x128xf32> -> vector<128x128xf32>
    %cst_70 = arith.constant dense<0.000000e+00> : vector<128x128xf32>
    %339 = tpu.matmul %2, %326, %cst_70 {dimension_numbers = #tpu.dot_dimension_numbers<[1], [0], [0], [1], [0, 0, 1, 1], [], []>} : vector<128x32xf32>, vector<32x128xf32>, vector<128x128xf32> -> vector<128x128xf32>
    %340 = arith.addf %338, %339 : vector<128x128xf32>
    %341 = vector.broadcast %3 : vector<128x1xf32> to vector<128x128xf32>
    %342 = arith.addf %340, %341 : vector<128x128xf32>
    %343 = vector.extract_strided_slice %342 {offsets = [0, 0], sizes = [32, 128], strides = [1, 1]} : vector<128x128xf32> to vector<32x128xf32>
    %344 = arith.negf %343 : vector<32x128xf32>
    %345 = math.exp %344 : vector<32x128xf32>
    %cst_71 = arith.constant 1.000000e+00 : f32
    %346 = vector.broadcast %cst_71 : f32 to vector<32x128xf32>
    %347 = arith.addf %346, %345 : vector<32x128xf32>
    %348 = arith.divf %346, %347 : vector<32x128xf32>
    %349 = vector.extract_strided_slice %342 {offsets = [32, 0], sizes = [32, 128], strides = [1, 1]} : vector<128x128xf32> to vector<32x128xf32>
    %350 = arith.negf %349 : vector<32x128xf32>
    %351 = math.exp %350 : vector<32x128xf32>
    %cst_72 = arith.constant 1.000000e+00 : f32
    %352 = vector.broadcast %cst_72 : f32 to vector<32x128xf32>
    %353 = arith.addf %352, %351 : vector<32x128xf32>
    %354 = arith.divf %352, %353 : vector<32x128xf32>
    %355 = vector.extract_strided_slice %342 {offsets = [64, 0], sizes = [32, 128], strides = [1, 1]} : vector<128x128xf32> to vector<32x128xf32>
    %356 = math.tanh %355 : vector<32x128xf32>
    %357 = vector.extract_strided_slice %342 {offsets = [96, 0], sizes = [32, 128], strides = [1, 1]} : vector<128x128xf32> to vector<32x128xf32>
    %358 = arith.negf %357 : vector<32x128xf32>
    %359 = math.exp %358 : vector<32x128xf32>
    %cst_73 = arith.constant 1.000000e+00 : f32
    %360 = vector.broadcast %cst_73 : f32 to vector<32x128xf32>
    %361 = arith.addf %360, %359 : vector<32x128xf32>
    %362 = arith.divf %360, %361 : vector<32x128xf32>
    %363 = arith.mulf %354, %329 : vector<32x128xf32>
    %364 = arith.mulf %348, %356 : vector<32x128xf32>
    %365 = arith.addf %363, %364 : vector<32x128xf32>
    %366 = math.tanh %365 : vector<32x128xf32>
    %367 = arith.mulf %362, %366 : vector<32x128xf32>
    %368 = vector.broadcast %c7_i32 : i32 to vector<1x128xi32>
    %369 = arith.cmpi slt, %368, %4 : vector<1x128xi32>
    %370 = vector.shape_cast %369 : vector<1x128xi1> to vector<1x128xi1>
    %371 = vector.broadcast %370 : vector<1x128xi1> to vector<32x128xi1>
    %372 = arith.select %371, %367, %326 : vector<32x128xi1>, vector<32x128xf32>
    %373 = vector.shape_cast %369 : vector<1x128xi1> to vector<1x128xi1>
    %374 = vector.broadcast %373 : vector<1x128xi1> to vector<32x128xi1>
    %375 = arith.select %374, %365, %329 : vector<32x128xi1>, vector<32x128xf32>
    %c8_i32 = arith.constant 8 : i32
    %c0_74 = arith.constant 0 : index
    %c0_75 = arith.constant 0 : index
    %376 = vector.load %arg7[%c0_74, %c0_75] : memref<128x32xf32, #tpu.memory_space<vmem>>, vector<128x32xf32>
    %cst_76 = arith.constant dense<0.000000e+00> : vector<128x128xf32>
    %377 = tpu.matmul %376, %372, %cst_76 {dimension_numbers = #tpu.dot_dimension_numbers<[1], [0], [0], [1], [0, 0, 1, 1], [], []>} : vector<128x32xf32>, vector<32x128xf32>, vector<128x128xf32> -> vector<128x128xf32>
    %c0_77 = arith.constant 0 : index
    %c0_78 = arith.constant 0 : index
    %378 = vector.load %arg8[%c0_77, %c0_78] : memref<128x1xf32, #tpu.memory_space<vmem>>, vector<128x1xf32>
    %379 = vector.broadcast %378 : vector<128x1xf32> to vector<128x128xf32>
    %380 = arith.addf %377, %379 : vector<128x128xf32>
    %c0_79 = arith.constant 0 : index
    %c0_80 = arith.constant 0 : index
    %381 = vector.load %arg9[%c0_79, %c0_80] : memref<128x128xf32, #tpu.memory_space<vmem>>, vector<128x128xf32>
    tpu.vector_store %arg9[%c0_79, %c0_80], %380 {strides = array<i32>} : memref<128x128xf32, #tpu.memory_space<vmem>>, vector<128x128xf32>,
    return
  }
  func.func @transform_0(%arg0: i32) -> (i32, i32, i32) {
    %c0_i32 = arith.constant 0 : i32
    %c0_i32_0 = arith.constant 0 : i32
    %c0_i32_1 = arith.constant 0 : i32
    return %c0_i32, %c0_i32_0, %arg0 : i32, i32, i32
  }
  func.func @transform_1(%arg0: i32) -> (i32, i32) {
    %c0_i32 = arith.constant 0 : i32
    %c0_i32_0 = arith.constant 0 : i32
    return %c0_i32, %arg0 : i32, i32
  }
  func.func @transform_2(%arg0: i32) -> (i32, i32) {
    %c0_i32 = arith.constant 0 : i32
    %c0_i32_0 = arith.constant 0 : i32
    %c0_i32_1 = arith.constant 0 : i32
    return %c0_i32, %c0_i32_0 : i32, i32
  }
  func.func @transform_3(%arg0: i32) -> (i32, i32) {
    %c0_i32 = arith.constant 0 : i32
    %c0_i32_0 = arith.constant 0 : i32
    %c0_i32_1 = arith.constant 0 : i32
    return %c0_i32, %c0_i32_0 : i32, i32
  }
  func.func @transform_4(%arg0: i32) -> (i32, i32) {
    %c0_i32 = arith.constant 0 : i32
    %c0_i32_0 = arith.constant 0 : i32
    %c0_i32_1 = arith.constant 0 : i32
    return %c0_i32, %c0_i32_0 : i32, i32
  }
  func.func @transform_5(%arg0: i32) -> (i32, i32) {
    %c0_i32 = arith.constant 0 : i32
    %c0_i32_0 = arith.constant 0 : i32
    %c0_i32_1 = arith.constant 0 : i32
    return %c0_i32, %c0_i32_0 : i32, i32
  }
  func.func @transform_6(%arg0: i32) -> (i32, i32) {
    %c0_i32 = arith.constant 0 : i32
    %c0_i32_0 = arith.constant 0 : i32
    %c0_i32_1 = arith.constant 0 : i32
    return %c0_i32, %c0_i32_0 : i32, i32
  }
  func.func @transform_7(%arg0: i32) -> (i32, i32) {
    %c0_i32 = arith.constant 0 : i32
    %c0_i32_0 = arith.constant 0 : i32
    %c0_i32_1 = arith.constant 0 : i32
    return %c0_i32, %c0_i32_0 : i32, i32
  }
  func.func @transform_8(%arg0: i32) -> (i32, i32) {
    %c0_i32 = arith.constant 0 : i32
    %c0_i32_0 = arith.constant 0 : i32
    return %c0_i32, %arg0 : i32, i32
  }
}

</mosaic_0001>

<llo_original>
// kernel: tpu_custom_call.1
$region0: #{tpu_custom_call.1}
  #allocation0 [shape = 'u32[]', space=smem, size = 0x4, offset = 0x4, fixed_abs, tag = 'smem constant byte address 0x4 - core index']
  #allocation1 [shape = 'u32[72,128]{1,0:T(1,128)}', space=vmem, size = 0x9000, scoped, tag = 'internal scratch']
  %s0 = inlined_call_operand.vmem [shape: s32[8,1,128], index: 0, kind: input, shape index: {}]
  %s1 = inlined_call_operand.vmem [shape: s32[1,128], index: 1, kind: input, shape index: {}]
  %s2 = inlined_call_operand.vmem [shape: f32[32,128], index: 2, kind: input, shape index: {}]
  %s3 = inlined_call_operand.vmem [shape: f32[128,32], index: 3, kind: input, shape index: {}]
  %s4 = inlined_call_operand.vmem [shape: f32[128,32], index: 4, kind: input, shape index: {}]
  %s5 = inlined_call_operand.vmem [shape: f32[128,1], index: 5, kind: input, shape index: {}]
  %s6 = inlined_call_operand.vmem [shape: f32[128,32], index: 6, kind: input, shape index: {}]
  %s7 = inlined_call_operand.vmem [shape: f32[128,1], index: 7, kind: input, shape index: {}]
  %s8 = inlined_call_operand.hbm [shape: f32[128,128], index: 8, kind: output, shape index: {}]
  %s9 = sld [smem:[#allocation0]]
  $region42: #{tpu_custom_call.1} parent=0
    _
  %s11 = ssub.s32 1, %s9
  %s12 = scalar_select 0, %s11, %s9
  $region1: #{tpu_custom_call.1} parent=0
    #allocation2 [shape = 'u8[65536]{0}', space=vmem, size = 0x10000, scoped, tag = 'output window, operand 0, single buffered']
    #allocation3 [shape = 's32[1]{0}', space=sflag, size = 0x4, scoped, tag = 'scoped memory for tpu_custom_call.1']
    %13 = vsyncpa [#allocation3], 0
    // Predicated region
    $region2: #{tpu_custom_call.1} parent=1 // pred_check
      _
    $region3: #{tpu_custom_call.1} parent=1 // pred_check_branch
      %15 = sbr.rel (0) target = $region5
    $region4: #{tpu_custom_call.1} parent=1 // pred_region
      _
    $region5: #{tpu_custom_call.1} parent=1 // pred_fallthru
      _
    // Predicated region
    $region6: #{tpu_custom_call.1} parent=1 // pred_check
      _
    $region7: #{tpu_custom_call.1} parent=1 // pred_check_branch
      %17 = sbr.rel (0) target = $region9
    $region8: #{tpu_custom_call.1} parent=1 // pred_region
      _
    $region9: #{tpu_custom_call.1} parent=1 // pred_fallthru
      _
    // Predicated region
    $region10: #{tpu_custom_call.1} parent=1 // pred_check
      _
    $region11: #{tpu_custom_call.1} parent=1 // pred_check_branch
      %19 = sbr.rel (0) target = $region13
    $region12: #{tpu_custom_call.1} parent=1 // pred_region
      _
    $region13: #{tpu_custom_call.1} parent=1 // pred_fallthru
      _
    // Predicated region
    $region14: #{tpu_custom_call.1} parent=1 // pred_check
      _
    $region15: #{tpu_custom_call.1} parent=1 // pred_check_branch
      %21 = sbr.rel (0) target = $region17
    $region16: #{tpu_custom_call.1} parent=1 // pred_region
      _
    $region17: #{tpu_custom_call.1} parent=1 // pred_fallthru
      _
    // Predicated region
    $region18: #{tpu_custom_call.1} parent=1 // pred_check
      _
    $region19: #{tpu_custom_call.1} parent=1 // pred_check_branch
      %23 = sbr.rel (0) target = $region21
    $region20: #{tpu_custom_call.1} parent=1 // pred_region
      _
    $region21: #{tpu_custom_call.1} parent=1 // pred_fallthru
      _
    // Predicated region
    $region22: #{tpu_custom_call.1} parent=1 // pred_check
      _
    $region23: #{tpu_custom_call.1} parent=1 // pred_check_branch
      %25 = sbr.rel (0) target = $region25
    $region24: #{tpu_custom_call.1} parent=1 // pred_region
      _
    $region25: #{tpu_custom_call.1} parent=1 // pred_fallthru
      _
    // Predicated region
    $region26: #{tpu_custom_call.1} parent=1 // pred_check
      _
    $region27: #{tpu_custom_call.1} parent=1 // pred_check_branch
      %27 = sbr.rel (0) target = $region29
    $region28: #{tpu_custom_call.1} parent=1 // pred_region
      _
    $region29: #{tpu_custom_call.1} parent=1 // pred_fallthru
      _
    // Predicated region
    $region30: #{tpu_custom_call.1} parent=1 // pred_check
      _
    $region31: #{tpu_custom_call.1} parent=1 // pred_check_branch
      %29 = sbr.rel (0) target = $region33
    $region32: #{tpu_custom_call.1} parent=1 // pred_region
      _
    $region33: #{tpu_custom_call.1} parent=1 // pred_fallthru
      _
    %v30 = vld [vmem:[%s2] sm:$0xff]
    %v31 = vld [vmem:[%s2 + $0x8] sm:$0xff]
    %v32 = vld [vmem:[%s2 + $0x10] sm:$0xff]
    %v33 = vld [vmem:[%s2 + $0x18] sm:$0xff]
    %v34 = vld [vmem:[%s3] sm:$0xff]
    %v35 = vld [vmem:[%s3 + $0x8] sm:$0xff]
    %v36 = vld [vmem:[%s3 + $0x10] sm:$0xff]
    %v37 = vld [vmem:[%s3 + $0x18] sm:$0xff]
    %v38 = vld [vmem:[%s3 + $0x20] sm:$0xff]
    %v39 = vld [vmem:[%s3 + $0x28] sm:$0xff]
    %v40 = vld [vmem:[%s3 + $0x30] sm:$0xff]
    %v41 = vld [vmem:[%s3 + $0x38] sm:$0xff]
    %v42 = vld [vmem:[%s3 + $0x40] sm:$0xff]
    %v43 = vld [vmem:[%s3 + $0x48] sm:$0xff]
    %v44 = vld [vmem:[%s3 + $0x50] sm:$0xff]
    %v45 = vld [vmem:[%s3 + $0x58] sm:$0xff]
    %v46 = vld [vmem:[%s3 + $0x60] sm:$0xff]
    %v47 = vld [vmem:[%s3 + $0x68] sm:$0xff]
    %v48 = vld [vmem:[%s3 + $0x70] sm:$0xff]
    %v49 = vld [vmem:[%s3 + $0x78] sm:$0xff]
    %v50 = vld [vmem:[%s4] sm:$0xff]
    %v51 = vld [vmem:[%s4 + $0x8] sm:$0xff]
    %v52 = vld [vmem:[%s4 + $0x10] sm:$0xff]
    %v53 = vld [vmem:[%s4 + $0x18] sm:$0xff]
    %v54 = vld [vmem:[%s4 + $0x20] sm:$0xff]
    %v55 = vld [vmem:[%s4 + $0x28] sm:$0xff]
    %v56 = vld [vmem:[%s4 + $0x30] sm:$0xff]
    %v57 = vld [vmem:[%s4 + $0x38] sm:$0xff]
    %v58 = vld [vmem:[%s4 + $0x40] sm:$0xff]
    %v59 = vld [vmem:[%s4 + $0x48] sm:$0xff]
    %v60 = vld [vmem:[%s4 + $0x50] sm:$0xff]
    %v61 = vld [vmem:[%s4 + $0x58] sm:$0xff]
    %v62 = vld [vmem:[%s4 + $0x60] sm:$0xff]
    %v63 = vld [vmem:[%s4 + $0x68] sm:$0xff]
    %v64 = vld [vmem:[%s4 + $0x70] sm:$0xff]
    %v65 = vld [vmem:[%s4 + $0x78] sm:$0xff]
    %v66 = vld [vmem:[%s5] sm:$0xff]
    %v67 = vld [vmem:[%s5 + $0x8] sm:$0xff]
    %v68 = vld [vmem:[%s5 + $0x10] sm:$0xff]
    %v69 = vld [vmem:[%s5 + $0x18] sm:$0xff]
    %v70 = vld [vmem:[%s5 + $0x20] sm:$0xff]
    %v71 = vld [vmem:[%s5 + $0x28] sm:$0xff]
    %v72 = vld [vmem:[%s5 + $0x30] sm:$0xff]
    %v73 = vld [vmem:[%s5 + $0x38] sm:$0xff]
    %v74 = vld [vmem:[%s5 + $0x40] sm:$0xff]
    %v75 = vld [vmem:[%s5 + $0x48] sm:$0xff]
    %v76 = vld [vmem:[%s5 + $0x50] sm:$0xff]
    %v77 = vld [vmem:[%s5 + $0x58] sm:$0xff]
    %v78 = vld [vmem:[%s5 + $0x60] sm:$0xff]
    %v79 = vld [vmem:[%s5 + $0x68] sm:$0xff]
    %v80 = vld [vmem:[%s5 + $0x70] sm:$0xff]
    %v81 = vld [vmem:[%s5 + $0x78] sm:$0xff]
    %v82 = vld [vmem:[%s1] sm:$0x1]
    %v83 = vlaneseq
    %v84 = vshrl.u32 %v83, 7
    %v85 = vadd.s32 %v84, 8
    %v86 = vadd.s32 %v84, 16
    %v87 = vadd.s32 %v84, 24
    %v88 = vadd.s32 %v84, 32
    %v89 = vadd.s32 %v84, 40
    %v90 = vadd.s32 %v84, 48
    %v91 = vadd.s32 %v84, 56
    %v92 = vadd.s32 %v84, 64
    %v93 = vadd.s32 %v84, 72
    %v94 = vadd.s32 %v84, 80
    %v95 = vadd.s32 %v84, 88
    %v96 = vadd.s32 %v84, 96
    %v97 = vadd.s32 %v84, 104
    %v98 = vadd.s32 %v84, 112
    %v99 = vadd.s32 %v84, 120
    %v100 = vld [vmem:[%s0] sm:$0x1]
    %v101 = vperm.slane %v100, 0
    %vm102 = vcmp.eq.s32.totalorder %v84, %v101
    %vm103 = vcmp.eq.s32.totalorder %v85, %v101
    %vm104 = vcmp.eq.s32.totalorder %v86, %v101
    %vm105 = vcmp.eq.s32.totalorder %v87, %v101
    %vm106 = vcmp.eq.s32.totalorder %v88, %v101
    %vm107 = vcmp.eq.s32.totalorder %v89, %v101
    %vm108 = vcmp.eq.s32.totalorder %v90, %v101
    %vm109 = vcmp.eq.s32.totalorder %v91, %v101
    %vm110 = vcmp.eq.s32.totalorder %v92, %v101
    %vm111 = vcmp.eq.s32.totalorder %v93, %v101
    %vm112 = vcmp.eq.s32.totalorder %v94, %v101
    %vm113 = vcmp.eq.s32.totalorder %v95, %v101
    %vm114 = vcmp.eq.s32.totalorder %v96, %v101
    %vm115 = vcmp.eq.s32.totalorder %v97, %v101
    %vm116 = vcmp.eq.s32.totalorder %v98, %v101
    %vm117 = vcmp.eq.s32.totalorder %v99, %v101
    %v118 = vsel %vm102, 1, 0
    %v119 = vsel %vm103, 1, 0
    %v120 = vsel %vm104, 1, 0
    %v121 = vsel %vm105, 1, 0
    %v122 = vsel %vm106, 1, 0
    %v123 = vsel %vm107, 1, 0
    %v124 = vsel %vm108, 1, 0
    %v125 = vsel %vm109, 1, 0
    %v126 = vsel %vm110, 1, 0
    %v127 = vsel %vm111, 1, 0
    %v128 = vsel %vm112, 1, 0
    %v129 = vsel %vm113, 1, 0
    %v130 = vsel %vm114, 1, 0
    %v131 = vsel %vm115, 1, 0
    %v132 = vsel %vm116, 1, 0
    %v133 = vsel %vm117, 1, 0
    %v134 = vcvt.s32.f32 %v118
    %v135 = vcvt.s32.f32 %v119
    %v136 = vcvt.s32.f32 %v120
    %v137 = vcvt.s32.f32 %v121
    %v138 = vcvt.s32.f32 %v122
    %v139 = vcvt.s32.f32 %v123
    %v140 = vcvt.s32.f32 %v124
    %v141 = vcvt.s32.f32 %v125
    %v142 = vcvt.s32.f32 %v126
    %v143 = vcvt.s32.f32 %v127
    %v144 = vcvt.s32.f32 %v128
    %v145 = vcvt.s32.f32 %v129
    %v146 = vcvt.s32.f32 %v130
    %v147 = vcvt.s32.f32 %v131
    %v148 = vcvt.s32.f32 %v132
    %v149 = vcvt.s32.f32 %v133
    %150 = vmatpush.msra.mxu0 %v149
    %151 = vmatpush.msra.mxu0 %v148
    %152 = vmatpush.msra.mxu0 %v147
    %153 = vmatpush.msra.mxu0 %v146
    %154 = vmatpush.msra.mxu0 %v145
    %155 = vmatpush.msra.mxu0 %v144
    %156 = vmatpush.msra.mxu0 %v143
    %157 = vmatpush.msra.mxu0 %v142
    %158 = vmatpush.msra.mxu0 %v141
    %159 = vmatpush.msra.mxu0 %v140
    %160 = vmatpush.msra.mxu0 %v139
    %161 = vmatpush.msra.mxu0 %v138
    %162 = vmatpush.msra.mxu0 %v137
    %163 = vmatpush.msra.mxu0 %v136
    %164 = vmatpush.msra.mxu0 %v135
    %165 = vmatpush.msra.mxu0 %v134
    %166 = vmatmul.f32.gmra.mxu0 %v30
    %v167 = vpop.f32.mrf.mxu0
    %v168 = vadd.f32 0.0, %v167
    %169 = vmatmul.f32.gmra.mxu0 %v31
    %v170 = vpop.f32.mrf.mxu0
    %v171 = vadd.f32 0.0, %v170
    %172 = vmatmul.f32.gmra.mxu0 %v32
    %v173 = vpop.f32.mrf.mxu0
    %v174 = vadd.f32 0.0, %v173
    %175 = vmatmul.f32.gmra.mxu0 %v33
    %v176 = vpop.f32.mrf.mxu0
    %v177 = vadd.f32 0.0, %v176
    %178 = vdwg.mxu0
    %vm179 = vcmask 261120
    %v181 = vsel %vm179, %v50, 0
    %v184 = vsel %vm179, %v51, 0
    %v187 = vsel %vm179, %v52, 0
    %v190 = vsel %vm179, %v53, 0
    %v193 = vsel %vm179, %v54, 0
    %v196 = vsel %vm179, %v55, 0
    %v199 = vsel %vm179, %v56, 0
    %v202 = vsel %vm179, %v57, 0
    %v205 = vsel %vm179, %v58, 0
    %v208 = vsel %vm179, %v59, 0
    %v211 = vsel %vm179, %v60, 0
    %v214 = vsel %vm179, %v61, 0
    %v217 = vsel %vm179, %v62, 0
    %v220 = vsel %vm179, %v63, 0
    %v223 = vsel %vm179, %v64, 0
    %v226 = vsel %vm179, %v65, 0
    %228 = vmatpush.msra.mxu0 0.0
    %229 = vmatpush.msra.mxu0 0.0
    %230 = vmatpush.msra.mxu0 0.0
    %231 = vmatpush.msra.mxu0 0.0
    %232 = vmatpush.msra.mxu0 0.0
    %233 = vmatpush.msra.mxu0 0.0
    %234 = vmatpush.msra.mxu0 0.0
    %235 = vmatpush.msra.mxu0 0.0
    %236 = vmatpush.msra.mxu0 0.0
    %237 = vmatpush.msra.mxu0 0.0
    %238 = vmatpush.msra.mxu0 0.0
    %239 = vmatpush.msra.mxu0 0.0
    %240 = vmatpush.msra.mxu0 0.0
    %241 = vmatpush.msra.mxu0 0.0
    %242 = vmatpush.msra.mxu0 0.0
    %243 = vmatpush.msra.mxu0 0.0
    %244 = vmatmul.f32.gmra.mxu0 %v181
    %v245 = vpop.f32.mrf.mxu0
    %v246 = vadd.f32 0.0, %v245
    %247 = vmatmul.f32.gmra.mxu0 %v184
    %v248 = vpop.f32.mrf.mxu0
    %v249 = vadd.f32 0.0, %v248
    %250 = vmatmul.f32.gmra.mxu0 %v187
    %v251 = vpop.f32.mrf.mxu0
    %v252 = vadd.f32 0.0, %v251
    %253 = vmatmul.f32.gmra.mxu0 %v190
    %v254 = vpop.f32.mrf.mxu0
    %v255 = vadd.f32 0.0, %v254
    %256 = vmatmul.f32.gmra.mxu0 %v193
    %v257 = vpop.f32.mrf.mxu0
    %v258 = vadd.f32 0.0, %v257
    %259 = vmatmul.f32.gmra.mxu0 %v196
    %v260 = vpop.f32.mrf.mxu0
    %v261 = vadd.f32 0.0, %v260
    %262 = vmatmul.f32.gmra.mxu0 %v199
    %v263 = vpop.f32.mrf.mxu0
    %v264 = vadd.f32 0.0, %v263
    %265 = vmatmul.f32.gmra.mxu0 %v202
    %v266 = vpop.f32.mrf.mxu0
    %v267 = vadd.f32 0.0, %v266
    %268 = vmatmul.f32.gmra.mxu0 %v205
    %v269 = vpop.f32.mrf.mxu0
    %v270 = vadd.f32 0.0, %v269
    %271 = vmatmul.f32.gmra.mxu0 %v208
    %v272 = vpop.f32.mrf.mxu0
    %v273 = vadd.f32 0.0, %v272
    %274 = vmatmul.f32.gmra.mxu0 %v211
    %v275 = vpop.f32.mrf.mxu0
    %v276 = vadd.f32 0.0, %v275
    %277 = vmatmul.f32.gmra.mxu0 %v214
    %v278 = vpop.f32.mrf.mxu0
    %v279 = vadd.f32 0.0, %v278
    %280 = vmatmul.f32.gmra.mxu0 %v217
    %v281 = vpop.f32.mrf.mxu0
    %v282 = vadd.f32 0.0, %v281
    %283 = vmatmul.f32.gmra.mxu0 %v220
    %v284 = vpop.f32.mrf.mxu0
    %v285 = vadd.f32 0.0, %v284
    %286 = vmatmul.f32.gmra.mxu0 %v223
    %v287 = vpop.f32.mrf.mxu0
    %v288 = vadd.f32 0.0, %v287
    %289 = vmatmul.f32.gmra.mxu0 %v226
    %v290 = vpop.f32.mrf.mxu0
    %v291 = vadd.f32 0.0, %v290
    %292 = vdwg.mxu0
    %v294 = vsel %vm179, %v34, 0
    %v297 = vsel %vm179, %v35, 0
    %v300 = vsel %vm179, %v36, 0
    %v303 = vsel %vm179, %v37, 0
    %v306 = vsel %vm179, %v38, 0
    %v309 = vsel %vm179, %v39, 0
    %v312 = vsel %vm179, %v40, 0
    %v315 = vsel %vm179, %v41, 0
    %v318 = vsel %vm179, %v42, 0
    %v321 = vsel %vm179, %v43, 0
    %v324 = vsel %vm179, %v44, 0
    %v327 = vsel %vm179, %v45, 0
    %v330 = vsel %vm179, %v46, 0
    %v333 = vsel %vm179, %v47, 0
    %v336 = vsel %vm179, %v48, 0
    %v339 = vsel %vm179, %v49, 0
    %341 = vmatpush.msra.mxu0 0.0
    %342 = vmatpush.msra.mxu0 0.0
    %343 = vmatpush.msra.mxu0 0.0
    %344 = vmatpush.msra.mxu0 0.0
    %345 = vmatpush.msra.mxu0 0.0
    %346 = vmatpush.msra.mxu0 0.0
    %347 = vmatpush.msra.mxu0 0.0
    %348 = vmatpush.msra.mxu0 0.0
    %349 = vmatpush.msra.mxu0 0.0
    %350 = vmatpush.msra.mxu0 0.0
    %351 = vmatpush.msra.mxu0 0.0
    %352 = vmatpush.msra.mxu0 0.0
    %353 = vmatpush.msra.mxu0 %v177
    %354 = vmatpush.msra.mxu0 %v174
    %355 = vmatpush.msra.mxu0 %v171
    %356 = vmatpush.msra.mxu0 %v168
    %357 = vmatmul.f32.gmra.mxu0 %v294
    %v358 = vpop.f32.mrf.mxu0
    %v359 = vadd.f32 %v246, %v358
    %360 = vmatmul.f32.gmra.mxu0 %v297
    %v361 = vpop.f32.mrf.mxu0
    %v362 = vadd.f32 %v249, %v361
    %363 = vmatmul.f32.gmra.mxu0 %v300
    %v364 = vpop.f32.mrf.mxu0
    %v365 = vadd.f32 %v252, %v364
    %366 = vmatmul.f32.gmra.mxu0 %v303
    %v367 = vpop.f32.mrf.mxu0
    %v368 = vadd.f32 %v255, %v367
    %369 = vmatmul.f32.gmra.mxu0 %v306
    %v370 = vpop.f32.mrf.mxu0
    %v371 = vadd.f32 %v258, %v370
    %372 = vmatmul.f32.gmra.mxu0 %v309
    %v373 = vpop.f32.mrf.mxu0
    %v374 = vadd.f32 %v261, %v373
    %375 = vmatmul.f32.gmra.mxu0 %v312
    %v376 = vpop.f32.mrf.mxu0
    %v377 = vadd.f32 %v264, %v376
    %378 = vmatmul.f32.gmra.mxu0 %v315
    %v379 = vpop.f32.mrf.mxu0
    %v380 = vadd.f32 %v267, %v379
    %381 = vmatmul.f32.gmra.mxu0 %v318
    %v382 = vpop.f32.mrf.mxu0
    %v383 = vadd.f32 %v270, %v382
    %384 = vmatmul.f32.gmra.mxu0 %v321
    %v385 = vpop.f32.mrf.mxu0
    %v386 = vadd.f32 %v273, %v385
    %387 = vmatmul.f32.gmra.mxu0 %v324
    %v388 = vpop.f32.mrf.mxu0
    %v389 = vadd.f32 %v276, %v388
    %390 = vmatmul.f32.gmra.mxu0 %v327
    %v391 = vpop.f32.mrf.mxu0
    %v392 = vadd.f32 %v279, %v391
    %393 = vmatmul.f32.gmra.mxu0 %v330
    %v394 = vpop.f32.mrf.mxu0
    %v395 = vadd.f32 %v282, %v394
    %396 = vmatmul.f32.gmra.mxu0 %v333
    %v397 = vpop.f32.mrf.mxu0
    %v398 = vadd.f32 %v285, %v397
    %399 = vmatmul.f32.gmra.mxu0 %v336
    %v400 = vpop.f32.mrf.mxu0
    %v401 = vadd.f32 %v288, %v400
    %402 = vmatmul.f32.gmra.mxu0 %v339
    %v403 = vpop.f32.mrf.mxu0
    %v404 = vadd.f32 %v291, %v403
    %405 = vdwg.mxu0
    %407 = vset.pattern.permute.xlu0 0
    %408 = vperm.xlu0 %407, %v66
    %v409 = vpop.permute.xlu0 %408
    %412 = vset.pattern.permute.xlu0 0
    %413 = vperm.xlu0 %412, %v67
    %v414 = vpop.permute.xlu0 %413
    %417 = vset.pattern.permute.xlu0 0
    %418 = vperm.xlu0 %417, %v68
    %v419 = vpop.permute.xlu0 %418
    %422 = vset.pattern.permute.xlu0 0
    %423 = vperm.xlu0 %422, %v69
    %v424 = vpop.permute.xlu0 %423
    %427 = vset.pattern.permute.xlu0 0
    %428 = vperm.xlu0 %427, %v70
    %v429 = vpop.permute.xlu0 %428
    %432 = vset.pattern.permute.xlu0 0
    %433 = vperm.xlu0 %432, %v71
    %v434 = vpop.permute.xlu0 %433
    %437 = vset.pattern.permute.xlu0 0
    %438 = vperm.xlu0 %437, %v72
    %v439 = vpop.permute.xlu0 %438
    %442 = vset.pattern.permute.xlu0 0
    %443 = vperm.xlu0 %442, %v73
    %v444 = vpop.permute.xlu0 %443
    %447 = vset.pattern.permute.xlu0 0
    %448 = vperm.xlu0 %447, %v74
    %v449 = vpop.permute.xlu0 %448
    %452 = vset.pattern.permute.xlu0 0
    %453 = vperm.xlu0 %452, %v75
    %v454 = vpop.permute.xlu0 %453
    %457 = vset.pattern.permute.xlu0 0
    %458 = vperm.xlu0 %457, %v76
    %v459 = vpop.permute.xlu0 %458
    %462 = vset.pattern.permute.xlu0 0
    %463 = vperm.xlu0 %462, %v77
    %v464 = vpop.permute.xlu0 %463
    %467 = vset.pattern.permute.xlu0 0
    %468 = vperm.xlu0 %467, %v78
    %v469 = vpop.permute.xlu0 %468
    %472 = vset.pattern.permute.xlu0 0
    %473 = vperm.xlu0 %472, %v79
    %v474 = vpop.permute.xlu0 %473
    %477 = vset.pattern.permute.xlu0 0
    %478 = vperm.xlu0 %477, %v80
    %v479 = vpop.permute.xlu0 %478
    %482 = vset.pattern.permute.xlu0 0
    %483 = vperm.xlu0 %482, %v81
    %v484 = vpop.permute.xlu0 %483
    %v486 = vadd.f32 %v359, %v409
    %v487 = vadd.f32 %v362, %v414
    %v488 = vadd.f32 %v365, %v419
    %v489 = vadd.f32 %v368, %v424
    %v490 = vadd.f32 %v371, %v429
    %v491 = vadd.f32 %v374, %v434
    %v492 = vadd.f32 %v377, %v439
    %v493 = vadd.f32 %v380, %v444
    %v494 = vadd.f32 %v383, %v449
    %v495 = vadd.f32 %v386, %v454
    %v496 = vadd.f32 %v389, %v459
    %v497 = vadd.f32 %v392, %v464
    %v498 = vadd.f32 %v395, %v469
    %v499 = vadd.f32 %v398, %v474
    %v500 = vadd.f32 %v401, %v479
    %v501 = vadd.f32 %v404, %v484
    %v502 = vxor.u32 %v486, 2147483648
    %v503 = vxor.u32 %v487, 2147483648
    %v504 = vxor.u32 %v488, 2147483648
    %v505 = vxor.u32 %v489, 2147483648
    %v506 = vmul.f32 %v502, 1.442695
    %v507 = vpow.pop %v506
    %v508 = vmul.f32 %v503, 1.442695
    %v509 = vpow.pop %v508
    %v510 = vmul.f32 %v504, 1.442695
    %v511 = vpow.pop %v510
    %v512 = vmul.f32 %v505, 1.442695
    %v513 = vpow.pop %v512
    %v514 = vadd.f32 %v507, 1.0
    %v515 = vadd.f32 %v509, 1.0
    %v516 = vadd.f32 %v511, 1.0
    %v517 = vadd.f32 %v513, 1.0
    %v518 = vrcp.pop %v514
    %v519 = vmul.f32 %v514, %v518
    %v520 = vsub.f32 1.0, %v519
    %v521 = vmul.f32 %v518, %v520
    %v522 = vadd.f32 %v518, %v521
    %vm523 = vweird.f32 %v514
    %vm524 = vweird.f32 %v518
    %vm525 = vmor %vm523, %vm524
    %v526 = vsel %vm525, %v518, %v522
    %v527 = vand.u32 2147483647, %v514
    %vm528 = vcmp.eq.f32.partialorder %v527, 8.507059e+37
    %v529 = vand.u32 %v514, 2147483648
    %v530 = vor.u32 1.1754944e-38, %v529
    %v531 = vsel %vm528, %v530, %v526
    %v532 = vmul.f32 1.0, %v531
    %v533 = vrcp.pop %v515
    %v534 = vmul.f32 %v515, %v533
    %v535 = vsub.f32 1.0, %v534
    %v536 = vmul.f32 %v533, %v535
    %v537 = vadd.f32 %v533, %v536
    %vm538 = vweird.f32 %v515
    %vm539 = vweird.f32 %v533
    %vm540 = vmor %vm538, %vm539
    %v541 = vsel %vm540, %v533, %v537
    %v542 = vand.u32 2147483647, %v515
    %vm543 = vcmp.eq.f32.partialorder %v542, 8.507059e+37
    %v544 = vand.u32 %v515, 2147483648
    %v545 = vor.u32 1.1754944e-38, %v544
    %v546 = vsel %vm543, %v545, %v541
    %v547 = vmul.f32 1.0, %v546
    %v548 = vrcp.pop %v516
    %v549 = vmul.f32 %v516, %v548
    %v550 = vsub.f32 1.0, %v549
    %v551 = vmul.f32 %v548, %v550
    %v552 = vadd.f32 %v548, %v551
    %vm553 = vweird.f32 %v516
    %vm554 = vweird.f32 %v548
    %vm555 = vmor %vm553, %vm554
    %v556 = vsel %vm555, %v548, %v552
    %v557 = vand.u32 2147483647, %v516
    %vm558 = vcmp.eq.f32.partialorder %v557, 8.507059e+37
    %v559 = vand.u32 %v516, 2147483648
    %v560 = vor.u32 1.1754944e-38, %v559
    %v561 = vsel %vm558, %v560, %v556
    %v562 = vmul.f32 1.0, %v561
    %v563 = vrcp.pop %v517
    %v564 = vmul.f32 %v517, %v563
    %v565 = vsub.f32 1.0, %v564
    %v566 = vmul.f32 %v563, %v565
    %v567 = vadd.f32 %v563, %v566
    %vm568 = vweird.f32 %v517
    %vm569 = vweird.f32 %v563
    %vm570 = vmor %vm568, %vm569
    %v571 = vsel %vm570, %v563, %v567
    %v572 = vand.u32 2147483647, %v517
    %vm573 = vcmp.eq.f32.partialorder %v572, 8.507059e+37
    %v574 = vand.u32 %v517, 2147483648
    %v575 = vor.u32 1.1754944e-38, %v574
    %v576 = vsel %vm573, %v575, %v571
    %v577 = vmul.f32 1.0, %v576
    %v578 = vxor.u32 %v490, 2147483648
    %v579 = vxor.u32 %v491, 2147483648
    %v580 = vxor.u32 %v492, 2147483648
    %v581 = vxor.u32 %v493, 2147483648
    %v582 = vmul.f32 %v578, 1.442695
    %v583 = vpow.pop %v582
    %v584 = vmul.f32 %v579, 1.442695
    %v585 = vpow.pop %v584
    %v586 = vmul.f32 %v580, 1.442695
    %v587 = vpow.pop %v586
    %v588 = vmul.f32 %v581, 1.442695
    %v589 = vpow.pop %v588
    %v590 = vadd.f32 %v583, 1.0
    %v591 = vadd.f32 %v585, 1.0
    %v592 = vadd.f32 %v587, 1.0
    %v593 = vadd.f32 %v589, 1.0
    %v594 = vrcp.pop %v590
    %v595 = vmul.f32 %v590, %v594
    %v596 = vsub.f32 1.0, %v595
    %v597 = vmul.f32 %v594, %v596
    %v598 = vadd.f32 %v594, %v597
    %vm599 = vweird.f32 %v590
    %vm600 = vweird.f32 %v594
    %vm601 = vmor %vm599, %vm600
    %v602 = vsel %vm601, %v594, %v598
    %v603 = vand.u32 2147483647, %v590
    %vm604 = vcmp.eq.f32.partialorder %v603, 8.507059e+37
    %v605 = vand.u32 %v590, 2147483648
    %v606 = vor.u32 1.1754944e-38, %v605
    %v607 = vsel %vm604, %v606, %v602
    %v608 = vmul.f32 1.0, %v607
    %v609 = vrcp.pop %v591
    %v610 = vmul.f32 %v591, %v609
    %v611 = vsub.f32 1.0, %v610
    %v612 = vmul.f32 %v609, %v611
    %v613 = vadd.f32 %v609, %v612
    %vm614 = vweird.f32 %v591
    %vm615 = vweird.f32 %v609
    %vm616 = vmor %vm614, %vm615
    %v617 = vsel %vm616, %v609, %v613
    %v618 = vand.u32 2147483647, %v591
    %vm619 = vcmp.eq.f32.partialorder %v618, 8.507059e+37
    %v620 = vand.u32 %v591, 2147483648
    %v621 = vor.u32 1.1754944e-38, %v620
    %v622 = vsel %vm619, %v621, %v617
    %v623 = vmul.f32 1.0, %v622
    %v624 = vrcp.pop %v592
    %v625 = vmul.f32 %v592, %v624
    %v626 = vsub.f32 1.0, %v625
    %v627 = vmul.f32 %v624, %v626
    %v628 = vadd.f32 %v624, %v627
    %vm629 = vweird.f32 %v592
    %vm630 = vweird.f32 %v624
    %vm631 = vmor %vm629, %vm630
    %v632 = vsel %vm631, %v624, %v628
    %v633 = vand.u32 2147483647, %v592
    %vm634 = vcmp.eq.f32.partialorder %v633, 8.507059e+37
    %v635 = vand.u32 %v592, 2147483648
    %v636 = vor.u32 1.1754944e-38, %v635
    %v637 = vsel %vm634, %v636, %v632
    %v638 = vmul.f32 1.0, %v637
    %v639 = vrcp.pop %v593
    %v640 = vmul.f32 %v593, %v639
    %v641 = vsub.f32 1.0, %v640
    %v642 = vmul.f32 %v639, %v641
    %v643 = vadd.f32 %v639, %v642
    %vm644 = vweird.f32 %v593
    %vm645 = vweird.f32 %v639
    %vm646 = vmor %vm644, %vm645
    %v647 = vsel %vm646, %v639, %v643
    %v648 = vand.u32 2147483647, %v593
    %vm649 = vcmp.eq.f32.partialorder %v648, 8.507059e+37
    %v650 = vand.u32 %v593, 2147483648
    %v651 = vor.u32 1.1754944e-38, %v650
    %v652 = vsel %vm649, %v651, %v647
    %v653 = vmul.f32 1.0, %v652
    %v654 = vtanh.pop %v494
    %v655 = vtanh.pop %v495
    %v656 = vtanh.pop %v496
    %v657 = vtanh.pop %v497
    %v658 = vxor.u32 %v498, 2147483648
    %v659 = vxor.u32 %v499, 2147483648
    %v660 = vxor.u32 %v500, 2147483648
    %v661 = vxor.u32 %v501, 2147483648
    %v662 = vmul.f32 %v658, 1.442695
    %v663 = vpow.pop %v662
    %v664 = vmul.f32 %v659, 1.442695
    %v665 = vpow.pop %v664
    %v666 = vmul.f32 %v660, 1.442695
    %v667 = vpow.pop %v666
    %v668 = vmul.f32 %v661, 1.442695
    %v669 = vpow.pop %v668
    %v670 = vadd.f32 %v663, 1.0
    %v671 = vadd.f32 %v665, 1.0
    %v672 = vadd.f32 %v667, 1.0
    %v673 = vadd.f32 %v669, 1.0
    %v674 = vrcp.pop %v670
    %v675 = vmul.f32 %v670, %v674
    %v676 = vsub.f32 1.0, %v675
    %v677 = vmul.f32 %v674, %v676
    %v678 = vadd.f32 %v674, %v677
    %vm679 = vweird.f32 %v670
    %vm680 = vweird.f32 %v674
    %vm681 = vmor %vm679, %vm680
    %v682 = vsel %vm681, %v674, %v678
    %v683 = vand.u32 2147483647, %v670
    %vm684 = vcmp.eq.f32.partialorder %v683, 8.507059e+37
    %v685 = vand.u32 %v670, 2147483648
    %v686 = vor.u32 1.1754944e-38, %v685
    %v687 = vsel %vm684, %v686, %v682
    %v688 = vmul.f32 1.0, %v687
    %v689 = vrcp.pop %v671
    %v690 = vmul.f32 %v671, %v689
    %v691 = vsub.f32 1.0, %v690
    %v692 = vmul.f32 %v689, %v691
    %v693 = vadd.f32 %v689, %v692
    %vm694 = vweird.f32 %v671
    %vm695 = vweird.f32 %v689
    %vm696 = vmor %vm694, %vm695
    %v697 = vsel %vm696, %v689, %v693
    %v698 = vand.u32 2147483647, %v671
    %vm699 = vcmp.eq.f32.partialorder %v698, 8.507059e+37
    %v700 = vand.u32 %v671, 2147483648
    %v701 = vor.u32 1.1754944e-38, %v700
    %v702 = vsel %vm699, %v701, %v697
    %v703 = vmul.f32 1.0, %v702
    %v704 = vrcp.pop %v672
    %v705 = vmul.f32 %v672, %v704
    %v706 = vsub.f32 1.0, %v705
    %v707 = vmul.f32 %v704, %v706
    %v708 = vadd.f32 %v704, %v707
    %vm709 = vweird.f32 %v672
    %vm710 = vweird.f32 %v704
    %vm711 = vmor %vm709, %vm710
    %v712 = vsel %vm711, %v704, %v708
    %v713 = vand.u32 2147483647, %v672
    %vm714 = vcmp.eq.f32.partialorder %v713, 8.507059e+37
    %v715 = vand.u32 %v672, 2147483648
    %v716 = vor.u32 1.1754944e-38, %v715
    %v717 = vsel %vm714, %v716, %v712
    %v718 = vmul.f32 1.0, %v717
    %v719 = vrcp.pop %v673
    %v720 = vmul.f32 %v673, %v719
    %v721 = vsub.f32 1.0, %v720
    %v722 = vmul.f32 %v719, %v721
    %v723 = vadd.f32 %v719, %v722
    %vm724 = vweird.f32 %v673
    %vm725 = vweird.f32 %v719
    %vm726 = vmor %vm724, %vm725
    %v727 = vsel %vm726, %v719, %v723
    %v728 = vand.u32 2147483647, %v673
    %vm729 = vcmp.eq.f32.partialorder %v728, 8.507059e+37
    %v730 = vand.u32 %v673, 2147483648
    %v731 = vor.u32 1.1754944e-38, %v730
    %v732 = vsel %vm729, %v731, %v727
    %v733 = vmul.f32 1.0, %v732
    %v734 = vmul.f32 %v608, 0.0
    %v735 = vmul.f32 %v623, 0.0
    %v736 = vmul.f32 %v638, 0.0
    %v737 = vmul.f32 %v653, 0.0
    %v738 = vmul.f32 %v532, %v654
    %v739 = vmul.f32 %v547, %v655
    %v740 = vmul.f32 %v562, %v656
    %v741 = vmul.f32 %v577, %v657
    %v742 = vadd.f32 %v734, %v738
    %v743 = vadd.f32 %v735, %v739
    %v744 = vadd.f32 %v736, %v740
    %v745 = vadd.f32 %v737, %v741
    %v746 = vtanh.pop %v742
    %v747 = vtanh.pop %v743
    %v748 = vtanh.pop %v744
    %v749 = vtanh.pop %v745
    %v750 = vmul.f32 %v688, %v746
    %v751 = vmul.f32 %v703, %v747
    %v752 = vmul.f32 %v718, %v748
    %v753 = vmul.f32 %v733, %v749
    %vm754 = vcmp.gt.s32.totalorder %v82, 0
    %v755 = vsel %vm754, 1, 0
    %v756 = vperm.slane %v755, 0
    %vm757 = vcmp.eq.s32.totalorder %v756, 1
    %v758 = vsel %vm757, %v750, 0.0
    %v759 = vsel %vm757, %v751, 0.0
    %v760 = vsel %vm757, %v752, 0.0
    %v761 = vsel %vm757, %v753, 0.0
    %v762 = vsel %vm757, %v742, 0.0
    %v763 = vsel %vm757, %v743, 0.0
    %v764 = vsel %vm757, %v744, 0.0
    %v765 = vsel %vm757, %v745, 0.0
    %s766 = scalar_lea.vmem %s0, 1
    %v767 = vld [vmem:[%s766] sm:$0x1]
    %v768 = vperm.slane %v767, 0
    %vm769 = vcmp.eq.s32.totalorder %v84, %v768
    %vm770 = vcmp.eq.s32.totalorder %v85, %v768
    %vm771 = vcmp.eq.s32.totalorder %v86, %v768
    %vm772 = vcmp.eq.s32.totalorder %v87, %v768
    %vm773 = vcmp.eq.s32.totalorder %v88, %v768
    %vm774 = vcmp.eq.s32.totalorder %v89, %v768
    %vm775 = vcmp.eq.s32.totalorder %v90, %v768
    %vm776 = vcmp.eq.s32.totalorder %v91, %v768
    %vm777 = vcmp.eq.s32.totalorder %v92, %v768
    %vm778 = vcmp.eq.s32.totalorder %v93, %v768
    %vm779 = vcmp.eq.s32.totalorder %v94, %v768
    %vm780 = vcmp.eq.s32.totalorder %v95, %v768
    %vm781 = vcmp.eq.s32.totalorder %v96, %v768
    %vm782 = vcmp.eq.s32.totalorder %v97, %v768
    %vm783 = vcmp.eq.s32.totalorder %v98, %v768
    %vm784 = vcmp.eq.s32.totalorder %v99, %v768
    %v785 = vsel %vm769, 1, 0
    %v786 = vsel %vm770, 1, 0
    %v787 = vsel %vm771, 1, 0
    %v788 = vsel %vm772, 1, 0
    %v789 = vsel %vm773, 1, 0
    %v790 = vsel %vm774, 1, 0
    %v791 = vsel %vm775, 1, 0
    %v792 = vsel %vm776, 1, 0
    %v793 = vsel %vm777, 1, 0
    %v794 = vsel %vm778, 1, 0
    %v795 = vsel %vm779, 1, 0
    %v796 = vsel %vm780, 1, 0
    %v797 = vsel %vm781, 1, 0
    %v798 = vsel %vm782, 1, 0
    %v799 = vsel %vm783, 1, 0
    %v800 = vsel %vm784, 1, 0
    %v801 = vcvt.s32.f32 %v785
    %v802 = vcvt.s32.f32 %v786
    %v803 = vcvt.s32.f32 %v787
    %v804 = vcvt.s32.f32 %v788
    %v805 = vcvt.s32.f32 %v789
    %v806 = vcvt.s32.f32 %v790
    %v807 = vcvt.s32.f32 %v791
    %v808 = vcvt.s32.f32 %v792
    %v809 = vcvt.s32.f32 %v793
    %v810 = vcvt.s32.f32 %v794
    %v811 = vcvt.s32.f32 %v795
    %v812 = vcvt.s32.f32 %v796
    %v813 = vcvt.s32.f32 %v797
    %v814 = vcvt.s32.f32 %v798
    %v815 = vcvt.s32.f32 %v799
    %v816 = vcvt.s32.f32 %v800
    %817 = vmatpush.msra.mxu0 %v816
    %818 = vmatpush.msra.mxu0 %v815
    %819 = vmatpush.msra.mxu0 %v814
    %820 = vmatpush.msra.mxu0 %v813
    %821 = vmatpush.msra.mxu0 %v812
    %822 = vmatpush.msra.mxu0 %v811
    %823 = vmatpush.msra.mxu0 %v810
    %824 = vmatpush.msra.mxu0 %v809
    %825 = vmatpush.msra.mxu0 %v808
    %826 = vmatpush.msra.mxu0 %v807
    %827 = vmatpush.msra.mxu0 %v806
    %828 = vmatpush.msra.mxu0 %v805
    %829 = vmatpush.msra.mxu0 %v804
    %830 = vmatpush.msra.mxu0 %v803
    %831 = vmatpush.msra.mxu0 %v802
    %832 = vmatpush.msra.mxu0 %v801
    %833 = vmatmul.f32.gmra.mxu0 %v30
    %v834 = vpop.f32.mrf.mxu0
    %v835 = vadd.f32 0.0, %v834
    %836 = vmatmul.f32.gmra.mxu0 %v31
    %v837 = vpop.f32.mrf.mxu0
    %v838 = vadd.f32 0.0, %v837
    %839 = vmatmul.f32.gmra.mxu0 %v32
    %v840 = vpop.f32.mrf.mxu0
    %v841 = vadd.f32 0.0, %v840
    %842 = vmatmul.f32.gmra.mxu0 %v33
    %v843 = vpop.f32.mrf.mxu0
    %v844 = vadd.f32 0.0, %v843
    %845 = vdwg.mxu0
    %846 = vmatpush.msra.mxu0 0.0
    %847 = vmatpush.msra.mxu0 0.0
    %848 = vmatpush.msra.mxu0 0.0
    %849 = vmatpush.msra.mxu0 0.0
    %850 = vmatpush.msra.mxu0 0.0
    %851 = vmatpush.msra.mxu0 0.0
    %852 = vmatpush.msra.mxu0 0.0
    %853 = vmatpush.msra.mxu0 0.0
    %854 = vmatpush.msra.mxu0 0.0
    %855 = vmatpush.msra.mxu0 0.0
    %856 = vmatpush.msra.mxu0 0.0
    %857 = vmatpush.msra.mxu0 0.0
    %858 = vmatpush.msra.mxu0 %v761
    %859 = vmatpush.msra.mxu0 %v760
    %860 = vmatpush.msra.mxu0 %v759
    %861 = vmatpush.msra.mxu0 %v758
    %862 = vmatmul.f32.gmra.mxu0 %v181
    %v863 = vpop.f32.mrf.mxu0
    %v864 = vadd.f32 0.0, %v863
    %865 = vmatmul.f32.gmra.mxu0 %v184
    %v866 = vpop.f32.mrf.mxu0
    %v867 = vadd.f32 0.0, %v866
    %868 = vmatmul.f32.gmra.mxu0 %v187
    %v869 = vpop.f32.mrf.mxu0
    %v870 = vadd.f32 0.0, %v869
    %871 = vmatmul.f32.gmra.mxu0 %v190
    %v872 = vpop.f32.mrf.mxu0
    %v873 = vadd.f32 0.0, %v872
    %874 = vmatmul.f32.gmra.mxu0 %v193
    %v875 = vpop.f32.mrf.mxu0
    %v876 = vadd.f32 0.0, %v875
    %877 = vmatmul.f32.gmra.mxu0 %v196
    %v878 = vpop.f32.mrf.mxu0
    %v879 = vadd.f32 0.0, %v878
    %880 = vmatmul.f32.gmra.mxu0 %v199
    %v881 = vpop.f32.mrf.mxu0
    %v882 = vadd.f32 0.0, %v881
    %883 = vmatmul.f32.gmra.mxu0 %v202
    %v884 = vpop.f32.mrf.mxu0
    %v885 = vadd.f32 0.0, %v884
    %886 = vmatmul.f32.gmra.mxu0 %v205
    %v887 = vpop.f32.mrf.mxu0
    %v888 = vadd.f32 0.0, %v887
    %889 = vmatmul.f32.gmra.mxu0 %v208
    %v890 = vpop.f32.mrf.mxu0
    %v891 = vadd.f32 0.0, %v890
    %892 = vmatmul.f32.gmra.mxu0 %v211
    %v893 = vpop.f32.mrf.mxu0
    %v894 = vadd.f32 0.0, %v893
    %895 = vmatmul.f32.gmra.mxu0 %v214
    %v896 = vpop.f32.mrf.mxu0
    %v897 = vadd.f32 0.0, %v896
    %898 = vmatmul.f32.gmra.mxu0 %v217
    %v899 = vpop.f32.mrf.mxu0
    %v900 = vadd.f32 0.0, %v899
    %901 = vmatmul.f32.gmra.mxu0 %v220
    %v902 = vpop.f32.mrf.mxu0
    %v903 = vadd.f32 0.0, %v902
    %904 = vmatmul.f32.gmra.mxu0 %v223
    %v905 = vpop.f32.mrf.mxu0
    %v906 = vadd.f32 0.0, %v905
    %907 = vmatmul.f32.gmra.mxu0 %v226
    %v908 = vpop.f32.mrf.mxu0
    %v909 = vadd.f32 0.0, %v908
    %910 = vdwg.mxu0
    %911 = vmatpush.msra.mxu0 0.0
    %912 = vmatpush.msra.mxu0 0.0
    %913 = vmatpush.msra.mxu0 0.0
    %914 = vmatpush.msra.mxu0 0.0
    %915 = vmatpush.msra.mxu0 0.0
    %916 = vmatpush.msra.mxu0 0.0
    %917 = vmatpush.msra.mxu0 0.0
    %918 = vmatpush.msra.mxu0 0.0
    %919 = vmatpush.msra.mxu0 0.0
    %920 = vmatpush.msra.mxu0 0.0
    %921 = vmatpush.msra.mxu0 0.0
    %922 = vmatpush.msra.mxu0 0.0
    %923 = vmatpush.msra.mxu0 %v844
    %924 = vmatpush.msra.mxu0 %v841
    %925 = vmatpush.msra.mxu0 %v838
    %926 = vmatpush.msra.mxu0 %v835
    %927 = vmatmul.f32.gmra.mxu0 %v294
    %v928 = vpop.f32.mrf.mxu0
    %v929 = vadd.f32 %v864, %v928
    %930 = vmatmul.f32.gmra.mxu0 %v297
    %v931 = vpop.f32.mrf.mxu0
    %v932 = vadd.f32 %v867, %v931
    %933 = vmatmul.f32.gmra.mxu0 %v300
    %v934 = vpop.f32.mrf.mxu0
    %v935 = vadd.f32 %v870, %v934
    %936 = vmatmul.f32.gmra.mxu0 %v303
    %v937 = vpop.f32.mrf.mxu0
    %v938 = vadd.f32 %v873, %v937
    %939 = vmatmul.f32.gmra.mxu0 %v306
    %v940 = vpop.f32.mrf.mxu0
    %v941 = vadd.f32 %v876, %v940
    %942 = vmatmul.f32.gmra.mxu0 %v309
    %v943 = vpop.f32.mrf.mxu0
    %v944 = vadd.f32 %v879, %v943
    %945 = vmatmul.f32.gmra.mxu0 %v312
    %v946 = vpop.f32.mrf.mxu0
    %v947 = vadd.f32 %v882, %v946
    %948 = vmatmul.f32.gmra.mxu0 %v315
    %v949 = vpop.f32.mrf.mxu0
    %v950 = vadd.f32 %v885, %v949
    %951 = vmatmul.f32.gmra.mxu0 %v318
    %v952 = vpop.f32.mrf.mxu0
    %v953 = vadd.f32 %v888, %v952
    %954 = vmatmul.f32.gmra.mxu0 %v321
    %v955 = vpop.f32.mrf.mxu0
    %v956 = vadd.f32 %v891, %v955
    %957 = vmatmul.f32.gmra.mxu0 %v324
    %v958 = vpop.f32.mrf.mxu0
    %v959 = vadd.f32 %v894, %v958
    %960 = vmatmul.f32.gmra.mxu0 %v327
    %v961 = vpop.f32.mrf.mxu0
    %v962 = vadd.f32 %v897, %v961
    %963 = vmatmul.f32.gmra.mxu0 %v330
    %v964 = vpop.f32.mrf.mxu0
    %v965 = vadd.f32 %v900, %v964
    %966 = vmatmul.f32.gmra.mxu0 %v333
    %v967 = vpop.f32.mrf.mxu0
    %v968 = vadd.f32 %v903, %v967
    %969 = vmatmul.f32.gmra.mxu0 %v336
    %v970 = vpop.f32.mrf.mxu0
    %v971 = vadd.f32 %v906, %v970
    %972 = vmatmul.f32.gmra.mxu0 %v339
    %v973 = vpop.f32.mrf.mxu0
    %v974 = vadd.f32 %v909, %v973
    %975 = vdwg.mxu0
    %v976 = vadd.f32 %v929, %v409
    %v977 = vadd.f32 %v932, %v414
    %v978 = vadd.f32 %v935, %v419
    %v979 = vadd.f32 %v938, %v424
    %v980 = vadd.f32 %v941, %v429
    %v981 = vadd.f32 %v944, %v434
    %v982 = vadd.f32 %v947, %v439
    %v983 = vadd.f32 %v950, %v444
    %v984 = vadd.f32 %v953, %v449
    %v985 = vadd.f32 %v956, %v454
    %v986 = vadd.f32 %v959, %v459
    %v987 = vadd.f32 %v962, %v464
    %v988 = vadd.f32 %v965, %v469
    %v989 = vadd.f32 %v968, %v474
    %v990 = vadd.f32 %v971, %v479
    %v991 = vadd.f32 %v974, %v484
    %v992 = vxor.u32 %v976, 2147483648
    %v993 = vxor.u32 %v977, 2147483648
    %v994 = vxor.u32 %v978, 2147483648
    %v995 = vxor.u32 %v979, 2147483648
    %v996 = vmul.f32 %v992, 1.442695
    %v997 = vpow.pop %v996
    %v998 = vmul.f32 %v993, 1.442695
    %v999 = vpow.pop %v998
    %v1000 = vmul.f32 %v994, 1.442695
    %v1001 = vpow.pop %v1000
    %v1002 = vmul.f32 %v995, 1.442695
    %v1003 = vpow.pop %v1002
    %v1004 = vadd.f32 %v997, 1.0
    %v1005 = vadd.f32 %v999, 1.0
    %v1006 = vadd.f32 %v1001, 1.0
    %v1007 = vadd.f32 %v1003, 1.0
    %v1008 = vrcp.pop %v1004
    %v1009 = vmul.f32 %v1004, %v1008
    %v1010 = vsub.f32 1.0, %v1009
    %v1011 = vmul.f32 %v1008, %v1010
    %v1012 = vadd.f32 %v1008, %v1011
    %vm1013 = vweird.f32 %v1004
    %vm1014 = vweird.f32 %v1008
    %vm1015 = vmor %vm1013, %vm1014
    %v1016 = vsel %vm1015, %v1008, %v1012
    %v1017 = vand.u32 2147483647, %v1004
    %vm1018 = vcmp.eq.f32.partialorder %v1017, 8.507059e+37
    %v1019 = vand.u32 %v1004, 2147483648
    %v1020 = vor.u32 1.1754944e-38, %v1019
    %v1021 = vsel %vm1018, %v1020, %v1016
    %v1022 = vmul.f32 1.0, %v1021
    %v1023 = vrcp.pop %v1005
    %v1024 = vmul.f32 %v1005, %v1023
    %v1025 = vsub.f32 1.0, %v1024
    %v1026 = vmul.f32 %v1023, %v1025
    %v1027 = vadd.f32 %v1023, %v1026
    %vm1028 = vweird.f32 %v1005
    %vm1029 = vweird.f32 %v1023
    %vm1030 = vmor %vm1028, %vm1029
    %v1031 = vsel %vm1030, %v1023, %v1027
    %v1032 = vand.u32 2147483647, %v1005
    %vm1033 = vcmp.eq.f32.partialorder %v1032, 8.507059e+37
    %v1034 = vand.u32 %v1005, 2147483648
    %v1035 = vor.u32 1.1754944e-38, %v1034
    %v1036 = vsel %vm1033, %v1035, %v1031
    %v1037 = vmul.f32 1.0, %v1036
    %v1038 = vrcp.pop %v1006
    %v1039 = vmul.f32 %v1006, %v1038
    %v1040 = vsub.f32 1.0, %v1039
    %v1041 = vmul.f32 %v1038, %v1040
    %v1042 = vadd.f32 %v1038, %v1041
    %vm1043 = vweird.f32 %v1006
    %vm1044 = vweird.f32 %v1038
    %vm1045 = vmor %vm1043, %vm1044
    %v1046 = vsel %vm1045, %v1038, %v1042
    %v1047 = vand.u32 2147483647, %v1006
    %vm1048 = vcmp.eq.f32.partialorder %v1047, 8.507059e+37
    %v1049 = vand.u32 %v1006, 2147483648
    %v1050 = vor.u32 1.1754944e-38, %v1049
    %v1051 = vsel %vm1048, %v1050, %v1046
    %v1052 = vmul.f32 1.0, %v1051
    %v1053 = vrcp.pop %v1007
    %v1054 = vmul.f32 %v1007, %v1053
    %v1055 = vsub.f32 1.0, %v1054
    %v1056 = vmul.f32 %v1053, %v1055
    %v1057 = vadd.f32 %v1053, %v1056
    %vm1058 = vweird.f32 %v1007
    %vm1059 = vweird.f32 %v1053
    %vm1060 = vmor %vm1058, %vm1059
    %v1061 = vsel %vm1060, %v1053, %v1057
    %v1062 = vand.u32 2147483647, %v1007
    %vm1063 = vcmp.eq.f32.partialorder %v1062, 8.507059e+37
    %v1064 = vand.u32 %v1007, 2147483648
    %v1065 = vor.u32 1.1754944e-38, %v1064
    %v1066 = vsel %vm1063, %v1065, %v1061
    %v1067 = vmul.f32 1.0, %v1066
    %v1068 = vxor.u32 %v980, 2147483648
    %v1069 = vxor.u32 %v981, 2147483648
    %v1070 = vxor.u32 %v982, 2147483648
    %v1071 = vxor.u32 %v983, 2147483648
    %v1072 = vmul.f32 %v1068, 1.442695
    %v1073 = vpow.pop %v1072
    %v1074 = vmul.f32 %v1069, 1.442695
    %v1075 = vpow.pop %v1074
    %v1076 = vmul.f32 %v1070, 1.442695
    %v1077 = vpow.pop %v1076
    %v1078 = vmul.f32 %v1071, 1.442695
    %v1079 = vpow.pop %v1078
    %v1080 = vadd.f32 %v1073, 1.0
    %v1081 = vadd.f32 %v1075, 1.0
    %v1082 = vadd.f32 %v1077, 1.0
    %v1083 = vadd.f32 %v1079, 1.0
    %v1084 = vrcp.pop %v1080
    %v1085 = vmul.f32 %v1080, %v1084
    %v1086 = vsub.f32 1.0, %v1085
    %v1087 = vmul.f32 %v1084, %v1086
    %v1088 = vadd.f32 %v1084, %v1087
    %vm1089 = vweird.f32 %v1080
    %vm1090 = vweird.f32 %v1084
    %vm1091 = vmor %vm1089, %vm1090
    %v1092 = vsel %vm1091, %v1084, %v1088
    %v1093 = vand.u32 2147483647, %v1080
    %vm1094 = vcmp.eq.f32.partialorder %v1093, 8.507059e+37
    %v1095 = vand.u32 %v1080, 2147483648
    %v1096 = vor.u32 1.1754944e-38, %v1095
    %v1097 = vsel %vm1094, %v1096, %v1092
    %v1098 = vmul.f32 1.0, %v1097
    %v1099 = vrcp.pop %v1081
    %v1100 = vmul.f32 %v1081, %v1099
    %v1101 = vsub.f32 1.0, %v1100
    %v1102 = vmul.f32 %v1099, %v1101
    %v1103 = vadd.f32 %v1099, %v1102
    %vm1104 = vweird.f32 %v1081
    %vm1105 = vweird.f32 %v1099
    %vm1106 = vmor %vm1104, %vm1105
    %v1107 = vsel %vm1106, %v1099, %v1103
    %v1108 = vand.u32 2147483647, %v1081
    %vm1109 = vcmp.eq.f32.partialorder %v1108, 8.507059e+37
    %v1110 = vand.u32 %v1081, 2147483648
    %v1111 = vor.u32 1.1754944e-38, %v1110
    %v1112 = vsel %vm1109, %v1111, %v1107
    %v1113 = vmul.f32 1.0, %v1112
    %v1114 = vrcp.pop %v1082
    %v1115 = vmul.f32 %v1082, %v1114
    %v1116 = vsub.f32 1.0, %v1115
    %v1117 = vmul.f32 %v1114, %v1116
    %v1118 = vadd.f32 %v1114, %v1117
    %vm1119 = vweird.f32 %v1082
    %vm1120 = vweird.f32 %v1114
    %vm1121 = vmor %vm1119, %vm1120
    %v1122 = vsel %vm1121, %v1114, %v1118
    %v1123 = vand.u32 2147483647, %v1082
    %vm1124 = vcmp.eq.f32.partialorder %v1123, 8.507059e+37
    %v1125 = vand.u32 %v1082, 2147483648
    %v1126 = vor.u32 1.1754944e-38, %v1125
    %v1127 = vsel %vm1124, %v1126, %v1122
    %v1128 = vmul.f32 1.0, %v1127
    %v1129 = vrcp.pop %v1083
    %v1130 = vmul.f32 %v1083, %v1129
    %v1131 = vsub.f32 1.0, %v1130
    %v1132 = vmul.f32 %v1129, %v1131
    %v1133 = vadd.f32 %v1129, %v1132
    %vm1134 = vweird.f32 %v1083
    %vm1135 = vweird.f32 %v1129
    %vm1136 = vmor %vm1134, %vm1135
    %v1137 = vsel %vm1136, %v1129, %v1133
    %v1138 = vand.u32 2147483647, %v1083
    %vm1139 = vcmp.eq.f32.partialorder %v1138, 8.507059e+37
    %v1140 = vand.u32 %v1083, 2147483648
    %v1141 = vor.u32 1.1754944e-38, %v1140
    %v1142 = vsel %vm1139, %v1141, %v1137
    %v1143 = vmul.f32 1.0, %v1142
    %v1144 = vtanh.pop %v984
    %v1145 = vtanh.pop %v985
    %v1146 = vtanh.pop %v986
    %v1147 = vtanh.pop %v987
    %v1148 = vxor.u32 %v988, 2147483648
    %v1149 = vxor.u32 %v989, 2147483648
    %v1150 = vxor.u32 %v990, 2147483648
    %v1151 = vxor.u32 %v991, 2147483648
    %v1152 = vmul.f32 %v1148, 1.442695
    %v1153 = vpow.pop %v1152
    %v1154 = vmul.f32 %v1149, 1.442695
    %v1155 = vpow.pop %v1154
    %v1156 = vmul.f32 %v1150, 1.442695
    %v1157 = vpow.pop %v1156
    %v1158 = vmul.f32 %v1151, 1.442695
    %v1159 = vpow.pop %v1158
    %v1160 = vadd.f32 %v1153, 1.0
    %v1161 = vadd.f32 %v1155, 1.0
    %v1162 = vadd.f32 %v1157, 1.0
    %v1163 = vadd.f32 %v1159, 1.0
    %v1164 = vrcp.pop %v1160
    %v1165 = vmul.f32 %v1160, %v1164
    %v1166 = vsub.f32 1.0, %v1165
    %v1167 = vmul.f32 %v1164, %v1166
    %v1168 = vadd.f32 %v1164, %v1167
    %vm1169 = vweird.f32 %v1160
    %vm1170 = vweird.f32 %v1164
    %vm1171 = vmor %vm1169, %vm1170
    %v1172 = vsel %vm1171, %v1164, %v1168
    %v1173 = vand.u32 2147483647, %v1160
    %vm1174 = vcmp.eq.f32.partialorder %v1173, 8.507059e+37
    %v1175 = vand.u32 %v1160, 2147483648
    %v1176 = vor.u32 1.1754944e-38, %v1175
    %v1177 = vsel %vm1174, %v1176, %v1172
    %v1178 = vmul.f32 1.0, %v1177
    %v1179 = vrcp.pop %v1161
    %v1180 = vmul.f32 %v1161, %v1179
    %v1181 = vsub.f32 1.0, %v1180
    %v1182 = vmul.f32 %v1179, %v1181
    %v1183 = vadd.f32 %v1179, %v1182
    %vm1184 = vweird.f32 %v1161
    %vm1185 = vweird.f32 %v1179
    %vm1186 = vmor %vm1184, %vm1185
    %v1187 = vsel %vm1186, %v1179, %v1183
    %v1188 = vand.u32 2147483647, %v1161
    %vm1189 = vcmp.eq.f32.partialorder %v1188, 8.507059e+37
    %v1190 = vand.u32 %v1161, 2147483648
    %v1191 = vor.u32 1.1754944e-38, %v1190
    %v1192 = vsel %vm1189, %v1191, %v1187
    %v1193 = vmul.f32 1.0, %v1192
    %v1194 = vrcp.pop %v1162
    %v1195 = vmul.f32 %v1162, %v1194
    %v1196 = vsub.f32 1.0, %v1195
    %v1197 = vmul.f32 %v1194, %v1196
    %v1198 = vadd.f32 %v1194, %v1197
    %vm1199 = vweird.f32 %v1162
    %vm1200 = vweird.f32 %v1194
    %vm1201 = vmor %vm1199, %vm1200
    %v1202 = vsel %vm1201, %v1194, %v1198
    %v1203 = vand.u32 2147483647, %v1162
    %vm1204 = vcmp.eq.f32.partialorder %v1203, 8.507059e+37
    %v1205 = vand.u32 %v1162, 2147483648
    %v1206 = vor.u32 1.1754944e-38, %v1205
    %v1207 = vsel %vm1204, %v1206, %v1202
    %v1208 = vmul.f32 1.0, %v1207
    %v1209 = vrcp.pop %v1163
    %v1210 = vmul.f32 %v1163, %v1209
    %v1211 = vsub.f32 1.0, %v1210
    %v1212 = vmul.f32 %v1209, %v1211
    %v1213 = vadd.f32 %v1209, %v1212
    %vm1214 = vweird.f32 %v1163
    %vm1215 = vweird.f32 %v1209
    %vm1216 = vmor %vm1214, %vm1215
    %v1217 = vsel %vm1216, %v1209, %v1213
    %v1218 = vand.u32 2147483647, %v1163
    %vm1219 = vcmp.eq.f32.partialorder %v1218, 8.507059e+37
    %v1220 = vand.u32 %v1163, 2147483648
    %v1221 = vor.u32 1.1754944e-38, %v1220
    %v1222 = vsel %vm1219, %v1221, %v1217
    %v1223 = vmul.f32 1.0, %v1222
    %v1224 = vmul.f32 %v1098, %v762
    %v1225 = vmul.f32 %v1113, %v763
    %v1226 = vmul.f32 %v1128, %v764
    %v1227 = vmul.f32 %v1143, %v765
    %v1228 = vmul.f32 %v1022, %v1144
    %v1229 = vmul.f32 %v1037, %v1145
    %v1230 = vmul.f32 %v1052, %v1146
    %v1231 = vmul.f32 %v1067, %v1147
    %v1232 = vadd.f32 %v1224, %v1228
    %v1233 = vadd.f32 %v1225, %v1229
    %v1234 = vadd.f32 %v1226, %v1230
    %v1235 = vadd.f32 %v1227, %v1231
    %v1236 = vtanh.pop %v1232
    %v1237 = vtanh.pop %v1233
    %v1238 = vtanh.pop %v1234
    %v1239 = vtanh.pop %v1235
    %v1240 = vmul.f32 %v1178, %v1236
    %v1241 = vmul.f32 %v1193, %v1237
    %v1242 = vmul.f32 %v1208, %v1238
    %v1243 = vmul.f32 %v1223, %v1239
    %vm1244 = vcmp.gt.s32.totalorder %v82, 1
    %v1245 = vsel %vm1244, 1, 0
    %v1246 = vperm.slane %v1245, 0
    %vm1247 = vcmp.eq.s32.totalorder %v1246, 1
    %v1248 = vsel %vm1247, %v1240, %v758
    %v1249 = vsel %vm1247, %v1241, %v759
    %v1250 = vsel %vm1247, %v1242, %v760
    %v1251 = vsel %vm1247, %v1243, %v761
    %v1252 = vsel %vm1247, %v1232, %v762
    %v1253 = vsel %vm1247, %v1233, %v763
    %v1254 = vsel %vm1247, %v1234, %v764
    %v1255 = vsel %vm1247, %v1235, %v765
    %s1256 = scalar_lea.vmem %s0, 2
    %v1257 = vld [vmem:[%s1256] sm:$0x1]
    %v1258 = vperm.slane %v1257, 0
    %vm1259 = vcmp.eq.s32.totalorder %v84, %v1258
    %vm1260 = vcmp.eq.s32.totalorder %v85, %v1258
    %vm1261 = vcmp.eq.s32.totalorder %v86, %v1258
    %vm1262 = vcmp.eq.s32.totalorder %v87, %v1258
    %vm1263 = vcmp.eq.s32.totalorder %v88, %v1258
    %vm1264 = vcmp.eq.s32.totalorder %v89, %v1258
    %vm1265 = vcmp.eq.s32.totalorder %v90, %v1258
    %vm1266 = vcmp.eq.s32.totalorder %v91, %v1258
    %vm1267 = vcmp.eq.s32.totalorder %v92, %v1258
    %vm1268 = vcmp.eq.s32.totalorder %v93, %v1258
    %vm1269 = vcmp.eq.s32.totalorder %v94, %v1258
    %vm1270 = vcmp.eq.s32.totalorder %v95, %v1258
    %vm1271 = vcmp.eq.s32.totalorder %v96, %v1258
    %vm1272 = vcmp.eq.s32.totalorder %v97, %v1258
    %vm1273 = vcmp.eq.s32.totalorder %v98, %v1258
    %vm1274 = vcmp.eq.s32.totalorder %v99, %v1258
    %v1275 = vsel %vm1259, 1, 0
    %v1276 = vsel %vm1260, 1, 0
    %v1277 = vsel %vm1261, 1, 0
    %v1278 = vsel %vm1262, 1, 0
    %v1279 = vsel %vm1263, 1, 0
    %v1280 = vsel %vm1264, 1, 0
    %v1281 = vsel %vm1265, 1, 0
    %v1282 = vsel %vm1266, 1, 0
    %v1283 = vsel %vm1267, 1, 0
    %v1284 = vsel %vm1268, 1, 0
    %v1285 = vsel %vm1269, 1, 0
    %v1286 = vsel %vm1270, 1, 0
    %v1287 = vsel %vm1271, 1, 0
    %v1288 = vsel %vm1272, 1, 0
    %v1289 = vsel %vm1273, 1, 0
    %v1290 = vsel %vm1274, 1, 0
    %v1291 = vcvt.s32.f32 %v1275
    %v1292 = vcvt.s32.f32 %v1276
    %v1293 = vcvt.s32.f32 %v1277
    %v1294 = vcvt.s32.f32 %v1278
    %v1295 = vcvt.s32.f32 %v1279
    %v1296 = vcvt.s32.f32 %v1280
    %v1297 = vcvt.s32.f32 %v1281
    %v1298 = vcvt.s32.f32 %v1282
    %v1299 = vcvt.s32.f32 %v1283
    %v1300 = vcvt.s32.f32 %v1284
    %v1301 = vcvt.s32.f32 %v1285
    %v1302 = vcvt.s32.f32 %v1286
    %v1303 = vcvt.s32.f32 %v1287
    %v1304 = vcvt.s32.f32 %v1288
    %v1305 = vcvt.s32.f32 %v1289
    %v1306 = vcvt.s32.f32 %v1290
    %1307 = vmatpush.msra.mxu0 %v1306
    %1308 = vmatpush.msra.mxu0 %v1305
    %1309 = vmatpush.msra.mxu0 %v1304
    %1310 = vmatpush.msra.mxu0 %v1303
    %1311 = vmatpush.msra.mxu0 %v1302
    %1312 = vmatpush.msra.mxu0 %v1301
    %1313 = vmatpush.msra.mxu0 %v1300
    %1314 = vmatpush.msra.mxu0 %v1299
    %1315 = vmatpush.msra.mxu0 %v1298
    %1316 = vmatpush.msra.mxu0 %v1297
    %1317 = vmatpush.msra.mxu0 %v1296
    %1318 = vmatpush.msra.mxu0 %v1295
    %1319 = vmatpush.msra.mxu0 %v1294
    %1320 = vmatpush.msra.mxu0 %v1293
    %1321 = vmatpush.msra.mxu0 %v1292
    %1322 = vmatpush.msra.mxu0 %v1291
    %1323 = vmatmul.f32.gmra.mxu0 %v30
    %v1324 = vpop.f32.mrf.mxu0
    %v1325 = vadd.f32 0.0, %v1324
    %1326 = vmatmul.f32.gmra.mxu0 %v31
    %v1327 = vpop.f32.mrf.mxu0
    %v1328 = vadd.f32 0.0, %v1327
    %1329 = vmatmul.f32.gmra.mxu0 %v32
    %v1330 = vpop.f32.mrf.mxu0
    %v1331 = vadd.f32 0.0, %v1330
    %1332 = vmatmul.f32.gmra.mxu0 %v33
    %v1333 = vpop.f32.mrf.mxu0
    %v1334 = vadd.f32 0.0, %v1333
    %1335 = vdwg.mxu0
    %1336 = vmatpush.msra.mxu0 0.0
    %1337 = vmatpush.msra.mxu0 0.0
    %1338 = vmatpush.msra.mxu0 0.0
    %1339 = vmatpush.msra.mxu0 0.0
    %1340 = vmatpush.msra.mxu0 0.0
    %1341 = vmatpush.msra.mxu0 0.0
    %1342 = vmatpush.msra.mxu0 0.0
    %1343 = vmatpush.msra.mxu0 0.0
    %1344 = vmatpush.msra.mxu0 0.0
    %1345 = vmatpush.msra.mxu0 0.0
    %1346 = vmatpush.msra.mxu0 0.0
    %1347 = vmatpush.msra.mxu0 0.0
    %1348 = vmatpush.msra.mxu0 %v1251
    %1349 = vmatpush.msra.mxu0 %v1250
    %1350 = vmatpush.msra.mxu0 %v1249
    %1351 = vmatpush.msra.mxu0 %v1248
    %1352 = vmatmul.f32.gmra.mxu0 %v181
    %v1353 = vpop.f32.mrf.mxu0
    %v1354 = vadd.f32 0.0, %v1353
    %1355 = vmatmul.f32.gmra.mxu0 %v184
    %v1356 = vpop.f32.mrf.mxu0
    %v1357 = vadd.f32 0.0, %v1356
    %1358 = vmatmul.f32.gmra.mxu0 %v187
    %v1359 = vpop.f32.mrf.mxu0
    %v1360 = vadd.f32 0.0, %v1359
    %1361 = vmatmul.f32.gmra.mxu0 %v190
    %v1362 = vpop.f32.mrf.mxu0
    %v1363 = vadd.f32 0.0, %v1362
    %1364 = vmatmul.f32.gmra.mxu0 %v193
    %v1365 = vpop.f32.mrf.mxu0
    %v1366 = vadd.f32 0.0, %v1365
    %1367 = vmatmul.f32.gmra.mxu0 %v196
    %v1368 = vpop.f32.mrf.mxu0
    %v1369 = vadd.f32 0.0, %v1368
    %1370 = vmatmul.f32.gmra.mxu0 %v199
    %v1371 = vpop.f32.mrf.mxu0
    %v1372 = vadd.f32 0.0, %v1371
    %1373 = vmatmul.f32.gmra.mxu0 %v202
    %v1374 = vpop.f32.mrf.mxu0
    %v1375 = vadd.f32 0.0, %v1374
    %1376 = vmatmul.f32.gmra.mxu0 %v205
    %v1377 = vpop.f32.mrf.mxu0
    %v1378 = vadd.f32 0.0, %v1377
    %1379 = vmatmul.f32.gmra.mxu0 %v208
    %v1380 = vpop.f32.mrf.mxu0
    %v1381 = vadd.f32 0.0, %v1380
    %1382 = vmatmul.f32.gmra.mxu0 %v211
    %v1383 = vpop.f32.mrf.mxu0
    %v1384 = vadd.f32 0.0, %v1383
    %1385 = vmatmul.f32.gmra.mxu0 %v214
    %v1386 = vpop.f32.mrf.mxu0
    %v1387 = vadd.f32 0.0, %v1386
    %1388 = vmatmul.f32.gmra.mxu0 %v217
    %v1389 = vpop.f32.mrf.mxu0
    %v1390 = vadd.f32 0.0, %v1389
    %1391 = vmatmul.f32.gmra.mxu0 %v220
    %v1392 = vpop.f32.mrf.mxu0
    %v1393 = vadd.f32 0.0, %v1392
    %1394 = vmatmul.f32.gmra.mxu0 %v223
    %v1395 = vpop.f32.mrf.mxu0
    %v1396 = vadd.f32 0.0, %v1395
    %1397 = vmatmul.f32.gmra.mxu0 %v226
    %v1398 = vpop.f32.mrf.mxu0
    %v1399 = vadd.f32 0.0, %v1398
    %1400 = vdwg.mxu0
    %1401 = vmatpush.msra.mxu0 0.0
    %1402 = vmatpush.msra.mxu0 0.0
    %1403 = vmatpush.msra.mxu0 0.0
    %1404 = vmatpush.msra.mxu0 0.0
    %1405 = vmatpush.msra.mxu0 0.0
    %1406 = vmatpush.msra.mxu0 0.0
    %1407 = vmatpush.msra.mxu0 0.0
    %1408 = vmatpush.msra.mxu0 0.0
    %1409 = vmatpush.msra.mxu0 0.0
    %1410 = vmatpush.msra.mxu0 0.0
    %1411 = vmatpush.msra.mxu0 0.0
    %1412 = vmatpush.msra.mxu0 0.0
    %1413 = vmatpush.msra.mxu0 %v1334
    %1414 = vmatpush.msra.mxu0 %v1331
    %1415 = vmatpush.msra.mxu0 %v1328
    %1416 = vmatpush.msra.mxu0 %v1325
    %1417 = vmatmul.f32.gmra.mxu0 %v294
    %v1418 = vpop.f32.mrf.mxu0
    %v1419 = vadd.f32 %v1354, %v1418
    %1420 = vmatmul.f32.gmra.mxu0 %v297
    %v1421 = vpop.f32.mrf.mxu0
    %v1422 = vadd.f32 %v1357, %v1421
    %1423 = vmatmul.f32.gmra.mxu0 %v300
    %v1424 = vpop.f32.mrf.mxu0
    %v1425 = vadd.f32 %v1360, %v1424
    %1426 = vmatmul.f32.gmra.mxu0 %v303
    %v1427 = vpop.f32.mrf.mxu0
    %v1428 = vadd.f32 %v1363, %v1427
    %1429 = vmatmul.f32.gmra.mxu0 %v306
    %v1430 = vpop.f32.mrf.mxu0
    %v1431 = vadd.f32 %v1366, %v1430
    %1432 = vmatmul.f32.gmra.mxu0 %v309
    %v1433 = vpop.f32.mrf.mxu0
    %v1434 = vadd.f32 %v1369, %v1433
    %1435 = vmatmul.f32.gmra.mxu0 %v312
    %v1436 = vpop.f32.mrf.mxu0
    %v1437 = vadd.f32 %v1372, %v1436
    %1438 = vmatmul.f32.gmra.mxu0 %v315
    %v1439 = vpop.f32.mrf.mxu0
    %v1440 = vadd.f32 %v1375, %v1439
    %1441 = vmatmul.f32.gmra.mxu0 %v318
    %v1442 = vpop.f32.mrf.mxu0
    %v1443 = vadd.f32 %v1378, %v1442
    %1444 = vmatmul.f32.gmra.mxu0 %v321
    %v1445 = vpop.f32.mrf.mxu0
    %v1446 = vadd.f32 %v1381, %v1445
    %1447 = vmatmul.f32.gmra.mxu0 %v324
    %v1448 = vpop.f32.mrf.mxu0
    %v1449 = vadd.f32 %v1384, %v1448
    %1450 = vmatmul.f32.gmra.mxu0 %v327
    %v1451 = vpop.f32.mrf.mxu0
    %v1452 = vadd.f32 %v1387, %v1451
    %1453 = vmatmul.f32.gmra.mxu0 %v330
    %v1454 = vpop.f32.mrf.mxu0
    %v1455 = vadd.f32 %v1390, %v1454
    %1456 = vmatmul.f32.gmra.mxu0 %v333
    %v1457 = vpop.f32.mrf.mxu0
    %v1458 = vadd.f32 %v1393, %v1457
    %1459 = vmatmul.f32.gmra.mxu0 %v336
    %v1460 = vpop.f32.mrf.mxu0
    %v1461 = vadd.f32 %v1396, %v1460
    %1462 = vmatmul.f32.gmra.mxu0 %v339
    %v1463 = vpop.f32.mrf.mxu0
    %v1464 = vadd.f32 %v1399, %v1463
    %1465 = vdwg.mxu0
    %v1466 = vadd.f32 %v1419, %v409
    %v1467 = vadd.f32 %v1422, %v414
    %v1468 = vadd.f32 %v1425, %v419
    %v1469 = vadd.f32 %v1428, %v424
    %v1470 = vadd.f32 %v1431, %v429
    %v1471 = vadd.f32 %v1434, %v434
    %v1472 = vadd.f32 %v1437, %v439
    %v1473 = vadd.f32 %v1440, %v444
    %v1474 = vadd.f32 %v1443, %v449
    %v1475 = vadd.f32 %v1446, %v454
    %v1476 = vadd.f32 %v1449, %v459
    %v1477 = vadd.f32 %v1452, %v464
    %v1478 = vadd.f32 %v1455, %v469
    %v1479 = vadd.f32 %v1458, %v474
    %v1480 = vadd.f32 %v1461, %v479
    %v1481 = vadd.f32 %v1464, %v484
    %v1482 = vxor.u32 %v1466, 2147483648
    %v1483 = vxor.u32 %v1467, 2147483648
    %v1484 = vxor.u32 %v1468, 2147483648
    %v1485 = vxor.u32 %v1469, 2147483648
    %v1486 = vmul.f32 %v1482, 1.442695
    %v1487 = vpow.pop %v1486
    %v1488 = vmul.f32 %v1483, 1.442695
    %v1489 = vpow.pop %v1488
    %v1490 = vmul.f32 %v1484, 1.442695
    %v1491 = vpow.pop %v1490
    %v1492 = vmul.f32 %v1485, 1.442695
    %v1493 = vpow.pop %v1492
    %v1494 = vadd.f32 %v1487, 1.0
    %v1495 = vadd.f32 %v1489, 1.0
    %v1496 = vadd.f32 %v1491, 1.0
    %v1497 = vadd.f32 %v1493, 1.0
    %v1498 = vrcp.pop %v1494
    %v1499 = vmul.f32 %v1494, %v1498
    %v1500 = vsub.f32 1.0, %v1499
    %v1501 = vmul.f32 %v1498, %v1500
    %v1502 = vadd.f32 %v1498, %v1501
    %vm1503 = vweird.f32 %v1494
    %vm1504 = vweird.f32 %v1498
    %vm1505 = vmor %vm1503, %vm1504
    %v1506 = vsel %vm1505, %v1498, %v1502
    %v1507 = vand.u32 2147483647, %v1494
    %vm1508 = vcmp.eq.f32.partialorder %v1507, 8.507059e+37
    %v1509 = vand.u32 %v1494, 2147483648
    %v1510 = vor.u32 1.1754944e-38, %v1509
    %v1511 = vsel %vm1508, %v1510, %v1506
    %v1512 = vmul.f32 1.0, %v1511
    %v1513 = vrcp.pop %v1495
    %v1514 = vmul.f32 %v1495, %v1513
    %v1515 = vsub.f32 1.0, %v1514
    %v1516 = vmul.f32 %v1513, %v1515
    %v1517 = vadd.f32 %v1513, %v1516
    %vm1518 = vweird.f32 %v1495
    %vm1519 = vweird.f32 %v1513
    %vm1520 = vmor %vm1518, %vm1519
    %v1521 = vsel %vm1520, %v1513, %v1517
    %v1522 = vand.u32 2147483647, %v1495
    %vm1523 = vcmp.eq.f32.partialorder %v1522, 8.507059e+37
    %v1524 = vand.u32 %v1495, 2147483648
    %v1525 = vor.u32 1.1754944e-38, %v1524
    %v1526 = vsel %vm1523, %v1525, %v1521
    %v1527 = vmul.f32 1.0, %v1526
    %v1528 = vrcp.pop %v1496
    %v1529 = vmul.f32 %v1496, %v1528
    %v1530 = vsub.f32 1.0, %v1529
    %v1531 = vmul.f32 %v1528, %v1530
    %v1532 = vadd.f32 %v1528, %v1531
    %vm1533 = vweird.f32 %v1496
    %vm1534 = vweird.f32 %v1528
    %vm1535 = vmor %vm1533, %vm1534
    %v1536 = vsel %vm1535, %v1528, %v1532
    %v1537 = vand.u32 2147483647, %v1496
    %vm1538 = vcmp.eq.f32.partialorder %v1537, 8.507059e+37
    %v1539 = vand.u32 %v1496, 2147483648
    %v1540 = vor.u32 1.1754944e-38, %v1539
    %v1541 = vsel %vm1538, %v1540, %v1536
    %v1542 = vmul.f32 1.0, %v1541
    %v1543 = vrcp.pop %v1497
    %v1544 = vmul.f32 %v1497, %v1543
    %v1545 = vsub.f32 1.0, %v1544
    %v1546 = vmul.f32 %v1543, %v1545
    %v1547 = vadd.f32 %v1543, %v1546
    %vm1548 = vweird.f32 %v1497
    %vm1549 = vweird.f32 %v1543
    %vm1550 = vmor %vm1548, %vm1549
    %v1551 = vsel %vm1550, %v1543, %v1547
    %v1552 = vand.u32 2147483647, %v1497
    %vm1553 = vcmp.eq.f32.partialorder %v1552, 8.507059e+37
    %v1554 = vand.u32 %v1497, 2147483648
    %v1555 = vor.u32 1.1754944e-38, %v1554
    %v1556 = vsel %vm1553, %v1555, %v1551
    %v1557 = vmul.f32 1.0, %v1556
    %v1558 = vxor.u32 %v1470, 2147483648
    %v1559 = vxor.u32 %v1471, 2147483648
    %v1560 = vxor.u32 %v1472, 2147483648
    %v1561 = vxor.u32 %v1473, 2147483648
    %v1562 = vmul.f32 %v1558, 1.442695
    %v1563 = vpow.pop %v1562
    %v1564 = vmul.f32 %v1559, 1.442695
    %v1565 = vpow.pop %v1564
    %v1566 = vmul.f32 %v1560, 1.442695
    %v1567 = vpow.pop %v1566
    %v1568 = vmul.f32 %v1561, 1.442695
    %v1569 = vpow.pop %v1568
    %v1570 = vadd.f32 %v1563, 1.0
    %v1571 = vadd.f32 %v1565, 1.0
    %v1572 = vadd.f32 %v1567, 1.0
    %v1573 = vadd.f32 %v1569, 1.0
    %v1574 = vrcp.pop %v1570
    %v1575 = vmul.f32 %v1570, %v1574
    %v1576 = vsub.f32 1.0, %v1575
    %v1577 = vmul.f32 %v1574, %v1576
    %v1578 = vadd.f32 %v1574, %v1577
    %vm1579 = vweird.f32 %v1570
    %vm1580 = vweird.f32 %v1574
    %vm1581 = vmor %vm1579, %vm1580
    %v1582 = vsel %vm1581, %v1574, %v1578
    %v1583 = vand.u32 2147483647, %v1570
    %vm1584 = vcmp.eq.f32.partialorder %v1583, 8.507059e+37
    %v1585 = vand.u32 %v1570, 2147483648
    %v1586 = vor.u32 1.1754944e-38, %v1585
    %v1587 = vsel %vm1584, %v1586, %v1582
    %v1588 = vmul.f32 1.0, %v1587
    %v1589 = vrcp.pop %v1571
    %v1590 = vmul.f32 %v1571, %v1589
    %v1591 = vsub.f32 1.0, %v1590
    %v1592 = vmul.f32 %v1589, %v1591
    %v1593 = vadd.f32 %v1589, %v1592
    %vm1594 = vweird.f32 %v1571
    %vm1595 = vweird.f32 %v1589
    %vm1596 = vmor %vm1594, %vm1595
    %v1597 = vsel %vm1596, %v1589, %v1593
    %v1598 = vand.u32 2147483647, %v1571
    %vm1599 = vcmp.eq.f32.partialorder %v1598, 8.507059e+37
    %v1600 = vand.u32 %v1571, 2147483648
    %v1601 = vor.u32 1.1754944e-38, %v1600
    %v1602 = vsel %vm1599, %v1601, %v1597
    %v1603 = vmul.f32 1.0, %v1602
    %v1604 = vrcp.pop %v1572
    %v1605 = vmul.f32 %v1572, %v1604
    %v1606 = vsub.f32 1.0, %v1605
    %v1607 = vmul.f32 %v1604, %v1606
    %v1608 = vadd.f32 %v1604, %v1607
    %vm1609 = vweird.f32 %v1572
    %vm1610 = vweird.f32 %v1604
    %vm1611 = vmor %vm1609, %vm1610
    %v1612 = vsel %vm1611, %v1604, %v1608
    %v1613 = vand.u32 2147483647, %v1572
    %vm1614 = vcmp.eq.f32.partialorder %v1613, 8.507059e+37
    %v1615 = vand.u32 %v1572, 2147483648
    %v1616 = vor.u32 1.1754944e-38, %v1615
    %v1617 = vsel %vm1614, %v1616, %v1612
    %v1618 = vmul.f32 1.0, %v1617
    %v1619 = vrcp.pop %v1573
    %v1620 = vmul.f32 %v1573, %v1619
    %v1621 = vsub.f32 1.0, %v1620
    %v1622 = vmul.f32 %v1619, %v1621
    %v1623 = vadd.f32 %v1619, %v1622
    %vm1624 = vweird.f32 %v1573
    %vm1625 = vweird.f32 %v1619
    %vm1626 = vmor %vm1624, %vm1625
    %v1627 = vsel %vm1626, %v1619, %v1623
    %v1628 = vand.u32 2147483647, %v1573
    %vm1629 = vcmp.eq.f32.partialorder %v1628, 8.507059e+37
    %v1630 = vand.u32 %v1573, 2147483648
    %v1631 = vor.u32 1.1754944e-38, %v1630
    %v1632 = vsel %vm1629, %v1631, %v1627
    %v1633 = vmul.f32 1.0, %v1632
    %v1634 = vtanh.pop %v1474
    %v1635 = vtanh.pop %v1475
    %v1636 = vtanh.pop %v1476
    %v1637 = vtanh.pop %v1477
    %v1638 = vxor.u32 %v1478, 2147483648
    %v1639 = vxor.u32 %v1479, 2147483648
    %v1640 = vxor.u32 %v1480, 2147483648
    %v1641 = vxor.u32 %v1481, 2147483648
    %v1642 = vmul.f32 %v1638, 1.442695
    %v1643 = vpow.pop %v1642
    %v1644 = vmul.f32 %v1639, 1.442695
    %v1645 = vpow.pop %v1644
    %v1646 = vmul.f32 %v1640, 1.442695
    %v1647 = vpow.pop %v1646
    %v1648 = vmul.f32 %v1641, 1.442695
    %v1649 = vpow.pop %v1648
    %v1650 = vadd.f32 %v1643, 1.0
    %v1651 = vadd.f32 %v1645, 1.0
    %v1652 = vadd.f32 %v1647, 1.0
    %v1653 = vadd.f32 %v1649, 1.0
    %v1654 = vrcp.pop %v1650
    %v1655 = vmul.f32 %v1650, %v1654
    %v1656 = vsub.f32 1.0, %v1655
    %v1657 = vmul.f32 %v1654, %v1656
    %v1658 = vadd.f32 %v1654, %v1657
    %vm1659 = vweird.f32 %v1650
    %vm1660 = vweird.f32 %v1654
    %vm1661 = vmor %vm1659, %vm1660
    %v1662 = vsel %vm1661, %v1654, %v1658
    %v1663 = vand.u32 2147483647, %v1650
    %vm1664 = vcmp.eq.f32.partialorder %v1663, 8.507059e+37
    %v1665 = vand.u32 %v1650, 2147483648
    %v1666 = vor.u32 1.1754944e-38, %v1665
    %v1667 = vsel %vm1664, %v1666, %v1662
    %v1668 = vmul.f32 1.0, %v1667
    %v1669 = vrcp.pop %v1651
    %v1670 = vmul.f32 %v1651, %v1669
    %v1671 = vsub.f32 1.0, %v1670
    %v1672 = vmul.f32 %v1669, %v1671
    %v1673 = vadd.f32 %v1669, %v1672
    %vm1674 = vweird.f32 %v1651
    %vm1675 = vweird.f32 %v1669
    %vm1676 = vmor %vm1674, %vm1675
    %v1677 = vsel %vm1676, %v1669, %v1673
    %v1678 = vand.u32 2147483647, %v1651
    %vm1679 = vcmp.eq.f32.partialorder %v1678, 8.507059e+37
    %v1680 = vand.u32 %v1651, 2147483648
    %v1681 = vor.u32 1.1754944e-38, %v1680
    %v1682 = vsel %vm1679, %v1681, %v1677
    %v1683 = vmul.f32 1.0, %v1682
    %v1684 = vrcp.pop %v1652
    %v1685 = vmul.f32 %v1652, %v1684
    %v1686 = vsub.f32 1.0, %v1685
    %v1687 = vmul.f32 %v1684, %v1686
    %v1688 = vadd.f32 %v1684, %v1687
    %vm1689 = vweird.f32 %v1652
    %vm1690 = vweird.f32 %v1684
    %vm1691 = vmor %vm1689, %vm1690
    %v1692 = vsel %vm1691, %v1684, %v1688
    %v1693 = vand.u32 2147483647, %v1652
    %vm1694 = vcmp.eq.f32.partialorder %v1693, 8.507059e+37
    %v1695 = vand.u32 %v1652, 2147483648
    %v1696 = vor.u32 1.1754944e-38, %v1695
    %v1697 = vsel %vm1694, %v1696, %v1692
    %v1698 = vmul.f32 1.0, %v1697
    %v1699 = vrcp.pop %v1653
    %v1700 = vmul.f32 %v1653, %v1699
    %v1701 = vsub.f32 1.0, %v1700
    %v1702 = vmul.f32 %v1699, %v1701
    %v1703 = vadd.f32 %v1699, %v1702
    %vm1704 = vweird.f32 %v1653
    %vm1705 = vweird.f32 %v1699
    %vm1706 = vmor %vm1704, %vm1705
    %v1707 = vsel %vm1706, %v1699, %v1703
    %v1708 = vand.u32 2147483647, %v1653
    %vm1709 = vcmp.eq.f32.partialorder %v1708, 8.507059e+37
    %v1710 = vand.u32 %v1653, 2147483648
    %v1711 = vor.u32 1.1754944e-38, %v1710
    %v1712 = vsel %vm1709, %v1711, %v1707
    %v1713 = vmul.f32 1.0, %v1712
    %v1714 = vmul.f32 %v1588, %v1252
    %v1715 = vmul.f32 %v1603, %v1253
    %v1716 = vmul.f32 %v1618, %v1254
    %v1717 = vmul.f32 %v1633, %v1255
    %v1718 = vmul.f32 %v1512, %v1634
    %v1719 = vmul.f32 %v1527, %v1635
    %v1720 = vmul.f32 %v1542, %v1636
    %v1721 = vmul.f32 %v1557, %v1637
    %v1722 = vadd.f32 %v1714, %v1718
    %v1723 = vadd.f32 %v1715, %v1719
    %v1724 = vadd.f32 %v1716, %v1720
    %v1725 = vadd.f32 %v1717, %v1721
    %v1726 = vtanh.pop %v1722
    %v1727 = vtanh.pop %v1723
    %v1728 = vtanh.pop %v1724
    %v1729 = vtanh.pop %v1725
    %v1730 = vmul.f32 %v1668, %v1726
    %v1731 = vmul.f32 %v1683, %v1727
    %v1732 = vmul.f32 %v1698, %v1728
    %v1733 = vmul.f32 %v1713, %v1729
    %vm1734 = vcmp.gt.s32.totalorder %v82, 2
    %v1735 = vsel %vm1734, 1, 0
    %v1736 = vperm.slane %v1735, 0
    %vm1737 = vcmp.eq.s32.totalorder %v1736, 1
    %v1738 = vsel %vm1737, %v1730, %v1248
    %v1739 = vsel %vm1737, %v1731, %v1249
    %v1740 = vsel %vm1737, %v1732, %v1250
    %v1741 = vsel %vm1737, %v1733, %v1251
    %v1742 = vsel %vm1737, %v1722, %v1252
    %v1743 = vsel %vm1737, %v1723, %v1253
    %v1744 = vsel %vm1737, %v1724, %v1254
    %v1745 = vsel %vm1737, %v1725, %v1255
    %s1746 = scalar_lea.vmem %s0, 3
    %v1747 = vld [vmem:[%s1746] sm:$0x1]
    %v1748 = vperm.slane %v1747, 0
    %vm1749 = vcmp.eq.s32.totalorder %v84, %v1748
    %vm1750 = vcmp.eq.s32.totalorder %v85, %v1748
    %vm1751 = vcmp.eq.s32.totalorder %v86, %v1748
    %vm1752 = vcmp.eq.s32.totalorder %v87, %v1748
    %vm1753 = vcmp.eq.s32.totalorder %v88, %v1748
    %vm1754 = vcmp.eq.s32.totalorder %v89, %v1748
    %vm1755 = vcmp.eq.s32.totalorder %v90, %v1748
    %vm1756 = vcmp.eq.s32.totalorder %v91, %v1748
    %vm1757 = vcmp.eq.s32.totalorder %v92, %v1748
    %vm1758 = vcmp.eq.s32.totalorder %v93, %v1748
    %vm1759 = vcmp.eq.s32.totalorder %v94, %v1748
    %vm1760 = vcmp.eq.s32.totalorder %v95, %v1748
    %vm1761 = vcmp.eq.s32.totalorder %v96, %v1748
    %vm1762 = vcmp.eq.s32.totalorder %v97, %v1748
    %vm1763 = vcmp.eq.s32.totalorder %v98, %v1748
    %vm1764 = vcmp.eq.s32.totalorder %v99, %v1748
    %v1765 = vsel %vm1749, 1, 0
    %v1766 = vsel %vm1750, 1, 0
    %v1767 = vsel %vm1751, 1, 0
    %v1768 = vsel %vm1752, 1, 0
    %v1769 = vsel %vm1753, 1, 0
    %v1770 = vsel %vm1754, 1, 0
    %v1771 = vsel %vm1755, 1, 0
    %v1772 = vsel %vm1756, 1, 0
    %v1773 = vsel %vm1757, 1, 0
    %v1774 = vsel %vm1758, 1, 0
    %v1775 = vsel %vm1759, 1, 0
    %v1776 = vsel %vm1760, 1, 0
    %v1777 = vsel %vm1761, 1, 0
    %v1778 = vsel %vm1762, 1, 0
    %v1779 = vsel %vm1763, 1, 0
    %v1780 = vsel %vm1764, 1, 0
    %v1781 = vcvt.s32.f32 %v1765
    %v1782 = vcvt.s32.f32 %v1766
    %v1783 = vcvt.s32.f32 %v1767
    %v1784 = vcvt.s32.f32 %v1768
    %v1785 = vcvt.s32.f32 %v1769
    %v1786 = vcvt.s32.f32 %v1770
    %v1787 = vcvt.s32.f32 %v1771
    %v1788 = vcvt.s32.f32 %v1772
    %v1789 = vcvt.s32.f32 %v1773
    %v1790 = vcvt.s32.f32 %v1774
    %v1791 = vcvt.s32.f32 %v1775
    %v1792 = vcvt.s32.f32 %v1776
    %v1793 = vcvt.s32.f32 %v1777
    %v1794 = vcvt.s32.f32 %v1778
    %v1795 = vcvt.s32.f32 %v1779
    %v1796 = vcvt.s32.f32 %v1780
    %1797 = vmatpush.msra.mxu0 %v1796
    %1798 = vmatpush.msra.mxu0 %v1795
    %1799 = vmatpush.msra.mxu0 %v1794
    %1800 = vmatpush.msra.mxu0 %v1793
    %1801 = vmatpush.msra.mxu0 %v1792
    %1802 = vmatpush.msra.mxu0 %v1791
    %1803 = vmatpush.msra.mxu0 %v1790
    %1804 = vmatpush.msra.mxu0 %v1789
    %1805 = vmatpush.msra.mxu0 %v1788
    %1806 = vmatpush.msra.mxu0 %v1787
    %1807 = vmatpush.msra.mxu0 %v1786
    %1808 = vmatpush.msra.mxu0 %v1785
    %1809 = vmatpush.msra.mxu0 %v1784
    %1810 = vmatpush.msra.mxu0 %v1783
    %1811 = vmatpush.msra.mxu0 %v1782
    %1812 = vmatpush.msra.mxu0 %v1781
    %1813 = vmatmul.f32.gmra.mxu0 %v30
    %v1814 = vpop.f32.mrf.mxu0
    %v1815 = vadd.f32 0.0, %v1814
    %1816 = vmatmul.f32.gmra.mxu0 %v31
    %v1817 = vpop.f32.mrf.mxu0
    %v1818 = vadd.f32 0.0, %v1817
    %1819 = vmatmul.f32.gmra.mxu0 %v32
    %v1820 = vpop.f32.mrf.mxu0
    %v1821 = vadd.f32 0.0, %v1820
    %1822 = vmatmul.f32.gmra.mxu0 %v33
    %v1823 = vpop.f32.mrf.mxu0
    %v1824 = vadd.f32 0.0, %v1823
    %1825 = vdwg.mxu0
    %1826 = vmatpush.msra.mxu0 0.0
    %1827 = vmatpush.msra.mxu0 0.0
    %1828 = vmatpush.msra.mxu0 0.0
    %1829 = vmatpush.msra.mxu0 0.0
    %1830 = vmatpush.msra.mxu0 0.0
    %1831 = vmatpush.msra.mxu0 0.0
    %1832 = vmatpush.msra.mxu0 0.0
    %1833 = vmatpush.msra.mxu0 0.0
    %1834 = vmatpush.msra.mxu0 0.0
    %1835 = vmatpush.msra.mxu0 0.0
    %1836 = vmatpush.msra.mxu0 0.0
    %1837 = vmatpush.msra.mxu0 0.0
    %1838 = vmatpush.msra.mxu0 %v1741
    %1839 = vmatpush.msra.mxu0 %v1740
    %1840 = vmatpush.msra.mxu0 %v1739
    %1841 = vmatpush.msra.mxu0 %v1738
    %1842 = vmatmul.f32.gmra.mxu0 %v181
    %v1843 = vpop.f32.mrf.mxu0
    %v1844 = vadd.f32 0.0, %v1843
    %1845 = vmatmul.f32.gmra.mxu0 %v184
    %v1846 = vpop.f32.mrf.mxu0
    %v1847 = vadd.f32 0.0, %v1846
    %1848 = vmatmul.f32.gmra.mxu0 %v187
    %v1849 = vpop.f32.mrf.mxu0
    %v1850 = vadd.f32 0.0, %v1849
    %1851 = vmatmul.f32.gmra.mxu0 %v190
    %v1852 = vpop.f32.mrf.mxu0
    %v1853 = vadd.f32 0.0, %v1852
    %1854 = vmatmul.f32.gmra.mxu0 %v193
    %v1855 = vpop.f32.mrf.mxu0
    %v1856 = vadd.f32 0.0, %v1855
    %1857 = vmatmul.f32.gmra.mxu0 %v196
    %v1858 = vpop.f32.mrf.mxu0
    %v1859 = vadd.f32 0.0, %v1858
    %1860 = vmatmul.f32.gmra.mxu0 %v199
    %v1861 = vpop.f32.mrf.mxu0
    %v1862 = vadd.f32 0.0, %v1861
    %1863 = vmatmul.f32.gmra.mxu0 %v202
    %v1864 = vpop.f32.mrf.mxu0
    %v1865 = vadd.f32 0.0, %v1864
    %1866 = vmatmul.f32.gmra.mxu0 %v205
    %v1867 = vpop.f32.mrf.mxu0
    %v1868 = vadd.f32 0.0, %v1867
    %1869 = vmatmul.f32.gmra.mxu0 %v208
    %v1870 = vpop.f32.mrf.mxu0
    %v1871 = vadd.f32 0.0, %v1870
    %1872 = vmatmul.f32.gmra.mxu0 %v211
    %v1873 = vpop.f32.mrf.mxu0
    %v1874 = vadd.f32 0.0, %v1873
    %1875 = vmatmul.f32.gmra.mxu0 %v214
    %v1876 = vpop.f32.mrf.mxu0
    %v1877 = vadd.f32 0.0, %v1876
    %1878 = vmatmul.f32.gmra.mxu0 %v217
    %v1879 = vpop.f32.mrf.mxu0
    %v1880 = vadd.f32 0.0, %v1879
    %1881 = vmatmul.f32.gmra.mxu0 %v220
    %v1882 = vpop.f32.mrf.mxu0
    %v1883 = vadd.f32 0.0, %v1882
    %1884 = vmatmul.f32.gmra.mxu0 %v223
    %v1885 = vpop.f32.mrf.mxu0
    %v1886 = vadd.f32 0.0, %v1885
    %1887 = vmatmul.f32.gmra.mxu0 %v226
    %v1888 = vpop.f32.mrf.mxu0
    %v1889 = vadd.f32 0.0, %v1888
    %1890 = vdwg.mxu0
    %1891 = vmatpush.msra.mxu0 0.0
    %1892 = vmatpush.msra.mxu0 0.0
    %1893 = vmatpush.msra.mxu0 0.0
    %1894 = vmatpush.msra.mxu0 0.0
    %1895 = vmatpush.msra.mxu0 0.0
    %1896 = vmatpush.msra.mxu0 0.0
    %1897 = vmatpush.msra.mxu0 0.0
    %1898 = vmatpush.msra.mxu0 0.0
    %1899 = vmatpush.msra.mxu0 0.0
    %1900 = vmatpush.msra.mxu0 0.0
    %1901 = vmatpush.msra.mxu0 0.0
    %1902 = vmatpush.msra.mxu0 0.0
    %1903 = vmatpush.msra.mxu0 %v1824
    %1904 = vmatpush.msra.mxu0 %v1821
    %1905 = vmatpush.msra.mxu0 %v1818
    %1906 = vmatpush.msra.mxu0 %v1815
    %1907 = vmatmul.f32.gmra.mxu0 %v294
    %v1908 = vpop.f32.mrf.mxu0
    %v1909 = vadd.f32 %v1844, %v1908
    %1910 = vmatmul.f32.gmra.mxu0 %v297
    %v1911 = vpop.f32.mrf.mxu0
    %v1912 = vadd.f32 %v1847, %v1911
    %1913 = vmatmul.f32.gmra.mxu0 %v300
    %v1914 = vpop.f32.mrf.mxu0
    %v1915 = vadd.f32 %v1850, %v1914
    %1916 = vmatmul.f32.gmra.mxu0 %v303
    %v1917 = vpop.f32.mrf.mxu0
    %v1918 = vadd.f32 %v1853, %v1917
    %1919 = vmatmul.f32.gmra.mxu0 %v306
    %v1920 = vpop.f32.mrf.mxu0
    %v1921 = vadd.f32 %v1856, %v1920
    %1922 = vmatmul.f32.gmra.mxu0 %v309
    %v1923 = vpop.f32.mrf.mxu0
    %v1924 = vadd.f32 %v1859, %v1923
    %1925 = vmatmul.f32.gmra.mxu0 %v312
    %v1926 = vpop.f32.mrf.mxu0
    %v1927 = vadd.f32 %v1862, %v1926
    %1928 = vmatmul.f32.gmra.mxu0 %v315
    %v1929 = vpop.f32.mrf.mxu0
    %v1930 = vadd.f32 %v1865, %v1929
    %1931 = vmatmul.f32.gmra.mxu0 %v318
    %v1932 = vpop.f32.mrf.mxu0
    %v1933 = vadd.f32 %v1868, %v1932
    %1934 = vmatmul.f32.gmra.mxu0 %v321
    %v1935 = vpop.f32.mrf.mxu0
    %v1936 = vadd.f32 %v1871, %v1935
    %1937 = vmatmul.f32.gmra.mxu0 %v324
    %v1938 = vpop.f32.mrf.mxu0
    %v1939 = vadd.f32 %v1874, %v1938
    %1940 = vmatmul.f32.gmra.mxu0 %v327
    %v1941 = vpop.f32.mrf.mxu0
    %v1942 = vadd.f32 %v1877, %v1941
    %1943 = vmatmul.f32.gmra.mxu0 %v330
    %v1944 = vpop.f32.mrf.mxu0
    %v1945 = vadd.f32 %v1880, %v1944
    %1946 = vmatmul.f32.gmra.mxu0 %v333
    %v1947 = vpop.f32.mrf.mxu0
    %v1948 = vadd.f32 %v1883, %v1947
    %1949 = vmatmul.f32.gmra.mxu0 %v336
    %v1950 = vpop.f32.mrf.mxu0
    %v1951 = vadd.f32 %v1886, %v1950
    %1952 = vmatmul.f32.gmra.mxu0 %v339
    %v1953 = vpop.f32.mrf.mxu0
    %v1954 = vadd.f32 %v1889, %v1953
    %1955 = vdwg.mxu0
    %v1956 = vadd.f32 %v1909, %v409
    %v1957 = vadd.f32 %v1912, %v414
    %v1958 = vadd.f32 %v1915, %v419
    %v1959 = vadd.f32 %v1918, %v424
    %v1960 = vadd.f32 %v1921, %v429
    %v1961 = vadd.f32 %v1924, %v434
    %v1962 = vadd.f32 %v1927, %v439
    %v1963 = vadd.f32 %v1930, %v444
    %v1964 = vadd.f32 %v1933, %v449
    %v1965 = vadd.f32 %v1936, %v454
    %v1966 = vadd.f32 %v1939, %v459
    %v1967 = vadd.f32 %v1942, %v464
    %v1968 = vadd.f32 %v1945, %v469
    %v1969 = vadd.f32 %v1948, %v474
    %v1970 = vadd.f32 %v1951, %v479
    %v1971 = vadd.f32 %v1954, %v484
    %v1972 = vxor.u32 %v1956, 2147483648
    %v1973 = vxor.u32 %v1957, 2147483648
    %v1974 = vxor.u32 %v1958, 2147483648
    %v1975 = vxor.u32 %v1959, 2147483648
    %v1976 = vmul.f32 %v1972, 1.442695
    %v1977 = vpow.pop %v1976
    %v1978 = vmul.f32 %v1973, 1.442695
    %v1979 = vpow.pop %v1978
    %v1980 = vmul.f32 %v1974, 1.442695
    %v1981 = vpow.pop %v1980
    %v1982 = vmul.f32 %v1975, 1.442695
    %v1983 = vpow.pop %v1982
    %v1984 = vadd.f32 %v1977, 1.0
    %v1985 = vadd.f32 %v1979, 1.0
    %v1986 = vadd.f32 %v1981, 1.0
    %v1987 = vadd.f32 %v1983, 1.0
    %v1988 = vrcp.pop %v1984
    %v1989 = vmul.f32 %v1984, %v1988
    %v1990 = vsub.f32 1.0, %v1989
    %v1991 = vmul.f32 %v1988, %v1990
    %v1992 = vadd.f32 %v1988, %v1991
    %vm1993 = vweird.f32 %v1984
    %vm1994 = vweird.f32 %v1988
    %vm1995 = vmor %vm1993, %vm1994
    %v1996 = vsel %vm1995, %v1988, %v1992
    %v1997 = vand.u32 2147483647, %v1984
    %vm1998 = vcmp.eq.f32.partialorder %v1997, 8.507059e+37
    %v1999 = vand.u32 %v1984, 2147483648
    %v2000 = vor.u32 1.1754944e-38, %v1999
    %v2001 = vsel %vm1998, %v2000, %v1996
    %v2002 = vmul.f32 1.0, %v2001
    %v2003 = vrcp.pop %v1985
    %v2004 = vmul.f32 %v1985, %v2003
    %v2005 = vsub.f32 1.0, %v2004
    %v2006 = vmul.f32 %v2003, %v2005
    %v2007 = vadd.f32 %v2003, %v2006
    %vm2008 = vweird.f32 %v1985
    %vm2009 = vweird.f32 %v2003
    %vm2010 = vmor %vm2008, %vm2009
    %v2011 = vsel %vm2010, %v2003, %v2007
    %v2012 = vand.u32 2147483647, %v1985
    %vm2013 = vcmp.eq.f32.partialorder %v2012, 8.507059e+37
    %v2014 = vand.u32 %v1985, 2147483648
    %v2015 = vor.u32 1.1754944e-38, %v2014
    %v2016 = vsel %vm2013, %v2015, %v2011
    %v2017 = vmul.f32 1.0, %v2016
    %v2018 = vrcp.pop %v1986
    %v2019 = vmul.f32 %v1986, %v2018
    %v2020 = vsub.f32 1.0, %v2019
    %v2021 = vmul.f32 %v2018, %v2020
    %v2022 = vadd.f32 %v2018, %v2021
    %vm2023 = vweird.f32 %v1986
    %vm2024 = vweird.f32 %v2018
    %vm2025 = vmor %vm2023, %vm2024
    %v2026 = vsel %vm2025, %v2018, %v2022
    %v2027 = vand.u32 2147483647, %v1986
    %vm2028 = vcmp.eq.f32.partialorder %v2027, 8.507059e+37
    %v2029 = vand.u32 %v1986, 2147483648
    %v2030 = vor.u32 1.1754944e-38, %v2029
    %v2031 = vsel %vm2028, %v2030, %v2026
    %v2032 = vmul.f32 1.0, %v2031
    %v2033 = vrcp.pop %v1987
    %v2034 = vmul.f32 %v1987, %v2033
    %v2035 = vsub.f32 1.0, %v2034
    %v2036 = vmul.f32 %v2033, %v2035
    %v2037 = vadd.f32 %v2033, %v2036
    %vm2038 = vweird.f32 %v1987
    %vm2039 = vweird.f32 %v2033
    %vm2040 = vmor %vm2038, %vm2039
    %v2041 = vsel %vm2040, %v2033, %v2037
    %v2042 = vand.u32 2147483647, %v1987
    %vm2043 = vcmp.eq.f32.partialorder %v2042, 8.507059e+37
    %v2044 = vand.u32 %v1987, 2147483648
    %v2045 = vor.u32 1.1754944e-38, %v2044
    %v2046 = vsel %vm2043, %v2045, %v2041
    %v2047 = vmul.f32 1.0, %v2046
    %v2048 = vxor.u32 %v1960, 2147483648
    %v2049 = vxor.u32 %v1961, 2147483648
    %v2050 = vxor.u32 %v1962, 2147483648
    %v2051 = vxor.u32 %v1963, 2147483648
    %v2052 = vmul.f32 %v2048, 1.442695
    %v2053 = vpow.pop %v2052
    %v2054 = vmul.f32 %v2049, 1.442695
    %v2055 = vpow.pop %v2054
    %v2056 = vmul.f32 %v2050, 1.442695
    %v2057 = vpow.pop %v2056
    %v2058 = vmul.f32 %v2051, 1.442695
    %v2059 = vpow.pop %v2058
    %v2060 = vadd.f32 %v2053, 1.0
    %v2061 = vadd.f32 %v2055, 1.0
    %v2062 = vadd.f32 %v2057, 1.0
    %v2063 = vadd.f32 %v2059, 1.0
    %v2064 = vrcp.pop %v2060
    %v2065 = vmul.f32 %v2060, %v2064
    %v2066 = vsub.f32 1.0, %v2065
    %v2067 = vmul.f32 %v2064, %v2066
    %v2068 = vadd.f32 %v2064, %v2067
    %vm2069 = vweird.f32 %v2060
    %vm2070 = vweird.f32 %v2064
    %vm2071 = vmor %vm2069, %vm2070
    %v2072 = vsel %vm2071, %v2064, %v2068
    %v2073 = vand.u32 2147483647, %v2060
    %vm2074 = vcmp.eq.f32.partialorder %v2073, 8.507059e+37
    %v2075 = vand.u32 %v2060, 2147483648
    %v2076 = vor.u32 1.1754944e-38, %v2075
    %v2077 = vsel %vm2074, %v2076, %v2072
    %v2078 = vmul.f32 1.0, %v2077
    %v2079 = vrcp.pop %v2061
    %v2080 = vmul.f32 %v2061, %v2079
    %v2081 = vsub.f32 1.0, %v2080
    %v2082 = vmul.f32 %v2079, %v2081
    %v2083 = vadd.f32 %v2079, %v2082
    %vm2084 = vweird.f32 %v2061
    %vm2085 = vweird.f32 %v2079
    %vm2086 = vmor %vm2084, %vm2085
    %v2087 = vsel %vm2086, %v2079, %v2083
    %v2088 = vand.u32 2147483647, %v2061
    %vm2089 = vcmp.eq.f32.partialorder %v2088, 8.507059e+37
    %v2090 = vand.u32 %v2061, 2147483648
    %v2091 = vor.u32 1.1754944e-38, %v2090
    %v2092 = vsel %vm2089, %v2091, %v2087
    %v2093 = vmul.f32 1.0, %v2092
    %v2094 = vrcp.pop %v2062
    %v2095 = vmul.f32 %v2062, %v2094
    %v2096 = vsub.f32 1.0, %v2095
    %v2097 = vmul.f32 %v2094, %v2096
    %v2098 = vadd.f32 %v2094, %v2097
    %vm2099 = vweird.f32 %v2062
    %vm2100 = vweird.f32 %v2094
    %vm2101 = vmor %vm2099, %vm2100
    %v2102 = vsel %vm2101, %v2094, %v2098
    %v2103 = vand.u32 2147483647, %v2062
    %vm2104 = vcmp.eq.f32.partialorder %v2103, 8.507059e+37
    %v2105 = vand.u32 %v2062, 2147483648
    %v2106 = vor.u32 1.1754944e-38, %v2105
    %v2107 = vsel %vm2104, %v2106, %v2102
    %v2108 = vmul.f32 1.0, %v2107
    %v2109 = vrcp.pop %v2063
    %v2110 = vmul.f32 %v2063, %v2109
    %v2111 = vsub.f32 1.0, %v2110
    %v2112 = vmul.f32 %v2109, %v2111
    %v2113 = vadd.f32 %v2109, %v2112
    %vm2114 = vweird.f32 %v2063
    %vm2115 = vweird.f32 %v2109
    %vm2116 = vmor %vm2114, %vm2115
    %v2117 = vsel %vm2116, %v2109, %v2113
    %v2118 = vand.u32 2147483647, %v2063
    %vm2119 = vcmp.eq.f32.partialorder %v2118, 8.507059e+37
    %v2120 = vand.u32 %v2063, 2147483648
    %v2121 = vor.u32 1.1754944e-38, %v2120
    %v2122 = vsel %vm2119, %v2121, %v2117
    %v2123 = vmul.f32 1.0, %v2122
    %v2124 = vtanh.pop %v1964
    %v2125 = vtanh.pop %v1965
    %v2126 = vtanh.pop %v1966
    %v2127 = vtanh.pop %v1967
    %v2128 = vxor.u32 %v1968, 2147483648
    %v2129 = vxor.u32 %v1969, 2147483648
    %v2130 = vxor.u32 %v1970, 2147483648
    %v2131 = vxor.u32 %v1971, 2147483648
    %v2132 = vmul.f32 %v2128, 1.442695
    %v2133 = vpow.pop %v2132
    %v2134 = vmul.f32 %v2129, 1.442695
    %v2135 = vpow.pop %v2134
    %v2136 = vmul.f32 %v2130, 1.442695
    %v2137 = vpow.pop %v2136
    %v2138 = vmul.f32 %v2131, 1.442695
    %v2139 = vpow.pop %v2138
    %v2140 = vadd.f32 %v2133, 1.0
    %v2141 = vadd.f32 %v2135, 1.0
    %v2142 = vadd.f32 %v2137, 1.0
    %v2143 = vadd.f32 %v2139, 1.0
    %v2144 = vrcp.pop %v2140
    %v2145 = vmul.f32 %v2140, %v2144
    %v2146 = vsub.f32 1.0, %v2145
    %v2147 = vmul.f32 %v2144, %v2146
    %v2148 = vadd.f32 %v2144, %v2147
    %vm2149 = vweird.f32 %v2140
    %vm2150 = vweird.f32 %v2144
    %vm2151 = vmor %vm2149, %vm2150
    %v2152 = vsel %vm2151, %v2144, %v2148
    %v2153 = vand.u32 2147483647, %v2140
    %vm2154 = vcmp.eq.f32.partialorder %v2153, 8.507059e+37
    %v2155 = vand.u32 %v2140, 2147483648
    %v2156 = vor.u32 1.1754944e-38, %v2155
    %v2157 = vsel %vm2154, %v2156, %v2152
    %v2158 = vmul.f32 1.0, %v2157
    %v2159 = vrcp.pop %v2141
    %v2160 = vmul.f32 %v2141, %v2159
    %v2161 = vsub.f32 1.0, %v2160
    %v2162 = vmul.f32 %v2159, %v2161
    %v2163 = vadd.f32 %v2159, %v2162
    %vm2164 = vweird.f32 %v2141
    %vm2165 = vweird.f32 %v2159
    %vm2166 = vmor %vm2164, %vm2165
    %v2167 = vsel %vm2166, %v2159, %v2163
    %v2168 = vand.u32 2147483647, %v2141
    %vm2169 = vcmp.eq.f32.partialorder %v2168, 8.507059e+37
    %v2170 = vand.u32 %v2141, 2147483648
    %v2171 = vor.u32 1.1754944e-38, %v2170
    %v2172 = vsel %vm2169, %v2171, %v2167
    %v2173 = vmul.f32 1.0, %v2172
    %v2174 = vrcp.pop %v2142
    %v2175 = vmul.f32 %v2142, %v2174
    %v2176 = vsub.f32 1.0, %v2175
    %v2177 = vmul.f32 %v2174, %v2176
    %v2178 = vadd.f32 %v2174, %v2177
    %vm2179 = vweird.f32 %v2142
    %vm2180 = vweird.f32 %v2174
    %vm2181 = vmor %vm2179, %vm2180
    %v2182 = vsel %vm2181, %v2174, %v2178
    %v2183 = vand.u32 2147483647, %v2142
    %vm2184 = vcmp.eq.f32.partialorder %v2183, 8.507059e+37
    %v2185 = vand.u32 %v2142, 2147483648
    %v2186 = vor.u32 1.1754944e-38, %v2185
    %v2187 = vsel %vm2184, %v2186, %v2182
    %v2188 = vmul.f32 1.0, %v2187
    %v2189 = vrcp.pop %v2143
    %v2190 = vmul.f32 %v2143, %v2189
    %v2191 = vsub.f32 1.0, %v2190
    %v2192 = vmul.f32 %v2189, %v2191
    %v2193 = vadd.f32 %v2189, %v2192
    %vm2194 = vweird.f32 %v2143
    %vm2195 = vweird.f32 %v2189
    %vm2196 = vmor %vm2194, %vm2195
    %v2197 = vsel %vm2196, %v2189, %v2193
    %v2198 = vand.u32 2147483647, %v2143
    %vm2199 = vcmp.eq.f32.partialorder %v2198, 8.507059e+37
    %v2200 = vand.u32 %v2143, 2147483648
    %v2201 = vor.u32 1.1754944e-38, %v2200
    %v2202 = vsel %vm2199, %v2201, %v2197
    %v2203 = vmul.f32 1.0, %v2202
    %v2204 = vmul.f32 %v2078, %v1742
    %v2205 = vmul.f32 %v2093, %v1743
    %v2206 = vmul.f32 %v2108, %v1744
    %v2207 = vmul.f32 %v2123, %v1745
    %v2208 = vmul.f32 %v2002, %v2124
    %v2209 = vmul.f32 %v2017, %v2125
    %v2210 = vmul.f32 %v2032, %v2126
    %v2211 = vmul.f32 %v2047, %v2127
    %v2212 = vadd.f32 %v2204, %v2208
    %v2213 = vadd.f32 %v2205, %v2209
    %v2214 = vadd.f32 %v2206, %v2210
    %v2215 = vadd.f32 %v2207, %v2211
    %v2216 = vtanh.pop %v2212
    %v2217 = vtanh.pop %v2213
    %v2218 = vtanh.pop %v2214
    %v2219 = vtanh.pop %v2215
    %v2220 = vmul.f32 %v2158, %v2216
    %v2221 = vmul.f32 %v2173, %v2217
    %v2222 = vmul.f32 %v2188, %v2218
    %v2223 = vmul.f32 %v2203, %v2219
    %vm2224 = vcmp.gt.s32.totalorder %v82, 3
    %v2225 = vsel %vm2224, 1, 0
    %v2226 = vperm.slane %v2225, 0
    %vm2227 = vcmp.eq.s32.totalorder %v2226, 1
    %v2228 = vsel %vm2227, %v2220, %v1738
    %v2229 = vsel %vm2227, %v2221, %v1739
    %v2230 = vsel %vm2227, %v2222, %v1740
    %v2231 = vsel %vm2227, %v2223, %v1741
    %v2232 = vsel %vm2227, %v2212, %v1742
    %v2233 = vsel %vm2227, %v2213, %v1743
    %v2234 = vsel %vm2227, %v2214, %v1744
    %v2235 = vsel %vm2227, %v2215, %v1745
    %s2236 = scalar_lea.vmem %s0, 4
    %v2237 = vld [vmem:[%s2236] sm:$0x1]
    %v2238 = vperm.slane %v2237, 0
    %vm2239 = vcmp.eq.s32.totalorder %v84, %v2238
    %vm2240 = vcmp.eq.s32.totalorder %v85, %v2238
    %vm2241 = vcmp.eq.s32.totalorder %v86, %v2238
    %vm2242 = vcmp.eq.s32.totalorder %v87, %v2238
    %vm2243 = vcmp.eq.s32.totalorder %v88, %v2238
    %vm2244 = vcmp.eq.s32.totalorder %v89, %v2238
    %vm2245 = vcmp.eq.s32.totalorder %v90, %v2238
    %vm2246 = vcmp.eq.s32.totalorder %v91, %v2238
    %vm2247 = vcmp.eq.s32.totalorder %v92, %v2238
    %vm2248 = vcmp.eq.s32.totalorder %v93, %v2238
    %vm2249 = vcmp.eq.s32.totalorder %v94, %v2238
    %vm2250 = vcmp.eq.s32.totalorder %v95, %v2238
    %vm2251 = vcmp.eq.s32.totalorder %v96, %v2238
    %vm2252 = vcmp.eq.s32.totalorder %v97, %v2238
    %vm2253 = vcmp.eq.s32.totalorder %v98, %v2238
    %vm2254 = vcmp.eq.s32.totalorder %v99, %v2238
    %v2255 = vsel %vm2239, 1, 0
    %v2256 = vsel %vm2240, 1, 0
    %v2257 = vsel %vm2241, 1, 0
    %v2258 = vsel %vm2242, 1, 0
    %v2259 = vsel %vm2243, 1, 0
    %v2260 = vsel %vm2244, 1, 0
    %v2261 = vsel %vm2245, 1, 0
    %v2262 = vsel %vm2246, 1, 0
    %v2263 = vsel %vm2247, 1, 0
    %v2264 = vsel %vm2248, 1, 0
    %v2265 = vsel %vm2249, 1, 0
    %v2266 = vsel %vm2250, 1, 0
    %v2267 = vsel %vm2251, 1, 0
    %v2268 = vsel %vm2252, 1, 0
    %v2269 = vsel %vm2253, 1, 0
    %v2270 = vsel %vm2254, 1, 0
    %v2271 = vcvt.s32.f32 %v2255
    %v2272 = vcvt.s32.f32 %v2256
    %v2273 = vcvt.s32.f32 %v2257
    %v2274 = vcvt.s32.f32 %v2258
    %v2275 = vcvt.s32.f32 %v2259
    %v2276 = vcvt.s32.f32 %v2260
    %v2277 = vcvt.s32.f32 %v2261
    %v2278 = vcvt.s32.f32 %v2262
    %v2279 = vcvt.s32.f32 %v2263
    %v2280 = vcvt.s32.f32 %v2264
    %v2281 = vcvt.s32.f32 %v2265
    %v2282 = vcvt.s32.f32 %v2266
    %v2283 = vcvt.s32.f32 %v2267
    %v2284 = vcvt.s32.f32 %v2268
    %v2285 = vcvt.s32.f32 %v2269
    %v2286 = vcvt.s32.f32 %v2270
    %2287 = vmatpush.msra.mxu0 %v2286
    %2288 = vmatpush.msra.mxu0 %v2285
    %2289 = vmatpush.msra.mxu0 %v2284
    %2290 = vmatpush.msra.mxu0 %v2283
    %2291 = vmatpush.msra.mxu0 %v2282
    %2292 = vmatpush.msra.mxu0 %v2281
    %2293 = vmatpush.msra.mxu0 %v2280
    %2294 = vmatpush.msra.mxu0 %v2279
    %2295 = vmatpush.msra.mxu0 %v2278
    %2296 = vmatpush.msra.mxu0 %v2277
    %2297 = vmatpush.msra.mxu0 %v2276
    %2298 = vmatpush.msra.mxu0 %v2275
    %2299 = vmatpush.msra.mxu0 %v2274
    %2300 = vmatpush.msra.mxu0 %v2273
    %2301 = vmatpush.msra.mxu0 %v2272
    %2302 = vmatpush.msra.mxu0 %v2271
    %2303 = vmatmul.f32.gmra.mxu0 %v30
    %v2304 = vpop.f32.mrf.mxu0
    %v2305 = vadd.f32 0.0, %v2304
    %2306 = vmatmul.f32.gmra.mxu0 %v31
    %v2307 = vpop.f32.mrf.mxu0
    %v2308 = vadd.f32 0.0, %v2307
    %2309 = vmatmul.f32.gmra.mxu0 %v32
    %v2310 = vpop.f32.mrf.mxu0
    %v2311 = vadd.f32 0.0, %v2310
    %2312 = vmatmul.f32.gmra.mxu0 %v33
    %v2313 = vpop.f32.mrf.mxu0
    %v2314 = vadd.f32 0.0, %v2313
    %2315 = vdwg.mxu0
    %2316 = vmatpush.msra.mxu0 0.0
    %2317 = vmatpush.msra.mxu0 0.0
    %2318 = vmatpush.msra.mxu0 0.0
    %2319 = vmatpush.msra.mxu0 0.0
    %2320 = vmatpush.msra.mxu0 0.0
    %2321 = vmatpush.msra.mxu0 0.0
    %2322 = vmatpush.msra.mxu0 0.0
    %2323 = vmatpush.msra.mxu0 0.0
    %2324 = vmatpush.msra.mxu0 0.0
    %2325 = vmatpush.msra.mxu0 0.0
    %2326 = vmatpush.msra.mxu0 0.0
    %2327 = vmatpush.msra.mxu0 0.0
    %2328 = vmatpush.msra.mxu0 %v2231
    %2329 = vmatpush.msra.mxu0 %v2230
    %2330 = vmatpush.msra.mxu0 %v2229
    %2331 = vmatpush.msra.mxu0 %v2228
    %2332 = vmatmul.f32.gmra.mxu0 %v181
    %v2333 = vpop.f32.mrf.mxu0
    %v2334 = vadd.f32 0.0, %v2333
    %2335 = vmatmul.f32.gmra.mxu0 %v184
    %v2336 = vpop.f32.mrf.mxu0
    %v2337 = vadd.f32 0.0, %v2336
    %2338 = vmatmul.f32.gmra.mxu0 %v187
    %v2339 = vpop.f32.mrf.mxu0
    %v2340 = vadd.f32 0.0, %v2339
    %2341 = vmatmul.f32.gmra.mxu0 %v190
    %v2342 = vpop.f32.mrf.mxu0
    %v2343 = vadd.f32 0.0, %v2342
    %2344 = vmatmul.f32.gmra.mxu0 %v193
    %v2345 = vpop.f32.mrf.mxu0
    %v2346 = vadd.f32 0.0, %v2345
    %2347 = vmatmul.f32.gmra.mxu0 %v196
    %v2348 = vpop.f32.mrf.mxu0
    %v2349 = vadd.f32 0.0, %v2348
    %2350 = vmatmul.f32.gmra.mxu0 %v199
    %v2351 = vpop.f32.mrf.mxu0
    %v2352 = vadd.f32 0.0, %v2351
    %2353 = vmatmul.f32.gmra.mxu0 %v202
    %v2354 = vpop.f32.mrf.mxu0
    %v2355 = vadd.f32 0.0, %v2354
    %2356 = vmatmul.f32.gmra.mxu0 %v205
    %v2357 = vpop.f32.mrf.mxu0
    %v2358 = vadd.f32 0.0, %v2357
    %2359 = vmatmul.f32.gmra.mxu0 %v208
    %v2360 = vpop.f32.mrf.mxu0
    %v2361 = vadd.f32 0.0, %v2360
    %2362 = vmatmul.f32.gmra.mxu0 %v211
    %v2363 = vpop.f32.mrf.mxu0
    %v2364 = vadd.f32 0.0, %v2363
    %2365 = vmatmul.f32.gmra.mxu0 %v214
    %v2366 = vpop.f32.mrf.mxu0
    %v2367 = vadd.f32 0.0, %v2366
    %2368 = vmatmul.f32.gmra.mxu0 %v217
    %v2369 = vpop.f32.mrf.mxu0
    %v2370 = vadd.f32 0.0, %v2369
    %2371 = vmatmul.f32.gmra.mxu0 %v220
    %v2372 = vpop.f32.mrf.mxu0
    %v2373 = vadd.f32 0.0, %v2372
    %2374 = vmatmul.f32.gmra.mxu0 %v223
    %v2375 = vpop.f32.mrf.mxu0
    %v2376 = vadd.f32 0.0, %v2375
    %2377 = vmatmul.f32.gmra.mxu0 %v226
    %v2378 = vpop.f32.mrf.mxu0
    %v2379 = vadd.f32 0.0, %v2378
    %2380 = vdwg.mxu0
    %2381 = vmatpush.msra.mxu0 0.0
    %2382 = vmatpush.msra.mxu0 0.0
    %2383 = vmatpush.msra.mxu0 0.0
    %2384 = vmatpush.msra.mxu0 0.0
    %2385 = vmatpush.msra.mxu0 0.0
    %2386 = vmatpush.msra.mxu0 0.0
    %2387 = vmatpush.msra.mxu0 0.0
    %2388 = vmatpush.msra.mxu0 0.0
    %2389 = vmatpush.msra.mxu0 0.0
    %2390 = vmatpush.msra.mxu0 0.0
    %2391 = vmatpush.msra.mxu0 0.0
    %2392 = vmatpush.msra.mxu0 0.0
    %2393 = vmatpush.msra.mxu0 %v2314
    %2394 = vmatpush.msra.mxu0 %v2311
    %2395 = vmatpush.msra.mxu0 %v2308
    %2396 = vmatpush.msra.mxu0 %v2305
    %2397 = vmatmul.f32.gmra.mxu0 %v294
    %v2398 = vpop.f32.mrf.mxu0
    %v2399 = vadd.f32 %v2334, %v2398
    %2400 = vmatmul.f32.gmra.mxu0 %v297
    %v2401 = vpop.f32.mrf.mxu0
    %v2402 = vadd.f32 %v2337, %v2401
    %2403 = vmatmul.f32.gmra.mxu0 %v300
    %v2404 = vpop.f32.mrf.mxu0
    %v2405 = vadd.f32 %v2340, %v2404
    %2406 = vmatmul.f32.gmra.mxu0 %v303
    %v2407 = vpop.f32.mrf.mxu0
    %v2408 = vadd.f32 %v2343, %v2407
    %2409 = vmatmul.f32.gmra.mxu0 %v306
    %v2410 = vpop.f32.mrf.mxu0
    %v2411 = vadd.f32 %v2346, %v2410
    %2412 = vmatmul.f32.gmra.mxu0 %v309
    %v2413 = vpop.f32.mrf.mxu0
    %v2414 = vadd.f32 %v2349, %v2413
    %2415 = vmatmul.f32.gmra.mxu0 %v312
    %v2416 = vpop.f32.mrf.mxu0
    %v2417 = vadd.f32 %v2352, %v2416
    %2418 = vmatmul.f32.gmra.mxu0 %v315
    %v2419 = vpop.f32.mrf.mxu0
    %v2420 = vadd.f32 %v2355, %v2419
    %2421 = vmatmul.f32.gmra.mxu0 %v318
    %v2422 = vpop.f32.mrf.mxu0
    %v2423 = vadd.f32 %v2358, %v2422
    %2424 = vmatmul.f32.gmra.mxu0 %v321
    %v2425 = vpop.f32.mrf.mxu0
    %v2426 = vadd.f32 %v2361, %v2425
    %2427 = vmatmul.f32.gmra.mxu0 %v324
    %v2428 = vpop.f32.mrf.mxu0
    %v2429 = vadd.f32 %v2364, %v2428
    %2430 = vmatmul.f32.gmra.mxu0 %v327
    %v2431 = vpop.f32.mrf.mxu0
    %v2432 = vadd.f32 %v2367, %v2431
    %2433 = vmatmul.f32.gmra.mxu0 %v330
    %v2434 = vpop.f32.mrf.mxu0
    %v2435 = vadd.f32 %v2370, %v2434
    %2436 = vmatmul.f32.gmra.mxu0 %v333
    %v2437 = vpop.f32.mrf.mxu0
    %v2438 = vadd.f32 %v2373, %v2437
    %2439 = vmatmul.f32.gmra.mxu0 %v336
    %v2440 = vpop.f32.mrf.mxu0
    %v2441 = vadd.f32 %v2376, %v2440
    %2442 = vmatmul.f32.gmra.mxu0 %v339
    %v2443 = vpop.f32.mrf.mxu0
    %v2444 = vadd.f32 %v2379, %v2443
    %2445 = vdwg.mxu0
    %v2446 = vadd.f32 %v2399, %v409
    %v2447 = vadd.f32 %v2402, %v414
    %v2448 = vadd.f32 %v2405, %v419
    %v2449 = vadd.f32 %v2408, %v424
    %v2450 = vadd.f32 %v2411, %v429
    %v2451 = vadd.f32 %v2414, %v434
    %v2452 = vadd.f32 %v2417, %v439
    %v2453 = vadd.f32 %v2420, %v444
    %v2454 = vadd.f32 %v2423, %v449
    %v2455 = vadd.f32 %v2426, %v454
    %v2456 = vadd.f32 %v2429, %v459
    %v2457 = vadd.f32 %v2432, %v464
    %v2458 = vadd.f32 %v2435, %v469
    %v2459 = vadd.f32 %v2438, %v474
    %v2460 = vadd.f32 %v2441, %v479
    %v2461 = vadd.f32 %v2444, %v484
    %v2462 = vxor.u32 %v2446, 2147483648
    %v2463 = vxor.u32 %v2447, 2147483648
    %v2464 = vxor.u32 %v2448, 2147483648
    %v2465 = vxor.u32 %v2449, 2147483648
    %v2466 = vmul.f32 %v2462, 1.442695
    %v2467 = vpow.pop %v2466
    %v2468 = vmul.f32 %v2463, 1.442695
    %v2469 = vpow.pop %v2468
    %v2470 = vmul.f32 %v2464, 1.442695
    %v2471 = vpow.pop %v2470
    %v2472 = vmul.f32 %v2465, 1.442695
    %v2473 = vpow.pop %v2472
    %v2474 = vadd.f32 %v2467, 1.0
    %v2475 = vadd.f32 %v2469, 1.0
    %v2476 = vadd.f32 %v2471, 1.0
    %v2477 = vadd.f32 %v2473, 1.0
    %v2478 = vrcp.pop %v2474
    %v2479 = vmul.f32 %v2474, %v2478
    %v2480 = vsub.f32 1.0, %v2479
    %v2481 = vmul.f32 %v2478, %v2480
    %v2482 = vadd.f32 %v2478, %v2481
    %vm2483 = vweird.f32 %v2474
    %vm2484 = vweird.f32 %v2478
    %vm2485 = vmor %vm2483, %vm2484
    %v2486 = vsel %vm2485, %v2478, %v2482
    %v2487 = vand.u32 2147483647, %v2474
    %vm2488 = vcmp.eq.f32.partialorder %v2487, 8.507059e+37
    %v2489 = vand.u32 %v2474, 2147483648
    %v2490 = vor.u32 1.1754944e-38, %v2489
    %v2491 = vsel %vm2488, %v2490, %v2486
    %v2492 = vmul.f32 1.0, %v2491
    %v2493 = vrcp.pop %v2475
    %v2494 = vmul.f32 %v2475, %v2493
    %v2495 = vsub.f32 1.0, %v2494
    %v2496 = vmul.f32 %v2493, %v2495
    %v2497 = vadd.f32 %v2493, %v2496
    %vm2498 = vweird.f32 %v2475
    %vm2499 = vweird.f32 %v2493
    %vm2500 = vmor %vm2498, %vm2499
    %v2501 = vsel %vm2500, %v2493, %v2497
    %v2502 = vand.u32 2147483647, %v2475
    %vm2503 = vcmp.eq.f32.partialorder %v2502, 8.507059e+37
    %v2504 = vand.u32 %v2475, 2147483648
    %v2505 = vor.u32 1.1754944e-38, %v2504
    %v2506 = vsel %vm2503, %v2505, %v2501
    %v2507 = vmul.f32 1.0, %v2506
    %v2508 = vrcp.pop %v2476
    %v2509 = vmul.f32 %v2476, %v2508
    %v2510 = vsub.f32 1.0, %v2509
    %v2511 = vmul.f32 %v2508, %v2510
    %v2512 = vadd.f32 %v2508, %v2511
    %vm2513 = vweird.f32 %v2476
    %vm2514 = vweird.f32 %v2508
    %vm2515 = vmor %vm2513, %vm2514
    %v2516 = vsel %vm2515, %v2508, %v2512
    %v2517 = vand.u32 2147483647, %v2476
    %vm2518 = vcmp.eq.f32.partialorder %v2517, 8.507059e+37
    %v2519 = vand.u32 %v2476, 2147483648
    %v2520 = vor.u32 1.1754944e-38, %v2519
    %v2521 = vsel %vm2518, %v2520, %v2516
    %v2522 = vmul.f32 1.0, %v2521
    %v2523 = vrcp.pop %v2477
    %v2524 = vmul.f32 %v2477, %v2523
    %v2525 = vsub.f32 1.0, %v2524
    %v2526 = vmul.f32 %v2523, %v2525
    %v2527 = vadd.f32 %v2523, %v2526
    %vm2528 = vweird.f32 %v2477
    %vm2529 = vweird.f32 %v2523
    %vm2530 = vmor %vm2528, %vm2529
    %v2531 = vsel %vm2530, %v2523, %v2527
    %v2532 = vand.u32 2147483647, %v2477
    %vm2533 = vcmp.eq.f32.partialorder %v2532, 8.507059e+37
    %v2534 = vand.u32 %v2477, 2147483648
    %v2535 = vor.u32 1.1754944e-38, %v2534
    %v2536 = vsel %vm2533, %v2535, %v2531
    %v2537 = vmul.f32 1.0, %v2536
    %v2538 = vxor.u32 %v2450, 2147483648
    %v2539 = vxor.u32 %v2451, 2147483648
    %v2540 = vxor.u32 %v2452, 2147483648
    %v2541 = vxor.u32 %v2453, 2147483648
    %v2542 = vmul.f32 %v2538, 1.442695
    %v2543 = vpow.pop %v2542
    %v2544 = vmul.f32 %v2539, 1.442695
    %v2545 = vpow.pop %v2544
    %v2546 = vmul.f32 %v2540, 1.442695
    %v2547 = vpow.pop %v2546
    %v2548 = vmul.f32 %v2541, 1.442695
    %v2549 = vpow.pop %v2548
    %v2550 = vadd.f32 %v2543, 1.0
    %v2551 = vadd.f32 %v2545, 1.0
    %v2552 = vadd.f32 %v2547, 1.0
    %v2553 = vadd.f32 %v2549, 1.0
    %v2554 = vrcp.pop %v2550
    %v2555 = vmul.f32 %v2550, %v2554
    %v2556 = vsub.f32 1.0, %v2555
    %v2557 = vmul.f32 %v2554, %v2556
    %v2558 = vadd.f32 %v2554, %v2557
    %vm2559 = vweird.f32 %v2550
    %vm2560 = vweird.f32 %v2554
    %vm2561 = vmor %vm2559, %vm2560
    %v2562 = vsel %vm2561, %v2554, %v2558
    %v2563 = vand.u32 2147483647, %v2550
    %vm2564 = vcmp.eq.f32.partialorder %v2563, 8.507059e+37
    %v2565 = vand.u32 %v2550, 2147483648
    %v2566 = vor.u32 1.1754944e-38, %v2565
    %v2567 = vsel %vm2564, %v2566, %v2562
    %v2568 = vmul.f32 1.0, %v2567
    %v2569 = vrcp.pop %v2551
    %v2570 = vmul.f32 %v2551, %v2569
    %v2571 = vsub.f32 1.0, %v2570
    %v2572 = vmul.f32 %v2569, %v2571
    %v2573 = vadd.f32 %v2569, %v2572
    %vm2574 = vweird.f32 %v2551
    %vm2575 = vweird.f32 %v2569
    %vm2576 = vmor %vm2574, %vm2575
    %v2577 = vsel %vm2576, %v2569, %v2573
    %v2578 = vand.u32 2147483647, %v2551
    %vm2579 = vcmp.eq.f32.partialorder %v2578, 8.507059e+37
    %v2580 = vand.u32 %v2551, 2147483648
    %v2581 = vor.u32 1.1754944e-38, %v2580
    %v2582 = vsel %vm2579, %v2581, %v2577
    %v2583 = vmul.f32 1.0, %v2582
    %v2584 = vrcp.pop %v2552
    %v2585 = vmul.f32 %v2552, %v2584
    %v2586 = vsub.f32 1.0, %v2585
    %v2587 = vmul.f32 %v2584, %v2586
    %v2588 = vadd.f32 %v2584, %v2587
    %vm2589 = vweird.f32 %v2552
    %vm2590 = vweird.f32 %v2584
    %vm2591 = vmor %vm2589, %vm2590
    %v2592 = vsel %vm2591, %v2584, %v2588
    %v2593 = vand.u32 2147483647, %v2552
    %vm2594 = vcmp.eq.f32.partialorder %v2593, 8.507059e+37
    %v2595 = vand.u32 %v2552, 2147483648
    %v2596 = vor.u32 1.1754944e-38, %v2595
    %v2597 = vsel %vm2594, %v2596, %v2592
    %v2598 = vmul.f32 1.0, %v2597
    %v2599 = vrcp.pop %v2553
    %v2600 = vmul.f32 %v2553, %v2599
    %v2601 = vsub.f32 1.0, %v2600
    %v2602 = vmul.f32 %v2599, %v2601
    %v2603 = vadd.f32 %v2599, %v2602
    %vm2604 = vweird.f32 %v2553
    %vm2605 = vweird.f32 %v2599
    %vm2606 = vmor %vm2604, %vm2605
    %v2607 = vsel %vm2606, %v2599, %v2603
    %v2608 = vand.u32 2147483647, %v2553
    %vm2609 = vcmp.eq.f32.partialorder %v2608, 8.507059e+37
    %v2610 = vand.u32 %v2553, 2147483648
    %v2611 = vor.u32 1.1754944e-38, %v2610
    %v2612 = vsel %vm2609, %v2611, %v2607
    %v2613 = vmul.f32 1.0, %v2612
    %v2614 = vtanh.pop %v2454
    %v2615 = vtanh.pop %v2455
    %v2616 = vtanh.pop %v2456
    %v2617 = vtanh.pop %v2457
    %v2618 = vxor.u32 %v2458, 2147483648
    %v2619 = vxor.u32 %v2459, 2147483648
    %v2620 = vxor.u32 %v2460, 2147483648
    %v2621 = vxor.u32 %v2461, 2147483648
    %v2622 = vmul.f32 %v2618, 1.442695
    %v2623 = vpow.pop %v2622
    %v2624 = vmul.f32 %v2619, 1.442695
    %v2625 = vpow.pop %v2624
    %v2626 = vmul.f32 %v2620, 1.442695
    %v2627 = vpow.pop %v2626
    %v2628 = vmul.f32 %v2621, 1.442695
    %v2629 = vpow.pop %v2628
    %v2630 = vadd.f32 %v2623, 1.0
    %v2631 = vadd.f32 %v2625, 1.0
    %v2632 = vadd.f32 %v2627, 1.0
    %v2633 = vadd.f32 %v2629, 1.0
    %v2634 = vrcp.pop %v2630
    %v2635 = vmul.f32 %v2630, %v2634
    %v2636 = vsub.f32 1.0, %v2635
    %v2637 = vmul.f32 %v2634, %v2636
    %v2638 = vadd.f32 %v2634, %v2637
    %vm2639 = vweird.f32 %v2630
    %vm2640 = vweird.f32 %v2634
    %vm2641 = vmor %vm2639, %vm2640
    %v2642 = vsel %vm2641, %v2634, %v2638
    %v2643 = vand.u32 2147483647, %v2630
    %vm2644 = vcmp.eq.f32.partialorder %v2643, 8.507059e+37
    %v2645 = vand.u32 %v2630, 2147483648
    %v2646 = vor.u32 1.1754944e-38, %v2645
    %v2647 = vsel %vm2644, %v2646, %v2642
    %v2648 = vmul.f32 1.0, %v2647
    %v2649 = vrcp.pop %v2631
    %v2650 = vmul.f32 %v2631, %v2649
    %v2651 = vsub.f32 1.0, %v2650
    %v2652 = vmul.f32 %v2649, %v2651
    %v2653 = vadd.f32 %v2649, %v2652
    %vm2654 = vweird.f32 %v2631
    %vm2655 = vweird.f32 %v2649
    %vm2656 = vmor %vm2654, %vm2655
    %v2657 = vsel %vm2656, %v2649, %v2653
    %v2658 = vand.u32 2147483647, %v2631
    %vm2659 = vcmp.eq.f32.partialorder %v2658, 8.507059e+37
    %v2660 = vand.u32 %v2631, 2147483648
    %v2661 = vor.u32 1.1754944e-38, %v2660
    %v2662 = vsel %vm2659, %v2661, %v2657
    %v2663 = vmul.f32 1.0, %v2662
    %v2664 = vrcp.pop %v2632
    %v2665 = vmul.f32 %v2632, %v2664
    %v2666 = vsub.f32 1.0, %v2665
    %v2667 = vmul.f32 %v2664, %v2666
    %v2668 = vadd.f32 %v2664, %v2667
    %vm2669 = vweird.f32 %v2632
    %vm2670 = vweird.f32 %v2664
    %vm2671 = vmor %vm2669, %vm2670
    %v2672 = vsel %vm2671, %v2664, %v2668
    %v2673 = vand.u32 2147483647, %v2632
    %vm2674 = vcmp.eq.f32.partialorder %v2673, 8.507059e+37
    %v2675 = vand.u32 %v2632, 2147483648
    %v2676 = vor.u32 1.1754944e-38, %v2675
    %v2677 = vsel %vm2674, %v2676, %v2672
    %v2678 = vmul.f32 1.0, %v2677
    %v2679 = vrcp.pop %v2633
    %v2680 = vmul.f32 %v2633, %v2679
    %v2681 = vsub.f32 1.0, %v2680
    %v2682 = vmul.f32 %v2679, %v2681
    %v2683 = vadd.f32 %v2679, %v2682
    %vm2684 = vweird.f32 %v2633
    %vm2685 = vweird.f32 %v2679
    %vm2686 = vmor %vm2684, %vm2685
    %v2687 = vsel %vm2686, %v2679, %v2683
    %v2688 = vand.u32 2147483647, %v2633
    %vm2689 = vcmp.eq.f32.partialorder %v2688, 8.507059e+37
    %v2690 = vand.u32 %v2633, 2147483648
    %v2691 = vor.u32 1.1754944e-38, %v2690
    %v2692 = vsel %vm2689, %v2691, %v2687
    %v2693 = vmul.f32 1.0, %v2692
    %v2694 = vmul.f32 %v2568, %v2232
    %v2695 = vmul.f32 %v2583, %v2233
    %v2696 = vmul.f32 %v2598, %v2234
    %v2697 = vmul.f32 %v2613, %v2235
    %v2698 = vmul.f32 %v2492, %v2614
    %v2699 = vmul.f32 %v2507, %v2615
    %v2700 = vmul.f32 %v2522, %v2616
    %v2701 = vmul.f32 %v2537, %v2617
    %v2702 = vadd.f32 %v2694, %v2698
    %v2703 = vadd.f32 %v2695, %v2699
    %v2704 = vadd.f32 %v2696, %v2700
    %v2705 = vadd.f32 %v2697, %v2701
    %v2706 = vtanh.pop %v2702
    %v2707 = vtanh.pop %v2703
    %v2708 = vtanh.pop %v2704
    %v2709 = vtanh.pop %v2705
    %v2710 = vmul.f32 %v2648, %v2706
    %v2711 = vmul.f32 %v2663, %v2707
    %v2712 = vmul.f32 %v2678, %v2708
    %v2713 = vmul.f32 %v2693, %v2709
    %vm2714 = vcmp.gt.s32.totalorder %v82, 4
    %v2715 = vsel %vm2714, 1, 0
    %v2716 = vperm.slane %v2715, 0
    %vm2717 = vcmp.eq.s32.totalorder %v2716, 1
    %v2718 = vsel %vm2717, %v2710, %v2228
    %v2719 = vsel %vm2717, %v2711, %v2229
    %v2720 = vsel %vm2717, %v2712, %v2230
    %v2721 = vsel %vm2717, %v2713, %v2231
    %v2722 = vsel %vm2717, %v2702, %v2232
    %v2723 = vsel %vm2717, %v2703, %v2233
    %v2724 = vsel %vm2717, %v2704, %v2234
    %v2725 = vsel %vm2717, %v2705, %v2235
    %s2726 = scalar_lea.vmem %s0, 5
    %v2727 = vld [vmem:[%s2726] sm:$0x1]
    %v2728 = vperm.slane %v2727, 0
    %vm2729 = vcmp.eq.s32.totalorder %v84, %v2728
    %vm2730 = vcmp.eq.s32.totalorder %v85, %v2728
    %vm2731 = vcmp.eq.s32.totalorder %v86, %v2728
    %vm2732 = vcmp.eq.s32.totalorder %v87, %v2728
    %vm2733 = vcmp.eq.s32.totalorder %v88, %v2728
    %vm2734 = vcmp.eq.s32.totalorder %v89, %v2728
    %vm2735 = vcmp.eq.s32.totalorder %v90, %v2728
    %vm2736 = vcmp.eq.s32.totalorder %v91, %v2728
    %vm2737 = vcmp.eq.s32.totalorder %v92, %v2728
    %vm2738 = vcmp.eq.s32.totalorder %v93, %v2728
    %vm2739 = vcmp.eq.s32.totalorder %v94, %v2728
    %vm2740 = vcmp.eq.s32.totalorder %v95, %v2728
    %vm2741 = vcmp.eq.s32.totalorder %v96, %v2728
    %vm2742 = vcmp.eq.s32.totalorder %v97, %v2728
    %vm2743 = vcmp.eq.s32.totalorder %v98, %v2728
    %vm2744 = vcmp.eq.s32.totalorder %v99, %v2728
    %v2745 = vsel %vm2729, 1, 0
    %v2746 = vsel %vm2730, 1, 0
    %v2747 = vsel %vm2731, 1, 0
    %v2748 = vsel %vm2732, 1, 0
    %v2749 = vsel %vm2733, 1, 0
    %v2750 = vsel %vm2734, 1, 0
    %v2751 = vsel %vm2735, 1, 0
    %v2752 = vsel %vm2736, 1, 0
    %v2753 = vsel %vm2737, 1, 0
    %v2754 = vsel %vm2738, 1, 0
    %v2755 = vsel %vm2739, 1, 0
    %v2756 = vsel %vm2740, 1, 0
    %v2757 = vsel %vm2741, 1, 0
    %v2758 = vsel %vm2742, 1, 0
    %v2759 = vsel %vm2743, 1, 0
    %v2760 = vsel %vm2744, 1, 0
    %v2761 = vcvt.s32.f32 %v2745
    %v2762 = vcvt.s32.f32 %v2746
    %v2763 = vcvt.s32.f32 %v2747
    %v2764 = vcvt.s32.f32 %v2748
    %v2765 = vcvt.s32.f32 %v2749
    %v2766 = vcvt.s32.f32 %v2750
    %v2767 = vcvt.s32.f32 %v2751
    %v2768 = vcvt.s32.f32 %v2752
    %v2769 = vcvt.s32.f32 %v2753
    %v2770 = vcvt.s32.f32 %v2754
    %v2771 = vcvt.s32.f32 %v2755
    %v2772 = vcvt.s32.f32 %v2756
    %v2773 = vcvt.s32.f32 %v2757
    %v2774 = vcvt.s32.f32 %v2758
    %v2775 = vcvt.s32.f32 %v2759
    %v2776 = vcvt.s32.f32 %v2760
    %2777 = vmatpush.msra.mxu0 %v2776
    %2778 = vmatpush.msra.mxu0 %v2775
    %2779 = vmatpush.msra.mxu0 %v2774
    %2780 = vmatpush.msra.mxu0 %v2773
    %2781 = vmatpush.msra.mxu0 %v2772
    %2782 = vmatpush.msra.mxu0 %v2771
    %2783 = vmatpush.msra.mxu0 %v2770
    %2784 = vmatpush.msra.mxu0 %v2769
    %2785 = vmatpush.msra.mxu0 %v2768
    %2786 = vmatpush.msra.mxu0 %v2767
    %2787 = vmatpush.msra.mxu0 %v2766
    %2788 = vmatpush.msra.mxu0 %v2765
    %2789 = vmatpush.msra.mxu0 %v2764
    %2790 = vmatpush.msra.mxu0 %v2763
    %2791 = vmatpush.msra.mxu0 %v2762
    %2792 = vmatpush.msra.mxu0 %v2761
    %2793 = vmatmul.f32.gmra.mxu0 %v30
    %v2794 = vpop.f32.mrf.mxu0
    %v2795 = vadd.f32 0.0, %v2794
    %2796 = vmatmul.f32.gmra.mxu0 %v31
    %v2797 = vpop.f32.mrf.mxu0
    %v2798 = vadd.f32 0.0, %v2797
    %2799 = vmatmul.f32.gmra.mxu0 %v32
    %v2800 = vpop.f32.mrf.mxu0
    %v2801 = vadd.f32 0.0, %v2800
    %2802 = vmatmul.f32.gmra.mxu0 %v33
    %v2803 = vpop.f32.mrf.mxu0
    %v2804 = vadd.f32 0.0, %v2803
    %2805 = vdwg.mxu0
    %2806 = vmatpush.msra.mxu0 0.0
    %2807 = vmatpush.msra.mxu0 0.0
    %2808 = vmatpush.msra.mxu0 0.0
    %2809 = vmatpush.msra.mxu0 0.0
    %2810 = vmatpush.msra.mxu0 0.0
    %2811 = vmatpush.msra.mxu0 0.0
    %2812 = vmatpush.msra.mxu0 0.0
    %2813 = vmatpush.msra.mxu0 0.0
    %2814 = vmatpush.msra.mxu0 0.0
    %2815 = vmatpush.msra.mxu0 0.0
    %2816 = vmatpush.msra.mxu0 0.0
    %2817 = vmatpush.msra.mxu0 0.0
    %2818 = vmatpush.msra.mxu0 %v2721
    %2819 = vmatpush.msra.mxu0 %v2720
    %2820 = vmatpush.msra.mxu0 %v2719
    %2821 = vmatpush.msra.mxu0 %v2718
    %2822 = vmatmul.f32.gmra.mxu0 %v181
    %v2823 = vpop.f32.mrf.mxu0
    %v2824 = vadd.f32 0.0, %v2823
    %2825 = vmatmul.f32.gmra.mxu0 %v184
    %v2826 = vpop.f32.mrf.mxu0
    %v2827 = vadd.f32 0.0, %v2826
    %2828 = vmatmul.f32.gmra.mxu0 %v187
    %v2829 = vpop.f32.mrf.mxu0
    %v2830 = vadd.f32 0.0, %v2829
    %2831 = vmatmul.f32.gmra.mxu0 %v190
    %v2832 = vpop.f32.mrf.mxu0
    %v2833 = vadd.f32 0.0, %v2832
    %2834 = vmatmul.f32.gmra.mxu0 %v193
    %v2835 = vpop.f32.mrf.mxu0
    %v2836 = vadd.f32 0.0, %v2835
    %2837 = vmatmul.f32.gmra.mxu0 %v196
    %v2838 = vpop.f32.mrf.mxu0
    %v2839 = vadd.f32 0.0, %v2838
    %2840 = vmatmul.f32.gmra.mxu0 %v199
    %v2841 = vpop.f32.mrf.mxu0
    %v2842 = vadd.f32 0.0, %v2841
    %2843 = vmatmul.f32.gmra.mxu0 %v202
    %v2844 = vpop.f32.mrf.mxu0
    %v2845 = vadd.f32 0.0, %v2844
    %2846 = vmatmul.f32.gmra.mxu0 %v205
    %v2847 = vpop.f32.mrf.mxu0
    %v2848 = vadd.f32 0.0, %v2847
    %2849 = vmatmul.f32.gmra.mxu0 %v208
    %v2850 = vpop.f32.mrf.mxu0
    %v2851 = vadd.f32 0.0, %v2850
    %2852 = vmatmul.f32.gmra.mxu0 %v211
    %v2853 = vpop.f32.mrf.mxu0
    %v2854 = vadd.f32 0.0, %v2853
    %2855 = vmatmul.f32.gmra.mxu0 %v214
    %v2856 = vpop.f32.mrf.mxu0
    %v2857 = vadd.f32 0.0, %v2856
    %2858 = vmatmul.f32.gmra.mxu0 %v217
    %v2859 = vpop.f32.mrf.mxu0
    %v2860 = vadd.f32 0.0, %v2859
    %2861 = vmatmul.f32.gmra.mxu0 %v220
    %v2862 = vpop.f32.mrf.mxu0
    %v2863 = vadd.f32 0.0, %v2862
    %2864 = vmatmul.f32.gmra.mxu0 %v223
    %v2865 = vpop.f32.mrf.mxu0
    %v2866 = vadd.f32 0.0, %v2865
    %2867 = vmatmul.f32.gmra.mxu0 %v226
    %v2868 = vpop.f32.mrf.mxu0
    %v2869 = vadd.f32 0.0, %v2868
    %2870 = vdwg.mxu0
    %2871 = vmatpush.msra.mxu0 0.0
    %2872 = vmatpush.msra.mxu0 0.0
    %2873 = vmatpush.msra.mxu0 0.0
    %2874 = vmatpush.msra.mxu0 0.0
    %2875 = vmatpush.msra.mxu0 0.0
    %2876 = vmatpush.msra.mxu0 0.0
    %2877 = vmatpush.msra.mxu0 0.0
    %2878 = vmatpush.msra.mxu0 0.0
    %2879 = vmatpush.msra.mxu0 0.0
    %2880 = vmatpush.msra.mxu0 0.0
    %2881 = vmatpush.msra.mxu0 0.0
    %2882 = vmatpush.msra.mxu0 0.0
    %2883 = vmatpush.msra.mxu0 %v2804
    %2884 = vmatpush.msra.mxu0 %v2801
    %2885 = vmatpush.msra.mxu0 %v2798
    %2886 = vmatpush.msra.mxu0 %v2795
    %2887 = vmatmul.f32.gmra.mxu0 %v294
    %v2888 = vpop.f32.mrf.mxu0
    %v2889 = vadd.f32 %v2824, %v2888
    %2890 = vmatmul.f32.gmra.mxu0 %v297
    %v2891 = vpop.f32.mrf.mxu0
    %v2892 = vadd.f32 %v2827, %v2891
    %2893 = vmatmul.f32.gmra.mxu0 %v300
    %v2894 = vpop.f32.mrf.mxu0
    %v2895 = vadd.f32 %v2830, %v2894
    %2896 = vmatmul.f32.gmra.mxu0 %v303
    %v2897 = vpop.f32.mrf.mxu0
    %v2898 = vadd.f32 %v2833, %v2897
    %2899 = vmatmul.f32.gmra.mxu0 %v306
    %v2900 = vpop.f32.mrf.mxu0
    %v2901 = vadd.f32 %v2836, %v2900
    %2902 = vmatmul.f32.gmra.mxu0 %v309
    %v2903 = vpop.f32.mrf.mxu0
    %v2904 = vadd.f32 %v2839, %v2903
    %2905 = vmatmul.f32.gmra.mxu0 %v312
    %v2906 = vpop.f32.mrf.mxu0
    %v2907 = vadd.f32 %v2842, %v2906
    %2908 = vmatmul.f32.gmra.mxu0 %v315
    %v2909 = vpop.f32.mrf.mxu0
    %v2910 = vadd.f32 %v2845, %v2909
    %2911 = vmatmul.f32.gmra.mxu0 %v318
    %v2912 = vpop.f32.mrf.mxu0
    %v2913 = vadd.f32 %v2848, %v2912
    %2914 = vmatmul.f32.gmra.mxu0 %v321
    %v2915 = vpop.f32.mrf.mxu0
    %v2916 = vadd.f32 %v2851, %v2915
    %2917 = vmatmul.f32.gmra.mxu0 %v324
    %v2918 = vpop.f32.mrf.mxu0
    %v2919 = vadd.f32 %v2854, %v2918
    %2920 = vmatmul.f32.gmra.mxu0 %v327
    %v2921 = vpop.f32.mrf.mxu0
    %v2922 = vadd.f32 %v2857, %v2921
    %2923 = vmatmul.f32.gmra.mxu0 %v330
    %v2924 = vpop.f32.mrf.mxu0
    %v2925 = vadd.f32 %v2860, %v2924
    %2926 = vmatmul.f32.gmra.mxu0 %v333
    %v2927 = vpop.f32.mrf.mxu0
    %v2928 = vadd.f32 %v2863, %v2927
    %2929 = vmatmul.f32.gmra.mxu0 %v336
    %v2930 = vpop.f32.mrf.mxu0
    %v2931 = vadd.f32 %v2866, %v2930
    %2932 = vmatmul.f32.gmra.mxu0 %v339
    %v2933 = vpop.f32.mrf.mxu0
    %v2934 = vadd.f32 %v2869, %v2933
    %2935 = vdwg.mxu0
    %v2936 = vadd.f32 %v2889, %v409
    %v2937 = vadd.f32 %v2892, %v414
    %v2938 = vadd.f32 %v2895, %v419
    %v2939 = vadd.f32 %v2898, %v424
    %v2940 = vadd.f32 %v2901, %v429
    %v2941 = vadd.f32 %v2904, %v434
    %v2942 = vadd.f32 %v2907, %v439
    %v2943 = vadd.f32 %v2910, %v444
    %v2944 = vadd.f32 %v2913, %v449
    %v2945 = vadd.f32 %v2916, %v454
    %v2946 = vadd.f32 %v2919, %v459
    %v2947 = vadd.f32 %v2922, %v464
    %v2948 = vadd.f32 %v2925, %v469
    %v2949 = vadd.f32 %v2928, %v474
    %v2950 = vadd.f32 %v2931, %v479
    %v2951 = vadd.f32 %v2934, %v484
    %v2952 = vxor.u32 %v2936, 2147483648
    %v2953 = vxor.u32 %v2937, 2147483648
    %v2954 = vxor.u32 %v2938, 2147483648
    %v2955 = vxor.u32 %v2939, 2147483648
    %v2956 = vmul.f32 %v2952, 1.442695
    %v2957 = vpow.pop %v2956
    %v2958 = vmul.f32 %v2953, 1.442695
    %v2959 = vpow.pop %v2958
    %v2960 = vmul.f32 %v2954, 1.442695
    %v2961 = vpow.pop %v2960
    %v2962 = vmul.f32 %v2955, 1.442695
    %v2963 = vpow.pop %v2962
    %v2964 = vadd.f32 %v2957, 1.0
    %v2965 = vadd.f32 %v2959, 1.0
    %v2966 = vadd.f32 %v2961, 1.0
    %v2967 = vadd.f32 %v2963, 1.0
    %v2968 = vrcp.pop %v2964
    %v2969 = vmul.f32 %v2964, %v2968
    %v2970 = vsub.f32 1.0, %v2969
    %v2971 = vmul.f32 %v2968, %v2970
    %v2972 = vadd.f32 %v2968, %v2971
    %vm2973 = vweird.f32 %v2964
    %vm2974 = vweird.f32 %v2968
    %vm2975 = vmor %vm2973, %vm2974
    %v2976 = vsel %vm2975, %v2968, %v2972
    %v2977 = vand.u32 2147483647, %v2964
    %vm2978 = vcmp.eq.f32.partialorder %v2977, 8.507059e+37
    %v2979 = vand.u32 %v2964, 2147483648
    %v2980 = vor.u32 1.1754944e-38, %v2979
    %v2981 = vsel %vm2978, %v2980, %v2976
    %v2982 = vmul.f32 1.0, %v2981
    %v2983 = vrcp.pop %v2965
    %v2984 = vmul.f32 %v2965, %v2983
    %v2985 = vsub.f32 1.0, %v2984
    %v2986 = vmul.f32 %v2983, %v2985
    %v2987 = vadd.f32 %v2983, %v2986
    %vm2988 = vweird.f32 %v2965
    %vm2989 = vweird.f32 %v2983
    %vm2990 = vmor %vm2988, %vm2989
    %v2991 = vsel %vm2990, %v2983, %v2987
    %v2992 = vand.u32 2147483647, %v2965
    %vm2993 = vcmp.eq.f32.partialorder %v2992, 8.507059e+37
    %v2994 = vand.u32 %v2965, 2147483648
    %v2995 = vor.u32 1.1754944e-38, %v2994
    %v2996 = vsel %vm2993, %v2995, %v2991
    %v2997 = vmul.f32 1.0, %v2996
    %v2998 = vrcp.pop %v2966
    %v2999 = vmul.f32 %v2966, %v2998
    %v3000 = vsub.f32 1.0, %v2999
    %v3001 = vmul.f32 %v2998, %v3000
    %v3002 = vadd.f32 %v2998, %v3001
    %vm3003 = vweird.f32 %v2966
    %vm3004 = vweird.f32 %v2998
    %vm3005 = vmor %vm3003, %vm3004
    %v3006 = vsel %vm3005, %v2998, %v3002
    %v3007 = vand.u32 2147483647, %v2966
    %vm3008 = vcmp.eq.f32.partialorder %v3007, 8.507059e+37
    %v3009 = vand.u32 %v2966, 2147483648
    %v3010 = vor.u32 1.1754944e-38, %v3009
    %v3011 = vsel %vm3008, %v3010, %v3006
    %v3012 = vmul.f32 1.0, %v3011
    %v3013 = vrcp.pop %v2967
    %v3014 = vmul.f32 %v2967, %v3013
    %v3015 = vsub.f32 1.0, %v3014
    %v3016 = vmul.f32 %v3013, %v3015
    %v3017 = vadd.f32 %v3013, %v3016
    %vm3018 = vweird.f32 %v2967
    %vm3019 = vweird.f32 %v3013
    %vm3020 = vmor %vm3018, %vm3019
    %v3021 = vsel %vm3020, %v3013, %v3017
    %v3022 = vand.u32 2147483647, %v2967
    %vm3023 = vcmp.eq.f32.partialorder %v3022, 8.507059e+37
    %v3024 = vand.u32 %v2967, 2147483648
    %v3025 = vor.u32 1.1754944e-38, %v3024
    %v3026 = vsel %vm3023, %v3025, %v3021
    %v3027 = vmul.f32 1.0, %v3026
    %v3028 = vxor.u32 %v2940, 2147483648
    %v3029 = vxor.u32 %v2941, 2147483648
    %v3030 = vxor.u32 %v2942, 2147483648
    %v3031 = vxor.u32 %v2943, 2147483648
    %v3032 = vmul.f32 %v3028, 1.442695
    %v3033 = vpow.pop %v3032
    %v3034 = vmul.f32 %v3029, 1.442695
    %v3035 = vpow.pop %v3034
    %v3036 = vmul.f32 %v3030, 1.442695
    %v3037 = vpow.pop %v3036
    %v3038 = vmul.f32 %v3031, 1.442695
    %v3039 = vpow.pop %v3038
    %v3040 = vadd.f32 %v3033, 1.0
    %v3041 = vadd.f32 %v3035, 1.0
    %v3042 = vadd.f32 %v3037, 1.0
    %v3043 = vadd.f32 %v3039, 1.0
    %v3044 = vrcp.pop %v3040
    %v3045 = vmul.f32 %v3040, %v3044
    %v3046 = vsub.f32 1.0, %v3045
    %v3047 = vmul.f32 %v3044, %v3046
    %v3048 = vadd.f32 %v3044, %v3047
    %vm3049 = vweird.f32 %v3040
    %vm3050 = vweird.f32 %v3044
    %vm3051 = vmor %vm3049, %vm3050
    %v3052 = vsel %vm3051, %v3044, %v3048
    %v3053 = vand.u32 2147483647, %v3040
    %vm3054 = vcmp.eq.f32.partialorder %v3053, 8.507059e+37
    %v3055 = vand.u32 %v3040, 2147483648
    %v3056 = vor.u32 1.1754944e-38, %v3055
    %v3057 = vsel %vm3054, %v3056, %v3052
    %v3058 = vmul.f32 1.0, %v3057
    %v3059 = vrcp.pop %v3041
    %v3060 = vmul.f32 %v3041, %v3059
    %v3061 = vsub.f32 1.0, %v3060
    %v3062 = vmul.f32 %v3059, %v3061
    %v3063 = vadd.f32 %v3059, %v3062
    %vm3064 = vweird.f32 %v3041
    %vm3065 = vweird.f32 %v3059
    %vm3066 = vmor %vm3064, %vm3065
    %v3067 = vsel %vm3066, %v3059, %v3063
    %v3068 = vand.u32 2147483647, %v3041
    %vm3069 = vcmp.eq.f32.partialorder %v3068, 8.507059e+37
    %v3070 = vand.u32 %v3041, 2147483648
    %v3071 = vor.u32 1.1754944e-38, %v3070
    %v3072 = vsel %vm3069, %v3071, %v3067
    %v3073 = vmul.f32 1.0, %v3072
    %v3074 = vrcp.pop %v3042
    %v3075 = vmul.f32 %v3042, %v3074
    %v3076 = vsub.f32 1.0, %v3075
    %v3077 = vmul.f32 %v3074, %v3076
    %v3078 = vadd.f32 %v3074, %v3077
    %vm3079 = vweird.f32 %v3042
    %vm3080 = vweird.f32 %v3074
    %vm3081 = vmor %vm3079, %vm3080
    %v3082 = vsel %vm3081, %v3074, %v3078
    %v3083 = vand.u32 2147483647, %v3042
    %vm3084 = vcmp.eq.f32.partialorder %v3083, 8.507059e+37
    %v3085 = vand.u32 %v3042, 2147483648
    %v3086 = vor.u32 1.1754944e-38, %v3085
    %v3087 = vsel %vm3084, %v3086, %v3082
    %v3088 = vmul.f32 1.0, %v3087
    %v3089 = vrcp.pop %v3043
    %v3090 = vmul.f32 %v3043, %v3089
    %v3091 = vsub.f32 1.0, %v3090
    %v3092 = vmul.f32 %v3089, %v3091
    %v3093 = vadd.f32 %v3089, %v3092
    %vm3094 = vweird.f32 %v3043
    %vm3095 = vweird.f32 %v3089
    %vm3096 = vmor %vm3094, %vm3095
    %v3097 = vsel %vm3096, %v3089, %v3093
    %v3098 = vand.u32 2147483647, %v3043
    %vm3099 = vcmp.eq.f32.partialorder %v3098, 8.507059e+37
    %v3100 = vand.u32 %v3043, 2147483648
    %v3101 = vor.u32 1.1754944e-38, %v3100
    %v3102 = vsel %vm3099, %v3101, %v3097
    %v3103 = vmul.f32 1.0, %v3102
    %v3104 = vtanh.pop %v2944
    %v3105 = vtanh.pop %v2945
    %v3106 = vtanh.pop %v2946
    %v3107 = vtanh.pop %v2947
    %v3108 = vxor.u32 %v2948, 2147483648
    %v3109 = vxor.u32 %v2949, 2147483648
    %v3110 = vxor.u32 %v2950, 2147483648
    %v3111 = vxor.u32 %v2951, 2147483648
    %v3112 = vmul.f32 %v3108, 1.442695
    %v3113 = vpow.pop %v3112
    %v3114 = vmul.f32 %v3109, 1.442695
    %v3115 = vpow.pop %v3114
    %v3116 = vmul.f32 %v3110, 1.442695
    %v3117 = vpow.pop %v3116
    %v3118 = vmul.f32 %v3111, 1.442695
    %v3119 = vpow.pop %v3118
    %v3120 = vadd.f32 %v3113, 1.0
    %v3121 = vadd.f32 %v3115, 1.0
    %v3122 = vadd.f32 %v3117, 1.0
    %v3123 = vadd.f32 %v3119, 1.0
    %v3124 = vrcp.pop %v3120
    %v3125 = vmul.f32 %v3120, %v3124
    %v3126 = vsub.f32 1.0, %v3125
    %v3127 = vmul.f32 %v3124, %v3126
    %v3128 = vadd.f32 %v3124, %v3127
    %vm3129 = vweird.f32 %v3120
    %vm3130 = vweird.f32 %v3124
    %vm3131 = vmor %vm3129, %vm3130
    %v3132 = vsel %vm3131, %v3124, %v3128
    %v3133 = vand.u32 2147483647, %v3120
    %vm3134 = vcmp.eq.f32.partialorder %v3133, 8.507059e+37
    %v3135 = vand.u32 %v3120, 2147483648
    %v3136 = vor.u32 1.1754944e-38, %v3135
    %v3137 = vsel %vm3134, %v3136, %v3132
    %v3138 = vmul.f32 1.0, %v3137
    %v3139 = vrcp.pop %v3121
    %v3140 = vmul.f32 %v3121, %v3139
    %v3141 = vsub.f32 1.0, %v3140
    %v3142 = vmul.f32 %v3139, %v3141
    %v3143 = vadd.f32 %v3139, %v3142
    %vm3144 = vweird.f32 %v3121
    %vm3145 = vweird.f32 %v3139
    %vm3146 = vmor %vm3144, %vm3145
    %v3147 = vsel %vm3146, %v3139, %v3143
    %v3148 = vand.u32 2147483647, %v3121
    %vm3149 = vcmp.eq.f32.partialorder %v3148, 8.507059e+37
    %v3150 = vand.u32 %v3121, 2147483648
    %v3151 = vor.u32 1.1754944e-38, %v3150
    %v3152 = vsel %vm3149, %v3151, %v3147
    %v3153 = vmul.f32 1.0, %v3152
    %v3154 = vrcp.pop %v3122
    %v3155 = vmul.f32 %v3122, %v3154
    %v3156 = vsub.f32 1.0, %v3155
    %v3157 = vmul.f32 %v3154, %v3156
    %v3158 = vadd.f32 %v3154, %v3157
    %vm3159 = vweird.f32 %v3122
    %vm3160 = vweird.f32 %v3154
    %vm3161 = vmor %vm3159, %vm3160
    %v3162 = vsel %vm3161, %v3154, %v3158
    %v3163 = vand.u32 2147483647, %v3122
    %vm3164 = vcmp.eq.f32.partialorder %v3163, 8.507059e+37
    %v3165 = vand.u32 %v3122, 2147483648
    %v3166 = vor.u32 1.1754944e-38, %v3165
    %v3167 = vsel %vm3164, %v3166, %v3162
    %v3168 = vmul.f32 1.0, %v3167
    %v3169 = vrcp.pop %v3123
    %v3170 = vmul.f32 %v3123, %v3169
    %v3171 = vsub.f32 1.0, %v3170
    %v3172 = vmul.f32 %v3169, %v3171
    %v3173 = vadd.f32 %v3169, %v3172
    %vm3174 = vweird.f32 %v3123
    %vm3175 = vweird.f32 %v3169
    %vm3176 = vmor %vm3174, %vm3175
    %v3177 = vsel %vm3176, %v3169, %v3173
    %v3178 = vand.u32 2147483647, %v3123
    %vm3179 = vcmp.eq.f32.partialorder %v3178, 8.507059e+37
    %v3180 = vand.u32 %v3123, 2147483648
    %v3181 = vor.u32 1.1754944e-38, %v3180
    %v3182 = vsel %vm3179, %v3181, %v3177
    %v3183 = vmul.f32 1.0, %v3182
    %v3184 = vmul.f32 %v3058, %v2722
    %v3185 = vmul.f32 %v3073, %v2723
    %v3186 = vmul.f32 %v3088, %v2724
    %v3187 = vmul.f32 %v3103, %v2725
    %v3188 = vmul.f32 %v2982, %v3104
    %v3189 = vmul.f32 %v2997, %v3105
    %v3190 = vmul.f32 %v3012, %v3106
    %v3191 = vmul.f32 %v3027, %v3107
    %v3192 = vadd.f32 %v3184, %v3188
    %v3193 = vadd.f32 %v3185, %v3189
    %v3194 = vadd.f32 %v3186, %v3190
    %v3195 = vadd.f32 %v3187, %v3191
    %v3196 = vtanh.pop %v3192
    %v3197 = vtanh.pop %v3193
    %v3198 = vtanh.pop %v3194
    %v3199 = vtanh.pop %v3195
    %v3200 = vmul.f32 %v3138, %v3196
    %v3201 = vmul.f32 %v3153, %v3197
    %v3202 = vmul.f32 %v3168, %v3198
    %v3203 = vmul.f32 %v3183, %v3199
    %vm3204 = vcmp.gt.s32.totalorder %v82, 5
    %v3205 = vsel %vm3204, 1, 0
    %v3206 = vperm.slane %v3205, 0
    %vm3207 = vcmp.eq.s32.totalorder %v3206, 1
    %v3208 = vsel %vm3207, %v3200, %v2718
    %v3209 = vsel %vm3207, %v3201, %v2719
    %v3210 = vsel %vm3207, %v3202, %v2720
    %v3211 = vsel %vm3207, %v3203, %v2721
    %v3212 = vsel %vm3207, %v3192, %v2722
    %v3213 = vsel %vm3207, %v3193, %v2723
    %v3214 = vsel %vm3207, %v3194, %v2724
    %v3215 = vsel %vm3207, %v3195, %v2725
    %s3216 = scalar_lea.vmem %s0, 6
    %v3217 = vld [vmem:[%s3216] sm:$0x1]
    %v3218 = vperm.slane %v3217, 0
    %vm3219 = vcmp.eq.s32.totalorder %v84, %v3218
    %vm3220 = vcmp.eq.s32.totalorder %v85, %v3218
    %vm3221 = vcmp.eq.s32.totalorder %v86, %v3218
    %vm3222 = vcmp.eq.s32.totalorder %v87, %v3218
    %vm3223 = vcmp.eq.s32.totalorder %v88, %v3218
    %vm3224 = vcmp.eq.s32.totalorder %v89, %v3218
    %vm3225 = vcmp.eq.s32.totalorder %v90, %v3218
    %vm3226 = vcmp.eq.s32.totalorder %v91, %v3218
    %vm3227 = vcmp.eq.s32.totalorder %v92, %v3218
    %vm3228 = vcmp.eq.s32.totalorder %v93, %v3218
    %vm3229 = vcmp.eq.s32.totalorder %v94, %v3218
    %vm3230 = vcmp.eq.s32.totalorder %v95, %v3218
    %vm3231 = vcmp.eq.s32.totalorder %v96, %v3218
    %vm3232 = vcmp.eq.s32.totalorder %v97, %v3218
    %vm3233 = vcmp.eq.s32.totalorder %v98, %v3218
    %vm3234 = vcmp.eq.s32.totalorder %v99, %v3218
    %v3235 = vsel %vm3219, 1, 0
    %v3236 = vsel %vm3220, 1, 0
    %v3237 = vsel %vm3221, 1, 0
    %v3238 = vsel %vm3222, 1, 0
    %v3239 = vsel %vm3223, 1, 0
    %v3240 = vsel %vm3224, 1, 0
    %v3241 = vsel %vm3225, 1, 0
    %v3242 = vsel %vm3226, 1, 0
    %v3243 = vsel %vm3227, 1, 0
    %v3244 = vsel %vm3228, 1, 0
    %v3245 = vsel %vm3229, 1, 0
    %v3246 = vsel %vm3230, 1, 0
    %v3247 = vsel %vm3231, 1, 0
    %v3248 = vsel %vm3232, 1, 0
    %v3249 = vsel %vm3233, 1, 0
    %v3250 = vsel %vm3234, 1, 0
    %v3251 = vcvt.s32.f32 %v3235
    %v3252 = vcvt.s32.f32 %v3236
    %v3253 = vcvt.s32.f32 %v3237
    %v3254 = vcvt.s32.f32 %v3238
    %v3255 = vcvt.s32.f32 %v3239
    %v3256 = vcvt.s32.f32 %v3240
    %v3257 = vcvt.s32.f32 %v3241
    %v3258 = vcvt.s32.f32 %v3242
    %v3259 = vcvt.s32.f32 %v3243
    %v3260 = vcvt.s32.f32 %v3244
    %v3261 = vcvt.s32.f32 %v3245
    %v3262 = vcvt.s32.f32 %v3246
    %v3263 = vcvt.s32.f32 %v3247
    %v3264 = vcvt.s32.f32 %v3248
    %v3265 = vcvt.s32.f32 %v3249
    %v3266 = vcvt.s32.f32 %v3250
    %3267 = vmatpush.msra.mxu0 %v3266
    %3268 = vmatpush.msra.mxu0 %v3265
    %3269 = vmatpush.msra.mxu0 %v3264
    %3270 = vmatpush.msra.mxu0 %v3263
    %3271 = vmatpush.msra.mxu0 %v3262
    %3272 = vmatpush.msra.mxu0 %v3261
    %3273 = vmatpush.msra.mxu0 %v3260
    %3274 = vmatpush.msra.mxu0 %v3259
    %3275 = vmatpush.msra.mxu0 %v3258
    %3276 = vmatpush.msra.mxu0 %v3257
    %3277 = vmatpush.msra.mxu0 %v3256
    %3278 = vmatpush.msra.mxu0 %v3255
    %3279 = vmatpush.msra.mxu0 %v3254
    %3280 = vmatpush.msra.mxu0 %v3253
    %3281 = vmatpush.msra.mxu0 %v3252
    %3282 = vmatpush.msra.mxu0 %v3251
    %3283 = vmatmul.f32.gmra.mxu0 %v30
    %v3284 = vpop.f32.mrf.mxu0
    %v3285 = vadd.f32 0.0, %v3284
    %3286 = vmatmul.f32.gmra.mxu0 %v31
    %v3287 = vpop.f32.mrf.mxu0
    %v3288 = vadd.f32 0.0, %v3287
    %3289 = vmatmul.f32.gmra.mxu0 %v32
    %v3290 = vpop.f32.mrf.mxu0
    %v3291 = vadd.f32 0.0, %v3290
    %3292 = vmatmul.f32.gmra.mxu0 %v33
    %v3293 = vpop.f32.mrf.mxu0
    %v3294 = vadd.f32 0.0, %v3293
    %3295 = vdwg.mxu0
    %3296 = vmatpush.msra.mxu0 0.0
    %3297 = vmatpush.msra.mxu0 0.0
    %3298 = vmatpush.msra.mxu0 0.0
    %3299 = vmatpush.msra.mxu0 0.0
    %3300 = vmatpush.msra.mxu0 0.0
    %3301 = vmatpush.msra.mxu0 0.0
    %3302 = vmatpush.msra.mxu0 0.0
    %3303 = vmatpush.msra.mxu0 0.0
    %3304 = vmatpush.msra.mxu0 0.0
    %3305 = vmatpush.msra.mxu0 0.0
    %3306 = vmatpush.msra.mxu0 0.0
    %3307 = vmatpush.msra.mxu0 0.0
    %3308 = vmatpush.msra.mxu0 %v3211
    %3309 = vmatpush.msra.mxu0 %v3210
    %3310 = vmatpush.msra.mxu0 %v3209
    %3311 = vmatpush.msra.mxu0 %v3208
    %3312 = vmatmul.f32.gmra.mxu0 %v181
    %v3313 = vpop.f32.mrf.mxu0
    %v3314 = vadd.f32 0.0, %v3313
    %3315 = vmatmul.f32.gmra.mxu0 %v184
    %v3316 = vpop.f32.mrf.mxu0
    %v3317 = vadd.f32 0.0, %v3316
    %3318 = vmatmul.f32.gmra.mxu0 %v187
    %v3319 = vpop.f32.mrf.mxu0
    %v3320 = vadd.f32 0.0, %v3319
    %3321 = vmatmul.f32.gmra.mxu0 %v190
    %v3322 = vpop.f32.mrf.mxu0
    %v3323 = vadd.f32 0.0, %v3322
    %3324 = vmatmul.f32.gmra.mxu0 %v193
    %v3325 = vpop.f32.mrf.mxu0
    %v3326 = vadd.f32 0.0, %v3325
    %3327 = vmatmul.f32.gmra.mxu0 %v196
    %v3328 = vpop.f32.mrf.mxu0
    %v3329 = vadd.f32 0.0, %v3328
    %3330 = vmatmul.f32.gmra.mxu0 %v199
    %v3331 = vpop.f32.mrf.mxu0
    %v3332 = vadd.f32 0.0, %v3331
    %3333 = vmatmul.f32.gmra.mxu0 %v202
    %v3334 = vpop.f32.mrf.mxu0
    %v3335 = vadd.f32 0.0, %v3334
    %3336 = vmatmul.f32.gmra.mxu0 %v205
    %v3337 = vpop.f32.mrf.mxu0
    %v3338 = vadd.f32 0.0, %v3337
    %3339 = vmatmul.f32.gmra.mxu0 %v208
    %v3340 = vpop.f32.mrf.mxu0
    %v3341 = vadd.f32 0.0, %v3340
    %3342 = vmatmul.f32.gmra.mxu0 %v211
    %v3343 = vpop.f32.mrf.mxu0
    %v3344 = vadd.f32 0.0, %v3343
    %3345 = vmatmul.f32.gmra.mxu0 %v214
    %v3346 = vpop.f32.mrf.mxu0
    %v3347 = vadd.f32 0.0, %v3346
    %3348 = vmatmul.f32.gmra.mxu0 %v217
    %v3349 = vpop.f32.mrf.mxu0
    %v3350 = vadd.f32 0.0, %v3349
    %3351 = vmatmul.f32.gmra.mxu0 %v220
    %v3352 = vpop.f32.mrf.mxu0
    %v3353 = vadd.f32 0.0, %v3352
    %3354 = vmatmul.f32.gmra.mxu0 %v223
    %v3355 = vpop.f32.mrf.mxu0
    %v3356 = vadd.f32 0.0, %v3355
    %3357 = vmatmul.f32.gmra.mxu0 %v226
    %v3358 = vpop.f32.mrf.mxu0
    %v3359 = vadd.f32 0.0, %v3358
    %3360 = vdwg.mxu0
    %3361 = vmatpush.msra.mxu0 0.0
    %3362 = vmatpush.msra.mxu0 0.0
    %3363 = vmatpush.msra.mxu0 0.0
    %3364 = vmatpush.msra.mxu0 0.0
    %3365 = vmatpush.msra.mxu0 0.0
    %3366 = vmatpush.msra.mxu0 0.0
    %3367 = vmatpush.msra.mxu0 0.0
    %3368 = vmatpush.msra.mxu0 0.0
    %3369 = vmatpush.msra.mxu0 0.0
    %3370 = vmatpush.msra.mxu0 0.0
    %3371 = vmatpush.msra.mxu0 0.0
    %3372 = vmatpush.msra.mxu0 0.0
    %3373 = vmatpush.msra.mxu0 %v3294
    %3374 = vmatpush.msra.mxu0 %v3291
    %3375 = vmatpush.msra.mxu0 %v3288
    %3376 = vmatpush.msra.mxu0 %v3285
    %3377 = vmatmul.f32.gmra.mxu0 %v294
    %v3378 = vpop.f32.mrf.mxu0
    %v3379 = vadd.f32 %v3314, %v3378
    %3380 = vmatmul.f32.gmra.mxu0 %v297
    %v3381 = vpop.f32.mrf.mxu0
    %v3382 = vadd.f32 %v3317, %v3381
    %3383 = vmatmul.f32.gmra.mxu0 %v300
    %v3384 = vpop.f32.mrf.mxu0
    %v3385 = vadd.f32 %v3320, %v3384
    %3386 = vmatmul.f32.gmra.mxu0 %v303
    %v3387 = vpop.f32.mrf.mxu0
    %v3388 = vadd.f32 %v3323, %v3387
    %3389 = vmatmul.f32.gmra.mxu0 %v306
    %v3390 = vpop.f32.mrf.mxu0
    %v3391 = vadd.f32 %v3326, %v3390
    %3392 = vmatmul.f32.gmra.mxu0 %v309
    %v3393 = vpop.f32.mrf.mxu0
    %v3394 = vadd.f32 %v3329, %v3393
    %3395 = vmatmul.f32.gmra.mxu0 %v312
    %v3396 = vpop.f32.mrf.mxu0
    %v3397 = vadd.f32 %v3332, %v3396
    %3398 = vmatmul.f32.gmra.mxu0 %v315
    %v3399 = vpop.f32.mrf.mxu0
    %v3400 = vadd.f32 %v3335, %v3399
    %3401 = vmatmul.f32.gmra.mxu0 %v318
    %v3402 = vpop.f32.mrf.mxu0
    %v3403 = vadd.f32 %v3338, %v3402
    %3404 = vmatmul.f32.gmra.mxu0 %v321
    %v3405 = vpop.f32.mrf.mxu0
    %v3406 = vadd.f32 %v3341, %v3405
    %3407 = vmatmul.f32.gmra.mxu0 %v324
    %v3408 = vpop.f32.mrf.mxu0
    %v3409 = vadd.f32 %v3344, %v3408
    %3410 = vmatmul.f32.gmra.mxu0 %v327
    %v3411 = vpop.f32.mrf.mxu0
    %v3412 = vadd.f32 %v3347, %v3411
    %3413 = vmatmul.f32.gmra.mxu0 %v330
    %v3414 = vpop.f32.mrf.mxu0
    %v3415 = vadd.f32 %v3350, %v3414
    %3416 = vmatmul.f32.gmra.mxu0 %v333
    %v3417 = vpop.f32.mrf.mxu0
    %v3418 = vadd.f32 %v3353, %v3417
    %3419 = vmatmul.f32.gmra.mxu0 %v336
    %v3420 = vpop.f32.mrf.mxu0
    %v3421 = vadd.f32 %v3356, %v3420
    %3422 = vmatmul.f32.gmra.mxu0 %v339
    %v3423 = vpop.f32.mrf.mxu0
    %v3424 = vadd.f32 %v3359, %v3423
    %3425 = vdwg.mxu0
    %v3426 = vadd.f32 %v3379, %v409
    %v3427 = vadd.f32 %v3382, %v414
    %v3428 = vadd.f32 %v3385, %v419
    %v3429 = vadd.f32 %v3388, %v424
    %v3430 = vadd.f32 %v3391, %v429
    %v3431 = vadd.f32 %v3394, %v434
    %v3432 = vadd.f32 %v3397, %v439
    %v3433 = vadd.f32 %v3400, %v444
    %v3434 = vadd.f32 %v3403, %v449
    %v3435 = vadd.f32 %v3406, %v454
    %v3436 = vadd.f32 %v3409, %v459
    %v3437 = vadd.f32 %v3412, %v464
    %v3438 = vadd.f32 %v3415, %v469
    %v3439 = vadd.f32 %v3418, %v474
    %v3440 = vadd.f32 %v3421, %v479
    %v3441 = vadd.f32 %v3424, %v484
    %v3442 = vxor.u32 %v3426, 2147483648
    %v3443 = vxor.u32 %v3427, 2147483648
    %v3444 = vxor.u32 %v3428, 2147483648
    %v3445 = vxor.u32 %v3429, 2147483648
    %v3446 = vmul.f32 %v3442, 1.442695
    %v3447 = vpow.pop %v3446
    %v3448 = vmul.f32 %v3443, 1.442695
    %v3449 = vpow.pop %v3448
    %v3450 = vmul.f32 %v3444, 1.442695
    %v3451 = vpow.pop %v3450
    %v3452 = vmul.f32 %v3445, 1.442695
    %v3453 = vpow.pop %v3452
    %v3454 = vadd.f32 %v3447, 1.0
    %v3455 = vadd.f32 %v3449, 1.0
    %v3456 = vadd.f32 %v3451, 1.0
    %v3457 = vadd.f32 %v3453, 1.0
    %v3458 = vrcp.pop %v3454
    %v3459 = vmul.f32 %v3454, %v3458
    %v3460 = vsub.f32 1.0, %v3459
    %v3461 = vmul.f32 %v3458, %v3460
    %v3462 = vadd.f32 %v3458, %v3461
    %vm3463 = vweird.f32 %v3454
    %vm3464 = vweird.f32 %v3458
    %vm3465 = vmor %vm3463, %vm3464
    %v3466 = vsel %vm3465, %v3458, %v3462
    %v3467 = vand.u32 2147483647, %v3454
    %vm3468 = vcmp.eq.f32.partialorder %v3467, 8.507059e+37
    %v3469 = vand.u32 %v3454, 2147483648
    %v3470 = vor.u32 1.1754944e-38, %v3469
    %v3471 = vsel %vm3468, %v3470, %v3466
    %v3472 = vmul.f32 1.0, %v3471
    %v3473 = vrcp.pop %v3455
    %v3474 = vmul.f32 %v3455, %v3473
    %v3475 = vsub.f32 1.0, %v3474
    %v3476 = vmul.f32 %v3473, %v3475
    %v3477 = vadd.f32 %v3473, %v3476
    %vm3478 = vweird.f32 %v3455
    %vm3479 = vweird.f32 %v3473
    %vm3480 = vmor %vm3478, %vm3479
    %v3481 = vsel %vm3480, %v3473, %v3477
    %v3482 = vand.u32 2147483647, %v3455
    %vm3483 = vcmp.eq.f32.partialorder %v3482, 8.507059e+37
    %v3484 = vand.u32 %v3455, 2147483648
    %v3485 = vor.u32 1.1754944e-38, %v3484
    %v3486 = vsel %vm3483, %v3485, %v3481
    %v3487 = vmul.f32 1.0, %v3486
    %v3488 = vrcp.pop %v3456
    %v3489 = vmul.f32 %v3456, %v3488
    %v3490 = vsub.f32 1.0, %v3489
    %v3491 = vmul.f32 %v3488, %v3490
    %v3492 = vadd.f32 %v3488, %v3491
    %vm3493 = vweird.f32 %v3456
    %vm3494 = vweird.f32 %v3488
    %vm3495 = vmor %vm3493, %vm3494
    %v3496 = vsel %vm3495, %v3488, %v3492
    %v3497 = vand.u32 2147483647, %v3456
    %vm3498 = vcmp.eq.f32.partialorder %v3497, 8.507059e+37
    %v3499 = vand.u32 %v3456, 2147483648
    %v3500 = vor.u32 1.1754944e-38, %v3499
    %v3501 = vsel %vm3498, %v3500, %v3496
    %v3502 = vmul.f32 1.0, %v3501
    %v3503 = vrcp.pop %v3457
    %v3504 = vmul.f32 %v3457, %v3503
    %v3505 = vsub.f32 1.0, %v3504
    %v3506 = vmul.f32 %v3503, %v3505
    %v3507 = vadd.f32 %v3503, %v3506
    %vm3508 = vweird.f32 %v3457
    %vm3509 = vweird.f32 %v3503
    %vm3510 = vmor %vm3508, %vm3509
    %v3511 = vsel %vm3510, %v3503, %v3507
    %v3512 = vand.u32 2147483647, %v3457
    %vm3513 = vcmp.eq.f32.partialorder %v3512, 8.507059e+37
    %v3514 = vand.u32 %v3457, 2147483648
    %v3515 = vor.u32 1.1754944e-38, %v3514
    %v3516 = vsel %vm3513, %v3515, %v3511
    %v3517 = vmul.f32 1.0, %v3516
    %v3518 = vxor.u32 %v3430, 2147483648
    %v3519 = vxor.u32 %v3431, 2147483648
    %v3520 = vxor.u32 %v3432, 2147483648
    %v3521 = vxor.u32 %v3433, 2147483648
    %v3522 = vmul.f32 %v3518, 1.442695
    %v3523 = vpow.pop %v3522
    %v3524 = vmul.f32 %v3519, 1.442695
    %v3525 = vpow.pop %v3524
    %v3526 = vmul.f32 %v3520, 1.442695
    %v3527 = vpow.pop %v3526
    %v3528 = vmul.f32 %v3521, 1.442695
    %v3529 = vpow.pop %v3528
    %v3530 = vadd.f32 %v3523, 1.0
    %v3531 = vadd.f32 %v3525, 1.0
    %v3532 = vadd.f32 %v3527, 1.0
    %v3533 = vadd.f32 %v3529, 1.0
    %v3534 = vrcp.pop %v3530
    %v3535 = vmul.f32 %v3530, %v3534
    %v3536 = vsub.f32 1.0, %v3535
    %v3537 = vmul.f32 %v3534, %v3536
    %v3538 = vadd.f32 %v3534, %v3537
    %vm3539 = vweird.f32 %v3530
    %vm3540 = vweird.f32 %v3534
    %vm3541 = vmor %vm3539, %vm3540
    %v3542 = vsel %vm3541, %v3534, %v3538
    %v3543 = vand.u32 2147483647, %v3530
    %vm3544 = vcmp.eq.f32.partialorder %v3543, 8.507059e+37
    %v3545 = vand.u32 %v3530, 2147483648
    %v3546 = vor.u32 1.1754944e-38, %v3545
    %v3547 = vsel %vm3544, %v3546, %v3542
    %v3548 = vmul.f32 1.0, %v3547
    %v3549 = vrcp.pop %v3531
    %v3550 = vmul.f32 %v3531, %v3549
    %v3551 = vsub.f32 1.0, %v3550
    %v3552 = vmul.f32 %v3549, %v3551
    %v3553 = vadd.f32 %v3549, %v3552
    %vm3554 = vweird.f32 %v3531
    %vm3555 = vweird.f32 %v3549
    %vm3556 = vmor %vm3554, %vm3555
    %v3557 = vsel %vm3556, %v3549, %v3553
    %v3558 = vand.u32 2147483647, %v3531
    %vm3559 = vcmp.eq.f32.partialorder %v3558, 8.507059e+37
    %v3560 = vand.u32 %v3531, 2147483648
    %v3561 = vor.u32 1.1754944e-38, %v3560
    %v3562 = vsel %vm3559, %v3561, %v3557
    %v3563 = vmul.f32 1.0, %v3562
    %v3564 = vrcp.pop %v3532
    %v3565 = vmul.f32 %v3532, %v3564
    %v3566 = vsub.f32 1.0, %v3565
    %v3567 = vmul.f32 %v3564, %v3566
    %v3568 = vadd.f32 %v3564, %v3567
    %vm3569 = vweird.f32 %v3532
    %vm3570 = vweird.f32 %v3564
    %vm3571 = vmor %vm3569, %vm3570
    %v3572 = vsel %vm3571, %v3564, %v3568
    %v3573 = vand.u32 2147483647, %v3532
    %vm3574 = vcmp.eq.f32.partialorder %v3573, 8.507059e+37
    %v3575 = vand.u32 %v3532, 2147483648
    %v3576 = vor.u32 1.1754944e-38, %v3575
    %v3577 = vsel %vm3574, %v3576, %v3572
    %v3578 = vmul.f32 1.0, %v3577
    %v3579 = vrcp.pop %v3533
    %v3580 = vmul.f32 %v3533, %v3579
    %v3581 = vsub.f32 1.0, %v3580
    %v3582 = vmul.f32 %v3579, %v3581
    %v3583 = vadd.f32 %v3579, %v3582
    %vm3584 = vweird.f32 %v3533
    %vm3585 = vweird.f32 %v3579
    %vm3586 = vmor %vm3584, %vm3585
    %v3587 = vsel %vm3586, %v3579, %v3583
    %v3588 = vand.u32 2147483647, %v3533
    %vm3589 = vcmp.eq.f32.partialorder %v3588, 8.507059e+37
    %v3590 = vand.u32 %v3533, 2147483648
    %v3591 = vor.u32 1.1754944e-38, %v3590
    %v3592 = vsel %vm3589, %v3591, %v3587
    %v3593 = vmul.f32 1.0, %v3592
    %v3594 = vtanh.pop %v3434
    %v3595 = vtanh.pop %v3435
    %v3596 = vtanh.pop %v3436
    %v3597 = vtanh.pop %v3437
    %v3598 = vxor.u32 %v3438, 2147483648
    %v3599 = vxor.u32 %v3439, 2147483648
    %v3600 = vxor.u32 %v3440, 2147483648
    %v3601 = vxor.u32 %v3441, 2147483648
    %v3602 = vmul.f32 %v3598, 1.442695
    %v3603 = vpow.pop %v3602
    %v3604 = vmul.f32 %v3599, 1.442695
    %v3605 = vpow.pop %v3604
    %v3606 = vmul.f32 %v3600, 1.442695
    %v3607 = vpow.pop %v3606
    %v3608 = vmul.f32 %v3601, 1.442695
    %v3609 = vpow.pop %v3608
    %v3610 = vadd.f32 %v3603, 1.0
    %v3611 = vadd.f32 %v3605, 1.0
    %v3612 = vadd.f32 %v3607, 1.0
    %v3613 = vadd.f32 %v3609, 1.0
    %v3614 = vrcp.pop %v3610
    %v3615 = vmul.f32 %v3610, %v3614
    %v3616 = vsub.f32 1.0, %v3615
    %v3617 = vmul.f32 %v3614, %v3616
    %v3618 = vadd.f32 %v3614, %v3617
    %vm3619 = vweird.f32 %v3610
    %vm3620 = vweird.f32 %v3614
    %vm3621 = vmor %vm3619, %vm3620
    %v3622 = vsel %vm3621, %v3614, %v3618
    %v3623 = vand.u32 2147483647, %v3610
    %vm3624 = vcmp.eq.f32.partialorder %v3623, 8.507059e+37
    %v3625 = vand.u32 %v3610, 2147483648
    %v3626 = vor.u32 1.1754944e-38, %v3625
    %v3627 = vsel %vm3624, %v3626, %v3622
    %v3628 = vmul.f32 1.0, %v3627
    %v3629 = vrcp.pop %v3611
    %v3630 = vmul.f32 %v3611, %v3629
    %v3631 = vsub.f32 1.0, %v3630
    %v3632 = vmul.f32 %v3629, %v3631
    %v3633 = vadd.f32 %v3629, %v3632
    %vm3634 = vweird.f32 %v3611
    %vm3635 = vweird.f32 %v3629
    %vm3636 = vmor %vm3634, %vm3635
    %v3637 = vsel %vm3636, %v3629, %v3633
    %v3638 = vand.u32 2147483647, %v3611
    %vm3639 = vcmp.eq.f32.partialorder %v3638, 8.507059e+37
    %v3640 = vand.u32 %v3611, 2147483648
    %v3641 = vor.u32 1.1754944e-38, %v3640
    %v3642 = vsel %vm3639, %v3641, %v3637
    %v3643 = vmul.f32 1.0, %v3642
    %v3644 = vrcp.pop %v3612
    %v3645 = vmul.f32 %v3612, %v3644
    %v3646 = vsub.f32 1.0, %v3645
    %v3647 = vmul.f32 %v3644, %v3646
    %v3648 = vadd.f32 %v3644, %v3647
    %vm3649 = vweird.f32 %v3612
    %vm3650 = vweird.f32 %v3644
    %vm3651 = vmor %vm3649, %vm3650
    %v3652 = vsel %vm3651, %v3644, %v3648
    %v3653 = vand.u32 2147483647, %v3612
    %vm3654 = vcmp.eq.f32.partialorder %v3653, 8.507059e+37
    %v3655 = vand.u32 %v3612, 2147483648
    %v3656 = vor.u32 1.1754944e-38, %v3655
    %v3657 = vsel %vm3654, %v3656, %v3652
    %v3658 = vmul.f32 1.0, %v3657
    %v3659 = vrcp.pop %v3613
    %v3660 = vmul.f32 %v3613, %v3659
    %v3661 = vsub.f32 1.0, %v3660
    %v3662 = vmul.f32 %v3659, %v3661
    %v3663 = vadd.f32 %v3659, %v3662
    %vm3664 = vweird.f32 %v3613
    %vm3665 = vweird.f32 %v3659
    %vm3666 = vmor %vm3664, %vm3665
    %v3667 = vsel %vm3666, %v3659, %v3663
    %v3668 = vand.u32 2147483647, %v3613
    %vm3669 = vcmp.eq.f32.partialorder %v3668, 8.507059e+37
    %v3670 = vand.u32 %v3613, 2147483648
    %v3671 = vor.u32 1.1754944e-38, %v3670
    %v3672 = vsel %vm3669, %v3671, %v3667
    %v3673 = vmul.f32 1.0, %v3672
    %v3674 = vmul.f32 %v3548, %v3212
    %v3675 = vmul.f32 %v3563, %v3213
    %v3676 = vmul.f32 %v3578, %v3214
    %v3677 = vmul.f32 %v3593, %v3215
    %v3678 = vmul.f32 %v3472, %v3594
    %v3679 = vmul.f32 %v3487, %v3595
    %v3680 = vmul.f32 %v3502, %v3596
    %v3681 = vmul.f32 %v3517, %v3597
    %v3682 = vadd.f32 %v3674, %v3678
    %v3683 = vadd.f32 %v3675, %v3679
    %v3684 = vadd.f32 %v3676, %v3680
    %v3685 = vadd.f32 %v3677, %v3681
    %v3686 = vtanh.pop %v3682
    %v3687 = vtanh.pop %v3683
    %v3688 = vtanh.pop %v3684
    %v3689 = vtanh.pop %v3685
    %v3690 = vmul.f32 %v3628, %v3686
    %v3691 = vmul.f32 %v3643, %v3687
    %v3692 = vmul.f32 %v3658, %v3688
    %v3693 = vmul.f32 %v3673, %v3689
    %vm3694 = vcmp.gt.s32.totalorder %v82, 6
    %v3695 = vsel %vm3694, 1, 0
    %v3696 = vperm.slane %v3695, 0
    %vm3697 = vcmp.eq.s32.totalorder %v3696, 1
    %v3698 = vsel %vm3697, %v3690, %v3208
    %v3699 = vsel %vm3697, %v3691, %v3209
    %v3700 = vsel %vm3697, %v3692, %v3210
    %v3701 = vsel %vm3697, %v3693, %v3211
    %v3702 = vsel %vm3697, %v3682, %v3212
    %v3703 = vsel %vm3697, %v3683, %v3213
    %v3704 = vsel %vm3697, %v3684, %v3214
    %v3705 = vsel %vm3697, %v3685, %v3215
    %s3706 = scalar_lea.vmem %s0, 7
    %v3707 = vld [vmem:[%s3706] sm:$0x1]
    %v3708 = vperm.slane %v3707, 0
    %vm3709 = vcmp.eq.s32.totalorder %v84, %v3708
    %vm3710 = vcmp.eq.s32.totalorder %v85, %v3708
    %vm3711 = vcmp.eq.s32.totalorder %v86, %v3708
    %vm3712 = vcmp.eq.s32.totalorder %v87, %v3708
    %vm3713 = vcmp.eq.s32.totalorder %v88, %v3708
    %vm3714 = vcmp.eq.s32.totalorder %v89, %v3708
    %vm3715 = vcmp.eq.s32.totalorder %v90, %v3708
    %vm3716 = vcmp.eq.s32.totalorder %v91, %v3708
    %vm3717 = vcmp.eq.s32.totalorder %v92, %v3708
    %vm3718 = vcmp.eq.s32.totalorder %v93, %v3708
    %vm3719 = vcmp.eq.s32.totalorder %v94, %v3708
    %vm3720 = vcmp.eq.s32.totalorder %v95, %v3708
    %vm3721 = vcmp.eq.s32.totalorder %v96, %v3708
    %vm3722 = vcmp.eq.s32.totalorder %v97, %v3708
    %vm3723 = vcmp.eq.s32.totalorder %v98, %v3708
    %vm3724 = vcmp.eq.s32.totalorder %v99, %v3708
    %v3725 = vsel %vm3709, 1, 0
    %v3726 = vsel %vm3710, 1, 0
    %v3727 = vsel %vm3711, 1, 0
    %v3728 = vsel %vm3712, 1, 0
    %v3729 = vsel %vm3713, 1, 0
    %v3730 = vsel %vm3714, 1, 0
    %v3731 = vsel %vm3715, 1, 0
    %v3732 = vsel %vm3716, 1, 0
    %v3733 = vsel %vm3717, 1, 0
    %v3734 = vsel %vm3718, 1, 0
    %v3735 = vsel %vm3719, 1, 0
    %v3736 = vsel %vm3720, 1, 0
    %v3737 = vsel %vm3721, 1, 0
    %v3738 = vsel %vm3722, 1, 0
    %v3739 = vsel %vm3723, 1, 0
    %v3740 = vsel %vm3724, 1, 0
    %v3741 = vcvt.s32.f32 %v3725
    %v3742 = vcvt.s32.f32 %v3726
    %v3743 = vcvt.s32.f32 %v3727
    %v3744 = vcvt.s32.f32 %v3728
    %v3745 = vcvt.s32.f32 %v3729
    %v3746 = vcvt.s32.f32 %v3730
    %v3747 = vcvt.s32.f32 %v3731
    %v3748 = vcvt.s32.f32 %v3732
    %v3749 = vcvt.s32.f32 %v3733
    %v3750 = vcvt.s32.f32 %v3734
    %v3751 = vcvt.s32.f32 %v3735
    %v3752 = vcvt.s32.f32 %v3736
    %v3753 = vcvt.s32.f32 %v3737
    %v3754 = vcvt.s32.f32 %v3738
    %v3755 = vcvt.s32.f32 %v3739
    %v3756 = vcvt.s32.f32 %v3740
    %3757 = vmatpush.msra.mxu0 %v3756
    %3758 = vmatpush.msra.mxu0 %v3755
    %3759 = vmatpush.msra.mxu0 %v3754
    %3760 = vmatpush.msra.mxu0 %v3753
    %3761 = vmatpush.msra.mxu0 %v3752
    %3762 = vmatpush.msra.mxu0 %v3751
    %3763 = vmatpush.msra.mxu0 %v3750
    %3764 = vmatpush.msra.mxu0 %v3749
    %3765 = vmatpush.msra.mxu0 %v3748
    %3766 = vmatpush.msra.mxu0 %v3747
    %3767 = vmatpush.msra.mxu0 %v3746
    %3768 = vmatpush.msra.mxu0 %v3745
    %3769 = vmatpush.msra.mxu0 %v3744
    %3770 = vmatpush.msra.mxu0 %v3743
    %3771 = vmatpush.msra.mxu0 %v3742
    %3772 = vmatpush.msra.mxu0 %v3741
    %3773 = vmatmul.f32.gmra.mxu0 %v30
    %v3774 = vpop.f32.mrf.mxu0
    %v3775 = vadd.f32 0.0, %v3774
    %3776 = vmatmul.f32.gmra.mxu0 %v31
    %v3777 = vpop.f32.mrf.mxu0
    %v3778 = vadd.f32 0.0, %v3777
    %3779 = vmatmul.f32.gmra.mxu0 %v32
    %v3780 = vpop.f32.mrf.mxu0
    %v3781 = vadd.f32 0.0, %v3780
    %3782 = vmatmul.f32.gmra.mxu0 %v33
    %v3783 = vpop.f32.mrf.mxu0
    %v3784 = vadd.f32 0.0, %v3783
    %3785 = vdwg.mxu0
    %3786 = vmatpush.msra.mxu0 0.0
    %3787 = vmatpush.msra.mxu0 0.0
    %3788 = vmatpush.msra.mxu0 0.0
    %3789 = vmatpush.msra.mxu0 0.0
    %3790 = vmatpush.msra.mxu0 0.0
    %3791 = vmatpush.msra.mxu0 0.0
    %3792 = vmatpush.msra.mxu0 0.0
    %3793 = vmatpush.msra.mxu0 0.0
    %3794 = vmatpush.msra.mxu0 0.0
    %3795 = vmatpush.msra.mxu0 0.0
    %3796 = vmatpush.msra.mxu0 0.0
    %3797 = vmatpush.msra.mxu0 0.0
    %3798 = vmatpush.msra.mxu0 %v3701
    %3799 = vmatpush.msra.mxu0 %v3700
    %3800 = vmatpush.msra.mxu0 %v3699
    %3801 = vmatpush.msra.mxu0 %v3698
    %3802 = vmatmul.f32.gmra.mxu0 %v181
    %v3803 = vpop.f32.mrf.mxu0
    %v3804 = vadd.f32 0.0, %v3803
    %3805 = vmatmul.f32.gmra.mxu0 %v184
    %v3806 = vpop.f32.mrf.mxu0
    %v3807 = vadd.f32 0.0, %v3806
    %3808 = vmatmul.f32.gmra.mxu0 %v187
    %v3809 = vpop.f32.mrf.mxu0
    %v3810 = vadd.f32 0.0, %v3809
    %3811 = vmatmul.f32.gmra.mxu0 %v190
    %v3812 = vpop.f32.mrf.mxu0
    %v3813 = vadd.f32 0.0, %v3812
    %3814 = vmatmul.f32.gmra.mxu0 %v193
    %v3815 = vpop.f32.mrf.mxu0
    %v3816 = vadd.f32 0.0, %v3815
    %3817 = vmatmul.f32.gmra.mxu0 %v196
    %v3818 = vpop.f32.mrf.mxu0
    %v3819 = vadd.f32 0.0, %v3818
    %3820 = vmatmul.f32.gmra.mxu0 %v199
    %v3821 = vpop.f32.mrf.mxu0
    %v3822 = vadd.f32 0.0, %v3821
    %3823 = vmatmul.f32.gmra.mxu0 %v202
    %v3824 = vpop.f32.mrf.mxu0
    %v3825 = vadd.f32 0.0, %v3824
    %3826 = vmatmul.f32.gmra.mxu0 %v205
    %v3827 = vpop.f32.mrf.mxu0
    %v3828 = vadd.f32 0.0, %v3827
    %3829 = vmatmul.f32.gmra.mxu0 %v208
    %v3830 = vpop.f32.mrf.mxu0
    %v3831 = vadd.f32 0.0, %v3830
    %3832 = vmatmul.f32.gmra.mxu0 %v211
    %v3833 = vpop.f32.mrf.mxu0
    %v3834 = vadd.f32 0.0, %v3833
    %3835 = vmatmul.f32.gmra.mxu0 %v214
    %v3836 = vpop.f32.mrf.mxu0
    %v3837 = vadd.f32 0.0, %v3836
    %3838 = vmatmul.f32.gmra.mxu0 %v217
    %v3839 = vpop.f32.mrf.mxu0
    %v3840 = vadd.f32 0.0, %v3839
    %3841 = vmatmul.f32.gmra.mxu0 %v220
    %v3842 = vpop.f32.mrf.mxu0
    %v3843 = vadd.f32 0.0, %v3842
    %3844 = vmatmul.f32.gmra.mxu0 %v223
    %v3845 = vpop.f32.mrf.mxu0
    %v3846 = vadd.f32 0.0, %v3845
    %3847 = vmatmul.f32.gmra.mxu0 %v226
    %v3848 = vpop.f32.mrf.mxu0
    %v3849 = vadd.f32 0.0, %v3848
    %3850 = vdwg.mxu0
    %3851 = vmatpush.msra.mxu0 0.0
    %3852 = vmatpush.msra.mxu0 0.0
    %3853 = vmatpush.msra.mxu0 0.0
    %3854 = vmatpush.msra.mxu0 0.0
    %3855 = vmatpush.msra.mxu0 0.0
    %3856 = vmatpush.msra.mxu0 0.0
    %3857 = vmatpush.msra.mxu0 0.0
    %3858 = vmatpush.msra.mxu0 0.0
    %3859 = vmatpush.msra.mxu0 0.0
    %3860 = vmatpush.msra.mxu0 0.0
    %3861 = vmatpush.msra.mxu0 0.0
    %3862 = vmatpush.msra.mxu0 0.0
    %3863 = vmatpush.msra.mxu0 %v3784
    %3864 = vmatpush.msra.mxu0 %v3781
    %3865 = vmatpush.msra.mxu0 %v3778
    %3866 = vmatpush.msra.mxu0 %v3775
    %3867 = vmatmul.f32.gmra.mxu0 %v294
    %v3868 = vpop.f32.mrf.mxu0
    %v3869 = vadd.f32 %v3804, %v3868
    %3870 = vmatmul.f32.gmra.mxu0 %v297
    %v3871 = vpop.f32.mrf.mxu0
    %v3872 = vadd.f32 %v3807, %v3871
    %3873 = vmatmul.f32.gmra.mxu0 %v300
    %v3874 = vpop.f32.mrf.mxu0
    %v3875 = vadd.f32 %v3810, %v3874
    %3876 = vmatmul.f32.gmra.mxu0 %v303
    %v3877 = vpop.f32.mrf.mxu0
    %v3878 = vadd.f32 %v3813, %v3877
    %3879 = vmatmul.f32.gmra.mxu0 %v306
    %v3880 = vpop.f32.mrf.mxu0
    %v3881 = vadd.f32 %v3816, %v3880
    %3882 = vmatmul.f32.gmra.mxu0 %v309
    %v3883 = vpop.f32.mrf.mxu0
    %v3884 = vadd.f32 %v3819, %v3883
    %3885 = vmatmul.f32.gmra.mxu0 %v312
    %v3886 = vpop.f32.mrf.mxu0
    %v3887 = vadd.f32 %v3822, %v3886
    %3888 = vmatmul.f32.gmra.mxu0 %v315
    %v3889 = vpop.f32.mrf.mxu0
    %v3890 = vadd.f32 %v3825, %v3889
    %3891 = vmatmul.f32.gmra.mxu0 %v318
    %v3892 = vpop.f32.mrf.mxu0
    %v3893 = vadd.f32 %v3828, %v3892
    %3894 = vmatmul.f32.gmra.mxu0 %v321
    %v3895 = vpop.f32.mrf.mxu0
    %v3896 = vadd.f32 %v3831, %v3895
    %3897 = vmatmul.f32.gmra.mxu0 %v324
    %v3898 = vpop.f32.mrf.mxu0
    %v3899 = vadd.f32 %v3834, %v3898
    %3900 = vmatmul.f32.gmra.mxu0 %v327
    %v3901 = vpop.f32.mrf.mxu0
    %v3902 = vadd.f32 %v3837, %v3901
    %3903 = vmatmul.f32.gmra.mxu0 %v330
    %v3904 = vpop.f32.mrf.mxu0
    %v3905 = vadd.f32 %v3840, %v3904
    %3906 = vmatmul.f32.gmra.mxu0 %v333
    %v3907 = vpop.f32.mrf.mxu0
    %v3908 = vadd.f32 %v3843, %v3907
    %3909 = vmatmul.f32.gmra.mxu0 %v336
    %v3910 = vpop.f32.mrf.mxu0
    %v3911 = vadd.f32 %v3846, %v3910
    %3912 = vmatmul.f32.gmra.mxu0 %v339
    %v3913 = vpop.f32.mrf.mxu0
    %v3914 = vadd.f32 %v3849, %v3913
    %3915 = vdwg.mxu0
    %v3916 = vadd.f32 %v3869, %v409
    %v3917 = vadd.f32 %v3872, %v414
    %v3918 = vadd.f32 %v3875, %v419
    %v3919 = vadd.f32 %v3878, %v424
    %v3920 = vadd.f32 %v3881, %v429
    %v3921 = vadd.f32 %v3884, %v434
    %v3922 = vadd.f32 %v3887, %v439
    %v3923 = vadd.f32 %v3890, %v444
    %v3924 = vadd.f32 %v3893, %v449
    %v3925 = vadd.f32 %v3896, %v454
    %v3926 = vadd.f32 %v3899, %v459
    %v3927 = vadd.f32 %v3902, %v464
    %v3928 = vadd.f32 %v3905, %v469
    %v3929 = vadd.f32 %v3908, %v474
    %v3930 = vadd.f32 %v3911, %v479
    %v3931 = vadd.f32 %v3914, %v484
    %v3932 = vxor.u32 %v3916, 2147483648
    %v3933 = vxor.u32 %v3917, 2147483648
    %v3934 = vxor.u32 %v3918, 2147483648
    %v3935 = vxor.u32 %v3919, 2147483648
    %v3936 = vmul.f32 %v3932, 1.442695
    %v3937 = vpow.pop %v3936
    %v3938 = vmul.f32 %v3933, 1.442695
    %v3939 = vpow.pop %v3938
    %v3940 = vmul.f32 %v3934, 1.442695
    %v3941 = vpow.pop %v3940
    %v3942 = vmul.f32 %v3935, 1.442695
    %v3943 = vpow.pop %v3942
    %v3944 = vadd.f32 %v3937, 1.0
    %v3945 = vadd.f32 %v3939, 1.0
    %v3946 = vadd.f32 %v3941, 1.0
    %v3947 = vadd.f32 %v3943, 1.0
    %v3948 = vrcp.pop %v3944
    %v3949 = vmul.f32 %v3944, %v3948
    %v3950 = vsub.f32 1.0, %v3949
    %v3951 = vmul.f32 %v3948, %v3950
    %v3952 = vadd.f32 %v3948, %v3951
    %vm3953 = vweird.f32 %v3944
    %vm3954 = vweird.f32 %v3948
    %vm3955 = vmor %vm3953, %vm3954
    %v3956 = vsel %vm3955, %v3948, %v3952
    %v3957 = vand.u32 2147483647, %v3944
    %vm3958 = vcmp.eq.f32.partialorder %v3957, 8.507059e+37
    %v3959 = vand.u32 %v3944, 2147483648
    %v3960 = vor.u32 1.1754944e-38, %v3959
    %v3961 = vsel %vm3958, %v3960, %v3956
    %v3962 = vmul.f32 1.0, %v3961
    %v3963 = vrcp.pop %v3945
    %v3964 = vmul.f32 %v3945, %v3963
    %v3965 = vsub.f32 1.0, %v3964
    %v3966 = vmul.f32 %v3963, %v3965
    %v3967 = vadd.f32 %v3963, %v3966
    %vm3968 = vweird.f32 %v3945
    %vm3969 = vweird.f32 %v3963
    %vm3970 = vmor %vm3968, %vm3969
    %v3971 = vsel %vm3970, %v3963, %v3967
    %v3972 = vand.u32 2147483647, %v3945
    %vm3973 = vcmp.eq.f32.partialorder %v3972, 8.507059e+37
    %v3974 = vand.u32 %v3945, 2147483648
    %v3975 = vor.u32 1.1754944e-38, %v3974
    %v3976 = vsel %vm3973, %v3975, %v3971
    %v3977 = vmul.f32 1.0, %v3976
    %v3978 = vrcp.pop %v3946
    %v3979 = vmul.f32 %v3946, %v3978
    %v3980 = vsub.f32 1.0, %v3979
    %v3981 = vmul.f32 %v3978, %v3980
    %v3982 = vadd.f32 %v3978, %v3981
    %vm3983 = vweird.f32 %v3946
    %vm3984 = vweird.f32 %v3978
    %vm3985 = vmor %vm3983, %vm3984
    %v3986 = vsel %vm3985, %v3978, %v3982
    %v3987 = vand.u32 2147483647, %v3946
    %vm3988 = vcmp.eq.f32.partialorder %v3987, 8.507059e+37
    %v3989 = vand.u32 %v3946, 2147483648
    %v3990 = vor.u32 1.1754944e-38, %v3989
    %v3991 = vsel %vm3988, %v3990, %v3986
    %v3992 = vmul.f32 1.0, %v3991
    %v3993 = vrcp.pop %v3947
    %v3994 = vmul.f32 %v3947, %v3993
    %v3995 = vsub.f32 1.0, %v3994
    %v3996 = vmul.f32 %v3993, %v3995
    %v3997 = vadd.f32 %v3993, %v3996
    %vm3998 = vweird.f32 %v3947
    %vm3999 = vweird.f32 %v3993
    %vm4000 = vmor %vm3998, %vm3999
    %v4001 = vsel %vm4000, %v3993, %v3997
    %v4002 = vand.u32 2147483647, %v3947
    %vm4003 = vcmp.eq.f32.partialorder %v4002, 8.507059e+37
    %v4004 = vand.u32 %v3947, 2147483648
    %v4005 = vor.u32 1.1754944e-38, %v4004
    %v4006 = vsel %vm4003, %v4005, %v4001
    %v4007 = vmul.f32 1.0, %v4006
    %v4008 = vxor.u32 %v3920, 2147483648
    %v4009 = vxor.u32 %v3921, 2147483648
    %v4010 = vxor.u32 %v3922, 2147483648
    %v4011 = vxor.u32 %v3923, 2147483648
    %v4012 = vmul.f32 %v4008, 1.442695
    %v4013 = vpow.pop %v4012
    %v4014 = vmul.f32 %v4009, 1.442695
    %v4015 = vpow.pop %v4014
    %v4016 = vmul.f32 %v4010, 1.442695
    %v4017 = vpow.pop %v4016
    %v4018 = vmul.f32 %v4011, 1.442695
    %v4019 = vpow.pop %v4018
    %v4020 = vadd.f32 %v4013, 1.0
    %v4021 = vadd.f32 %v4015, 1.0
    %v4022 = vadd.f32 %v4017, 1.0
    %v4023 = vadd.f32 %v4019, 1.0
    %v4024 = vrcp.pop %v4020
    %v4025 = vmul.f32 %v4020, %v4024
    %v4026 = vsub.f32 1.0, %v4025
    %v4027 = vmul.f32 %v4024, %v4026
    %v4028 = vadd.f32 %v4024, %v4027
    %vm4029 = vweird.f32 %v4020
    %vm4030 = vweird.f32 %v4024
    %vm4031 = vmor %vm4029, %vm4030
    %v4032 = vsel %vm4031, %v4024, %v4028
    %v4033 = vand.u32 2147483647, %v4020
    %vm4034 = vcmp.eq.f32.partialorder %v4033, 8.507059e+37
    %v4035 = vand.u32 %v4020, 2147483648
    %v4036 = vor.u32 1.1754944e-38, %v4035
    %v4037 = vsel %vm4034, %v4036, %v4032
    %v4038 = vmul.f32 1.0, %v4037
    %v4039 = vrcp.pop %v4021
    %v4040 = vmul.f32 %v4021, %v4039
    %v4041 = vsub.f32 1.0, %v4040
    %v4042 = vmul.f32 %v4039, %v4041
    %v4043 = vadd.f32 %v4039, %v4042
    %vm4044 = vweird.f32 %v4021
    %vm4045 = vweird.f32 %v4039
    %vm4046 = vmor %vm4044, %vm4045
    %v4047 = vsel %vm4046, %v4039, %v4043
    %v4048 = vand.u32 2147483647, %v4021
    %vm4049 = vcmp.eq.f32.partialorder %v4048, 8.507059e+37
    %v4050 = vand.u32 %v4021, 2147483648
    %v4051 = vor.u32 1.1754944e-38, %v4050
    %v4052 = vsel %vm4049, %v4051, %v4047
    %v4053 = vmul.f32 1.0, %v4052
    %v4054 = vrcp.pop %v4022
    %v4055 = vmul.f32 %v4022, %v4054
    %v4056 = vsub.f32 1.0, %v4055
    %v4057 = vmul.f32 %v4054, %v4056
    %v4058 = vadd.f32 %v4054, %v4057
    %vm4059 = vweird.f32 %v4022
    %vm4060 = vweird.f32 %v4054
    %vm4061 = vmor %vm4059, %vm4060
    %v4062 = vsel %vm4061, %v4054, %v4058
    %v4063 = vand.u32 2147483647, %v4022
    %vm4064 = vcmp.eq.f32.partialorder %v4063, 8.507059e+37
    %v4065 = vand.u32 %v4022, 2147483648
    %v4066 = vor.u32 1.1754944e-38, %v4065
    %v4067 = vsel %vm4064, %v4066, %v4062
    %v4068 = vmul.f32 1.0, %v4067
    %v4069 = vrcp.pop %v4023
    %v4070 = vmul.f32 %v4023, %v4069
    %v4071 = vsub.f32 1.0, %v4070
    %v4072 = vmul.f32 %v4069, %v4071
    %v4073 = vadd.f32 %v4069, %v4072
    %vm4074 = vweird.f32 %v4023
    %vm4075 = vweird.f32 %v4069
    %vm4076 = vmor %vm4074, %vm4075
    %v4077 = vsel %vm4076, %v4069, %v4073
    %v4078 = vand.u32 2147483647, %v4023
    %vm4079 = vcmp.eq.f32.partialorder %v4078, 8.507059e+37
    %v4080 = vand.u32 %v4023, 2147483648
    %v4081 = vor.u32 1.1754944e-38, %v4080
    %v4082 = vsel %vm4079, %v4081, %v4077
    %v4083 = vmul.f32 1.0, %v4082
    %v4084 = vtanh.pop %v3924
    %v4085 = vtanh.pop %v3925
    %v4086 = vtanh.pop %v3926
    %v4087 = vtanh.pop %v3927
    %v4088 = vxor.u32 %v3928, 2147483648
    %v4089 = vxor.u32 %v3929, 2147483648
    %v4090 = vxor.u32 %v3930, 2147483648
    %v4091 = vxor.u32 %v3931, 2147483648
    %v4092 = vmul.f32 %v4088, 1.442695
    %v4093 = vpow.pop %v4092
    %v4094 = vmul.f32 %v4089, 1.442695
    %v4095 = vpow.pop %v4094
    %v4096 = vmul.f32 %v4090, 1.442695
    %v4097 = vpow.pop %v4096
    %v4098 = vmul.f32 %v4091, 1.442695
    %v4099 = vpow.pop %v4098
    %v4100 = vadd.f32 %v4093, 1.0
    %v4101 = vadd.f32 %v4095, 1.0
    %v4102 = vadd.f32 %v4097, 1.0
    %v4103 = vadd.f32 %v4099, 1.0
    %v4104 = vrcp.pop %v4100
    %v4105 = vmul.f32 %v4100, %v4104
    %v4106 = vsub.f32 1.0, %v4105
    %v4107 = vmul.f32 %v4104, %v4106
    %v4108 = vadd.f32 %v4104, %v4107
    %vm4109 = vweird.f32 %v4100
    %vm4110 = vweird.f32 %v4104
    %vm4111 = vmor %vm4109, %vm4110
    %v4112 = vsel %vm4111, %v4104, %v4108
    %v4113 = vand.u32 2147483647, %v4100
    %vm4114 = vcmp.eq.f32.partialorder %v4113, 8.507059e+37
    %v4115 = vand.u32 %v4100, 2147483648
    %v4116 = vor.u32 1.1754944e-38, %v4115
    %v4117 = vsel %vm4114, %v4116, %v4112
    %v4118 = vmul.f32 1.0, %v4117
    %v4119 = vrcp.pop %v4101
    %v4120 = vmul.f32 %v4101, %v4119
    %v4121 = vsub.f32 1.0, %v4120
    %v4122 = vmul.f32 %v4119, %v4121
    %v4123 = vadd.f32 %v4119, %v4122
    %vm4124 = vweird.f32 %v4101
    %vm4125 = vweird.f32 %v4119
    %vm4126 = vmor %vm4124, %vm4125
    %v4127 = vsel %vm4126, %v4119, %v4123
    %v4128 = vand.u32 2147483647, %v4101
    %vm4129 = vcmp.eq.f32.partialorder %v4128, 8.507059e+37
    %v4130 = vand.u32 %v4101, 2147483648
    %v4131 = vor.u32 1.1754944e-38, %v4130
    %v4132 = vsel %vm4129, %v4131, %v4127
    %v4133 = vmul.f32 1.0, %v4132
    %v4134 = vrcp.pop %v4102
    %v4135 = vmul.f32 %v4102, %v4134
    %v4136 = vsub.f32 1.0, %v4135
    %v4137 = vmul.f32 %v4134, %v4136
    %v4138 = vadd.f32 %v4134, %v4137
    %vm4139 = vweird.f32 %v4102
    %vm4140 = vweird.f32 %v4134
    %vm4141 = vmor %vm4139, %vm4140
    %v4142 = vsel %vm4141, %v4134, %v4138
    %v4143 = vand.u32 2147483647, %v4102
    %vm4144 = vcmp.eq.f32.partialorder %v4143, 8.507059e+37
    %v4145 = vand.u32 %v4102, 2147483648
    %v4146 = vor.u32 1.1754944e-38, %v4145
    %v4147 = vsel %vm4144, %v4146, %v4142
    %v4148 = vmul.f32 1.0, %v4147
    %v4149 = vrcp.pop %v4103
    %v4150 = vmul.f32 %v4103, %v4149
    %v4151 = vsub.f32 1.0, %v4150
    %v4152 = vmul.f32 %v4149, %v4151
    %v4153 = vadd.f32 %v4149, %v4152
    %vm4154 = vweird.f32 %v4103
    %vm4155 = vweird.f32 %v4149
    %vm4156 = vmor %vm4154, %vm4155
    %v4157 = vsel %vm4156, %v4149, %v4153
    %v4158 = vand.u32 2147483647, %v4103
    %vm4159 = vcmp.eq.f32.partialorder %v4158, 8.507059e+37
    %v4160 = vand.u32 %v4103, 2147483648
    %v4161 = vor.u32 1.1754944e-38, %v4160
    %v4162 = vsel %vm4159, %v4161, %v4157
    %v4163 = vmul.f32 1.0, %v4162
    %v4164 = vmul.f32 %v4038, %v3702
    %v4165 = vmul.f32 %v4053, %v3703
    %v4166 = vmul.f32 %v4068, %v3704
    %v4167 = vmul.f32 %v4083, %v3705
    %v4168 = vmul.f32 %v3962, %v4084
    %v4169 = vmul.f32 %v3977, %v4085
    %v4170 = vmul.f32 %v3992, %v4086
    %v4171 = vmul.f32 %v4007, %v4087
    %v4172 = vadd.f32 %v4164, %v4168
    %v4173 = vadd.f32 %v4165, %v4169
    %v4174 = vadd.f32 %v4166, %v4170
    %v4175 = vadd.f32 %v4167, %v4171
    %v4176 = vtanh.pop %v4172
    %v4177 = vtanh.pop %v4173
    %v4178 = vtanh.pop %v4174
    %v4179 = vtanh.pop %v4175
    %v4180 = vmul.f32 %v4118, %v4176
    %v4181 = vmul.f32 %v4133, %v4177
    %v4182 = vmul.f32 %v4148, %v4178
    %v4183 = vmul.f32 %v4163, %v4179
    %vm4184 = vcmp.gt.s32.totalorder %v82, 7
    %v4185 = vsel %vm4184, 1, 0
    %v4186 = vperm.slane %v4185, 0
    %vm4187 = vcmp.eq.s32.totalorder %v4186, 1
    %v4188 = vsel %vm4187, %v4180, %v3698
    %v4189 = vsel %vm4187, %v4181, %v3699
    %v4190 = vsel %vm4187, %v4182, %v3700
    %v4191 = vsel %vm4187, %v4183, %v3701
    %v4192 = vld [vmem:[%s6] sm:$0xff]
    %v4193 = vld [vmem:[%s6 + $0x8] sm:$0xff]
    %v4194 = vld [vmem:[%s6 + $0x10] sm:$0xff]
    %v4195 = vld [vmem:[%s6 + $0x18] sm:$0xff]
    %v4196 = vld [vmem:[%s6 + $0x20] sm:$0xff]
    %v4197 = vld [vmem:[%s6 + $0x28] sm:$0xff]
    %v4198 = vld [vmem:[%s6 + $0x30] sm:$0xff]
    %v4199 = vld [vmem:[%s6 + $0x38] sm:$0xff]
    %v4200 = vld [vmem:[%s6 + $0x40] sm:$0xff]
    %v4201 = vld [vmem:[%s6 + $0x48] sm:$0xff]
    %v4202 = vld [vmem:[%s6 + $0x50] sm:$0xff]
    %v4203 = vld [vmem:[%s6 + $0x58] sm:$0xff]
    %v4204 = vld [vmem:[%s6 + $0x60] sm:$0xff]
    %v4205 = vld [vmem:[%s6 + $0x68] sm:$0xff]
    %v4206 = vld [vmem:[%s6 + $0x70] sm:$0xff]
    %v4207 = vld [vmem:[%s6 + $0x78] sm:$0xff]
    %v4208 = vld [vmem:[%s7] sm:$0xff]
    %v4209 = vld [vmem:[%s7 + $0x8] sm:$0xff]
    %v4210 = vld [vmem:[%s7 + $0x10] sm:$0xff]
    %v4211 = vld [vmem:[%s7 + $0x18] sm:$0xff]
    %v4212 = vld [vmem:[%s7 + $0x20] sm:$0xff]
    %v4213 = vld [vmem:[%s7 + $0x28] sm:$0xff]
    %v4214 = vld [vmem:[%s7 + $0x30] sm:$0xff]
    %v4215 = vld [vmem:[%s7 + $0x38] sm:$0xff]
    %v4216 = vld [vmem:[%s7 + $0x40] sm:$0xff]
    %v4217 = vld [vmem:[%s7 + $0x48] sm:$0xff]
    %v4218 = vld [vmem:[%s7 + $0x50] sm:$0xff]
    %v4219 = vld [vmem:[%s7 + $0x58] sm:$0xff]
    %v4220 = vld [vmem:[%s7 + $0x60] sm:$0xff]
    %v4221 = vld [vmem:[%s7 + $0x68] sm:$0xff]
    %v4222 = vld [vmem:[%s7 + $0x70] sm:$0xff]
    %v4223 = vld [vmem:[%s7 + $0x78] sm:$0xff]
    %4225 = vset.pattern.permute.xlu0 0
    %4226 = vperm.xlu0 %4225, %v4208
    %v4227 = vpop.permute.xlu0 %4226
    %4230 = vset.pattern.permute.xlu0 0
    %4231 = vperm.xlu0 %4230, %v4209
    %v4232 = vpop.permute.xlu0 %4231
    %4235 = vset.pattern.permute.xlu0 0
    %4236 = vperm.xlu0 %4235, %v4210
    %v4237 = vpop.permute.xlu0 %4236
    %4240 = vset.pattern.permute.xlu0 0
    %4241 = vperm.xlu0 %4240, %v4211
    %v4242 = vpop.permute.xlu0 %4241
    %4245 = vset.pattern.permute.xlu0 0
    %4246 = vperm.xlu0 %4245, %v4212
    %v4247 = vpop.permute.xlu0 %4246
    %4250 = vset.pattern.permute.xlu0 0
    %4251 = vperm.xlu0 %4250, %v4213
    %v4252 = vpop.permute.xlu0 %4251
    %4255 = vset.pattern.permute.xlu0 0
    %4256 = vperm.xlu0 %4255, %v4214
    %v4257 = vpop.permute.xlu0 %4256
    %4260 = vset.pattern.permute.xlu0 0
    %4261 = vperm.xlu0 %4260, %v4215
    %v4262 = vpop.permute.xlu0 %4261
    %4265 = vset.pattern.permute.xlu0 0
    %4266 = vperm.xlu0 %4265, %v4216
    %v4267 = vpop.permute.xlu0 %4266
    %4270 = vset.pattern.permute.xlu0 0
    %4271 = vperm.xlu0 %4270, %v4217
    %v4272 = vpop.permute.xlu0 %4271
    %4275 = vset.pattern.permute.xlu0 0
    %4276 = vperm.xlu0 %4275, %v4218
    %v4277 = vpop.permute.xlu0 %4276
    %4280 = vset.pattern.permute.xlu0 0
    %4281 = vperm.xlu0 %4280, %v4219
    %v4282 = vpop.permute.xlu0 %4281
    %4285 = vset.pattern.permute.xlu0 0
    %4286 = vperm.xlu0 %4285, %v4220
    %v4287 = vpop.permute.xlu0 %4286
    %4290 = vset.pattern.permute.xlu0 0
    %4291 = vperm.xlu0 %4290, %v4221
    %v4292 = vpop.permute.xlu0 %4291
    %4295 = vset.pattern.permute.xlu0 0
    %4296 = vperm.xlu0 %4295, %v4222
    %v4297 = vpop.permute.xlu0 %4296
    %4300 = vset.pattern.permute.xlu0 0
    %4301 = vperm.xlu0 %4300, %v4223
    %v4302 = vpop.permute.xlu0 %4301
    %v4305 = vsel %vm179, %v4192, 0
    %v4308 = vsel %vm179, %v4193, 0
    %v4311 = vsel %vm179, %v4194, 0
    %v4314 = vsel %vm179, %v4195, 0
    %v4317 = vsel %vm179, %v4196, 0
    %v4320 = vsel %vm179, %v4197, 0
    %v4323 = vsel %vm179, %v4198, 0
    %v4326 = vsel %vm179, %v4199, 0
    %v4329 = vsel %vm179, %v4200, 0
    %v4332 = vsel %vm179, %v4201, 0
    %v4335 = vsel %vm179, %v4202, 0
    %v4338 = vsel %vm179, %v4203, 0
    %v4341 = vsel %vm179, %v4204, 0
    %v4344 = vsel %vm179, %v4205, 0
    %v4347 = vsel %vm179, %v4206, 0
    %v4350 = vsel %vm179, %v4207, 0
    %4352 = vmatpush.msra.mxu0 0.0
    %4353 = vmatpush.msra.mxu0 0.0
    %4354 = vmatpush.msra.mxu0 0.0
    %4355 = vmatpush.msra.mxu0 0.0
    %4356 = vmatpush.msra.mxu0 0.0
    %4357 = vmatpush.msra.mxu0 0.0
    %4358 = vmatpush.msra.mxu0 0.0
    %4359 = vmatpush.msra.mxu0 0.0
    %4360 = vmatpush.msra.mxu0 0.0
    %4361 = vmatpush.msra.mxu0 0.0
    %4362 = vmatpush.msra.mxu0 0.0
    %4363 = vmatpush.msra.mxu0 0.0
    %4364 = vmatpush.msra.mxu0 %v4191
    %4365 = vmatpush.msra.mxu0 %v4190
    %4366 = vmatpush.msra.mxu0 %v4189
    %4367 = vmatpush.msra.mxu0 %v4188
    %4368 = vmatmul.f32.gmra.mxu0 %v4305
    %v4369 = vpop.f32.mrf.mxu0
    %v4370 = vadd.f32 %v4227, %v4369
    %4371 = vmatmul.f32.gmra.mxu0 %v4308
    %v4372 = vpop.f32.mrf.mxu0
    %v4373 = vadd.f32 %v4232, %v4372
    %4374 = vmatmul.f32.gmra.mxu0 %v4311
    %v4375 = vpop.f32.mrf.mxu0
    %v4376 = vadd.f32 %v4237, %v4375
    %4377 = vmatmul.f32.gmra.mxu0 %v4314
    %v4378 = vpop.f32.mrf.mxu0
    %v4379 = vadd.f32 %v4242, %v4378
    %4380 = vmatmul.f32.gmra.mxu0 %v4317
    %v4381 = vpop.f32.mrf.mxu0
    %v4382 = vadd.f32 %v4247, %v4381
    %4383 = vmatmul.f32.gmra.mxu0 %v4320
    %v4384 = vpop.f32.mrf.mxu0
    %v4385 = vadd.f32 %v4252, %v4384
    %4386 = vmatmul.f32.gmra.mxu0 %v4323
    %v4387 = vpop.f32.mrf.mxu0
    %v4388 = vadd.f32 %v4257, %v4387
    %4389 = vmatmul.f32.gmra.mxu0 %v4326
    %v4390 = vpop.f32.mrf.mxu0
    %v4391 = vadd.f32 %v4262, %v4390
    %4392 = vmatmul.f32.gmra.mxu0 %v4329
    %v4393 = vpop.f32.mrf.mxu0
    %v4394 = vadd.f32 %v4267, %v4393
    %4395 = vmatmul.f32.gmra.mxu0 %v4332
    %v4396 = vpop.f32.mrf.mxu0
    %v4397 = vadd.f32 %v4272, %v4396
    %4398 = vmatmul.f32.gmra.mxu0 %v4335
    %v4399 = vpop.f32.mrf.mxu0
    %v4400 = vadd.f32 %v4277, %v4399
    %4401 = vmatmul.f32.gmra.mxu0 %v4338
    %v4402 = vpop.f32.mrf.mxu0
    %v4403 = vadd.f32 %v4282, %v4402
    %4404 = vmatmul.f32.gmra.mxu0 %v4341
    %v4405 = vpop.f32.mrf.mxu0
    %v4406 = vadd.f32 %v4287, %v4405
    %4407 = vmatmul.f32.gmra.mxu0 %v4344
    %v4408 = vpop.f32.mrf.mxu0
    %v4409 = vadd.f32 %v4292, %v4408
    %4410 = vmatmul.f32.gmra.mxu0 %v4347
    %v4411 = vpop.f32.mrf.mxu0
    %v4412 = vadd.f32 %v4297, %v4411
    %4413 = vmatmul.f32.gmra.mxu0 %v4350
    %v4414 = vpop.f32.mrf.mxu0
    %v4415 = vadd.f32 %v4302, %v4414
    %4416 = vdwg.mxu0
    %4417 = vst [vmem:[#allocation2] sm:$0xff] %v4370
    %4418 = vst [vmem:[#allocation2 + $0x8] sm:$0xff] %v4373
    %4419 = vst [vmem:[#allocation2 + $0x10] sm:$0xff] %v4376
    %4420 = vst [vmem:[#allocation2 + $0x18] sm:$0xff] %v4379
    %4421 = vst [vmem:[#allocation2 + $0x20] sm:$0xff] %v4382
    %4422 = vst [vmem:[#allocation2 + $0x28] sm:$0xff] %v4385
    %4423 = vst [vmem:[#allocation2 + $0x30] sm:$0xff] %v4388
    %4424 = vst [vmem:[#allocation2 + $0x38] sm:$0xff] %v4391
    %4425 = vst [vmem:[#allocation2 + $0x40] sm:$0xff] %v4394
    %4426 = vst [vmem:[#allocation2 + $0x48] sm:$0xff] %v4397
    %4427 = vst [vmem:[#allocation2 + $0x50] sm:$0xff] %v4400
    %4428 = vst [vmem:[#allocation2 + $0x58] sm:$0xff] %v4403
    %4429 = vst [vmem:[#allocation2 + $0x60] sm:$0xff] %v4406
    %4430 = vst [vmem:[#allocation2 + $0x68] sm:$0xff] %v4409
    %4431 = vst [vmem:[#allocation2 + $0x70] sm:$0xff] %v4412
    %4432 = vst [vmem:[#allocation2 + $0x78] sm:$0xff] %v4415
    // Predicated region
    $region34: #{tpu_custom_call.1} parent=1 // pred_check
      _
    $region35: #{tpu_custom_call.1} parent=1 // pred_check_branch
      %4434 = sbr.rel (0) target = $region37
    $region36: #{tpu_custom_call.1} parent=1 // pred_region
      %4436 = vsyncadd [#allocation3], 0
      %s4437 = sshll.u32 [#allocation2], 4
      %s4438 = int_to_ptr.vmem [resolvable:$true] %s4437
      %s4439 = sshll.u32 %s8, 4
      %s4440 = int_to_ptr.hbm [resolvable:$true] %s4439
      %4445 = dma.vmem_to_hbm [thread:$0]  %s4438, 2048, %s4440, [#allocation3], 128, 128, 8
    $region37: #{tpu_custom_call.1} parent=1 // pred_fallthru
      _
    // Predicated region
    $region38: #{tpu_custom_call.1} parent=1 // pred_check
      _
    $region39: #{tpu_custom_call.1} parent=1 // pred_check_branch
      %4447 = sbr.rel (0) target = $region41
    $region40: #{tpu_custom_call.1} parent=1 // pred_region
      %4449 = dma.done [#allocation3], 2048
    $region41: #{tpu_custom_call.1} parent=1 // pred_fallthru
      _
    %4450 = vsyncpa [#allocation3], 1

</llo_original>
